<compile_context>
chip_gen: v5e
topology: v5e:2x2
jax: 0.10.0
libtpu: 0.0.40
codegen_flags: <defaults>
</compile_context>

<pallas_src>
import functools

import jax
import jax.numpy as jnp
from jax.experimental import pallas as pl
from jax.experimental.pallas import tpu as pltpu

NUM_CLASSES = 2


# ------------------------------ helpers (in-kernel) ------------------------------

def _layernorm(x, g, b, eps=1e-12):
    # f32 element-wise math (v5e has no bf16 VPU path).
    mean = jnp.mean(x, axis=-1, keepdims=True)
    var = jnp.mean(jnp.square(x - mean), axis=-1, keepdims=True)
    return (x - mean) * jax.lax.rsqrt(var + eps) * g + b


# ------------------------------ Pallas kernels ------------------------------

def _ln_kernel(x_ref, g_ref, b_ref, o_ref):
    o_ref[...] = _layernorm(x_ref[...], g_ref[...], b_ref[...]).astype(o_ref.dtype)


def pallas_layernorm(x, gamma, beta, *, block_rows=256):
    """Row-tiled LayerNorm over a [M, H] slab (used for the embedding LN)."""
    M, H = x.shape
    br = block_rows if (M % block_rows == 0) else M
    grid = (M // br,)
    return pl.pallas_call(
        _ln_kernel,
        grid=grid,
        in_specs=[pl.BlockSpec((br, H), lambda i: (i, 0)),
                  pl.BlockSpec((1, H), lambda i: (0, 0)),
                  pl.BlockSpec((1, H), lambda i: (0, 0))],
        out_specs=pl.BlockSpec((br, H), lambda i: (i, 0)),
        out_shape=jax.ShapeDtypeStruct((M, H), jnp.float32),
        compiler_params=pltpu.CompilerParams(dimension_semantics=("parallel",)),
    )(x, gamma, beta)


def _bert_layer_kernel(x_ref, mask_ref, wqkv_ref, bqkv_ref, wo_ref, bo_ref,
                       g1_ref, be1_ref, w1_ref, b1_ref, w2_ref, b2_ref,
                       g2_ref, be2_ref, o_ref, *, num_heads):
    """One full post-LN BERT encoder layer for a block of batch elements."""
    bb, S, H = x_ref.shape
    dh = H // num_heads
    M = bb * S

    x = x_ref[...].reshape(M, H)                      # f32 residual stream
    x_bf = x.astype(jnp.bfloat16)

    # Fused QKV projection: one bf16 MXU matmul against the concatenated [H, 3H] weight.
    qkv = jnp.dot(x_bf, wqkv_ref[...], preferred_element_type=jnp.float32) + bqkv_ref[...]
    q = qkv[:, 0 * H:1 * H].reshape(bb, S, H)
    k = qkv[:, 1 * H:2 * H].reshape(bb, S, H)
    v = qkv[:, 2 * H:3 * H].reshape(bb, S, H)

    mask = mask_ref[...]                              # (bb, 1, S) additive mask, broadcast in-kernel
    scale = 1.0 / float(dh) ** 0.5

    # Per-head attention; heads are static lane slices of the H = nh*dh slab, and the
    # output projection is folded into the head loop (ctx_h @ W_O[h*dh:(h+1)*dh, :]),
    # so no head transpose / concat round-trips ever touch HBM.
    attn = jnp.zeros((M, H), jnp.float32)
    for h in range(num_heads):
        lo, hi = h * dh, (h + 1) * dh
        qh = q[:, :, lo:hi].astype(jnp.bfloat16)
        kh = k[:, :, lo:hi].astype(jnp.bfloat16)
        vh = v[:, :, lo:hi].astype(jnp.bfloat16)

        s = jnp.einsum("bqd,bkd->bqk", qh, kh,
                       preferred_element_type=jnp.float32) * scale + mask
        m = jnp.max(s, axis=-1, keepdims=True)
        p = jnp.exp(s - m)                            # f32 softmax (EUP exp)
        # denom >= 1 (the max entry contributes exp(0)), so approx reciprocal is safe
        # even for fully-masked rows.
        p = p * pl.reciprocal(jnp.sum(p, axis=-1, keepdims=True), approx=True)

        ctx = jnp.einsum("bqk,bkd->bqd", p.astype(jnp.bfloat16), vh,
                         preferred_element_type=jnp.float32)          # (bb, S, dh)
        attn = attn + jnp.dot(ctx.reshape(M, dh).astype(jnp.bfloat16),
                              wo_ref[lo:hi, :],
                              preferred_element_type=jnp.float32)
    attn = attn + bo_ref[...]

    # Residual + LayerNorm fused (f32).
    x = _layernorm(x + attn, g1_ref[...], be1_ref[...])

    # FFN: matmul + bias + GELU + matmul fused.
    hmid = jnp.dot(x.astype(jnp.bfloat16), w1_ref[...],
                   preferred_element_type=jnp.float32) + b1_ref[...]
    # TODO(synk): BERT uses erf-GELU; tanh-approximate GELU used here (EUP-friendly).
    hmid = jax.nn.gelu(hmid, approximate=True)
    ffn = jnp.dot(hmid.astype(jnp.bfloat16), w2_ref[...],
                  preferred_element_type=jnp.float32) + b2_ref[...]

    x = _layernorm(x + ffn, g2_ref[...], be2_ref[...])
    o_ref[...] = x.reshape(bb, S, H).astype(o_ref.dtype)


def _pick_batch_block(B, S, target_rows=256):
    """Largest batch block whose rows fit a comfortable tile, but keep >=2 grid steps
    when possible so a parallel grid axis exists (megacore on v7x)."""
    best = 1
    for d in range(1, B + 1):
        if B % d == 0 and d * S <= target_rows:
            best = d
    if best == B and B > 1:
        best = max(d for d in range(1, B) if B % d == 0)
    return best


def pallas_bert_layer(x, mask_add, lp, *, num_heads, batch_block=None):
    B, S, H = x.shape
    if batch_block is None:
        batch_block = _pick_batch_block(B, S)
    nb = B // batch_block

    kern = functools.partial(_bert_layer_kernel, num_heads=num_heads)

    def act_map(i):
        return (i, 0, 0)

    def weight_map(i):
        return (0, 0)

    def full2(a):
        # Whole-array weight block; constant index_map keeps it resident across grid steps.
        return pl.BlockSpec(a.shape, weight_map)

    in_specs = [
        pl.BlockSpec((batch_block, S, H), act_map),       # activations (row/batch tiled)
        pl.BlockSpec((batch_block, 1, S), act_map),       # additive attention mask
        full2(lp["w_qkv"]), full2(lp["b_qkv"]),
        full2(lp["w_o"]), full2(lp["b_o"]),
        full2(lp["ln1_g"]), full2(lp["ln1_b"]),
        full2(lp["w1"]), full2(lp["b1"]),
        full2(lp["w2"]), full2(lp["b2"]),
        full2(lp["ln2_g"]), full2(lp["ln2_b"]),
    ]

    return pl.pallas_call(
        kern,
        grid=(nb,),
        in_specs=in_specs,
        out_specs=pl.BlockSpec((batch_block, S, H), act_map),
        out_shape=jax.ShapeDtypeStruct((B, S, H), jnp.float32),
        compiler_params=pltpu.CompilerParams(
            dimension_semantics=("parallel",)),
    )(x, mask_add, lp["w_qkv"], lp["b_qkv"], lp["w_o"], lp["b_o"],
      lp["ln1_g"], lp["ln1_b"], lp["w1"], lp["b1"],
      lp["w2"], lp["b2"], lp["ln2_g"], lp["ln2_b"])


def _classifier_kernel(x_ref, w_ref, b_ref, o_ref, *, apply_softmax):
    logits = jnp.dot(x_ref[...].astype(jnp.bfloat16), w_ref[...],
                     preferred_element_type=jnp.float32) + b_ref[...]
    if apply_softmax:  # nn.Softmax(dim=1); padded columns carry -1e30 bias -> exp == 0
        m = jnp.max(logits, axis=-1, keepdims=True)
        e = jnp.exp(logits - m)
        logits = e * pl.reciprocal(jnp.sum(e, axis=-1, keepdims=True), approx=False)
    o_ref[...] = logits.astype(o_ref.dtype)


def pallas_classifier(cls_x, w_pad, b_pad, apply_softmax):
    """Linear(H -> 128-lane-padded classes) [+ softmax]; real classes sliced outside."""
    B, H = cls_x.shape
    Cp = w_pad.shape[1]
    kern = functools.partial(_classifier_kernel, apply_softmax=apply_softmax)
    return pl.pallas_call(
        kern,
        grid=(1,),
        in_specs=[pl.BlockSpec((B, H), lambda i: (0, 0)),
                  pl.BlockSpec((H, Cp), lambda i: (0, 0)),
                  pl.BlockSpec((1, Cp), lambda i: (0, 0))],
        out_specs=pl.BlockSpec((B, Cp), lambda i: (0, 0)),
        out_shape=jax.ShapeDtypeStruct((B, Cp), jnp.float32),
    )(cls_x, w_pad, b_pad)


# ------------------------------ model (params + glue) ------------------------------

def init_params(key, vocab=64, max_pos=32, type_vocab=2, H=128, nh=4, n_layers=2, inter=512):
    keys = jax.random.split(key, 4 + n_layers)

    def nrm(k, shape, dtype=jnp.float32):
        return (jax.random.normal(k, shape, jnp.float32) * 0.02).astype(dtype)

    C_PAD = 128  # lane-dense classifier width (real classes = NUM_CLASSES)
    fc_w = jnp.zeros((H, C_PAD), jnp.float32).at[:, :NUM_CLASSES].set(
        nrm(keys[3], (H, NUM_CLASSES)))
    fc_b = jnp.concatenate(
        [jnp.zeros((1, NUM_CLASSES), jnp.float32),
         jnp.full((1, C_PAD - NUM_CLASSES), -1e30, jnp.float32)], axis=1)

    params = dict(
        word_emb=nrm(keys[0], (vocab, H)),
        pos_emb=nrm(keys[1], (max_pos, H)),
        type_emb=nrm(keys[2], (type_vocab, H)),
        emb_ln_g=jnp.ones((1, H), jnp.float32),
        emb_ln_b=jnp.zeros((1, H), jnp.float32),
        fc_w=fc_w.astype(jnp.bfloat16),
        fc_b=fc_b,
        layers=[],
    )
    for l in range(n_layers):
        lk = jax.random.split(keys[4 + l], 6)
        wq, wk, wv = nrm(lk[0], (H, H)), nrm(lk[1], (H, H)), nrm(lk[2], (H, H))
        params["layers"].append(dict(
            # Matmul weights stored in bf16 (f32 MXU accumulation in-kernel).
            w_qkv=jnp.concatenate([wq, wk, wv], axis=1).astype(jnp.bfloat16),
            b_qkv=jnp.zeros((1, 3 * H), jnp.float32),
            w_o=nrm(lk[3], (H, H), jnp.bfloat16),
            b_o=jnp.zeros((1, H), jnp.float32),
            ln1_g=jnp.ones((1, H), jnp.float32),
            ln1_b=jnp.zeros((1, H), jnp.float32),
            w1=nrm(lk[4], (H, inter), jnp.bfloat16),
            b1=jnp.zeros((1, inter), jnp.float32),
            w2=nrm(lk[5], (inter, H), jnp.bfloat16),
            b2=jnp.zeros((1, H), jnp.float32),
            ln2_g=jnp.ones((1, H), jnp.float32),
            ln2_b=jnp.zeros((1, H), jnp.float32),
        ))
    return params


def bert_classification_forward(params, is_training, input_ids, token_type_ids,
                                attention_mask, *, num_heads):
    B, S = input_ids.shape
    H = params["word_emb"].shape[1]

    # Embedding gathers stay in XLA glue; sum + LayerNorm uses the Pallas LN kernel.
    pos_ids = jnp.arange(S)
    x = (jnp.take(params["word_emb"], input_ids, axis=0)
         + jnp.take(params["pos_emb"], pos_ids, axis=0)[None, :, :]
         + jnp.take(params["type_emb"], token_type_ids, axis=0))
    x = pallas_layernorm(x.reshape(B * S, H), params["emb_ln_g"], params["emb_ln_b"])
    x = x.reshape(B, S, H)

    # Additive attention mask (BERT convention: -10000 on padded key positions).
    mask_add = ((1.0 - attention_mask.astype(jnp.float32)) * -10000.0).reshape(B, 1, S)

    for lp in params["layers"]:
        x = pallas_bert_layer(x, mask_add, lp, num_heads=num_heads)

    cls = x[:, 0, :]                                   # hidden_states[:, 0, :]
    out = pallas_classifier(cls, params["fc_w"], params["fc_b"],
                            apply_softmax=(not is_training))
    return out[:, :NUM_CLASSES]                        # drop lane padding


# ----------------------------------- main -----------------------------------

if __name__ == "__main__":
    key = jax.random.PRNGKey(0)
    pkey, ikey = jax.random.split(key)

    # Scaled-down, lane-dense synthetic config (real BERT-base: H=768, 12 heads, 12 layers).
    B, S = 4, 16
    H, NH, INTER, LAYERS = 128, 4, 512, 2
    VOCAB, MAXPOS, TYPES = 64, 32, 2

    params = init_params(pkey, vocab=VOCAB, max_pos=MAXPOS, type_vocab=TYPES,
                         H=H, nh=NH, n_layers=LAYERS, inter=INTER)

    input_ids = jax.random.randint(ikey, (B, S), 0, VOCAB, dtype=jnp.int32)
    token_type_ids = jnp.concatenate(
        [jnp.zeros((B, S // 2), jnp.int32), jnp.ones((B, S - S // 2), jnp.int32)], axis=1)
    lens = jnp.array([S, S, S - 3, S - 6], dtype=jnp.int32)
    attention_mask = (jnp.arange(S)[None, :] < lens[:, None]).astype(jnp.int32)

    @functools.partial(jax.jit, static_argnums=(1, 5))
    def fwd(p, is_training, ids, tt, am, num_heads):
        return bert_classification_forward(p, is_training, ids, tt, am,
                                           num_heads=num_heads)

    # Inference path (is_training=False -> softmax applied, matching the module).
    probs = jax.block_until_ready(fwd(params, False, input_ids, token_type_ids,
                                      attention_mask, NH))
    # Training path (raw logits) to exercise both branches.
    logits = jax.block_until_ready(fwd(params, True, input_ids, token_type_ids,
                                       attention_mask, NH))

    assert probs.shape == (B, NUM_CLASSES) and logits.shape == (B, NUM_CLASSES)
    assert bool(jnp.all(jnp.isfinite(probs))) and bool(jnp.all(jnp.isfinite(logits)))
    assert bool(jnp.allclose(jnp.sum(probs, axis=1), 1.0, atol=1e-4))

    print("KERNEL_OK")
</pallas_src>

<mosaic_0001>
module attributes {stable_mosaic.version = 11 : i64} {
  func.func @_ln_kernel(%arg0: i32, %arg1: memref<64x128xf32, #tpu.memory_space<vmem>>, %arg2: memref<1x128xf32, #tpu.memory_space<vmem>>, %arg3: memref<1x128xf32, #tpu.memory_space<vmem>>, %arg4: memref<64x128xf32, #tpu.memory_space<vmem>>) attributes {dimension_semantics = [#tpu.dimension_semantics<parallel>], iteration_bounds = array<i64: 1>, scalar_prefetch = 0 : i64, scratch_operands = 0 : i64, tpu.core_type = #tpu.core_type<tc>, window_params = [{transform_indices = @transform_0, window_bounds = array<i64: 64, 128>}, {pipeline_mode = #tpu.pipeline_mode<synchronous>, transform_indices = @transform_1, window_bounds = array<i64: 1, 128>}, {pipeline_mode = #tpu.pipeline_mode<synchronous>, transform_indices = @transform_2, window_bounds = array<i64: 1, 128>}, {transform_indices = @transform_3, window_bounds = array<i64: 64, 128>}]} {
    %c0 = arith.constant 0 : index
    %c0_0 = arith.constant 0 : index
    %0 = vector.load %arg1[%c0, %c0_0] : memref<64x128xf32, #tpu.memory_space<vmem>>, vector<64x128xf32>
    %c0_1 = arith.constant 0 : index
    %c0_2 = arith.constant 0 : index
    %1 = vector.load %arg2[%c0_1, %c0_2] : memref<1x128xf32, #tpu.memory_space<vmem>>, vector<1x128xf32>
    %c0_3 = arith.constant 0 : index
    %c0_4 = arith.constant 0 : index
    %2 = vector.load %arg3[%c0_3, %c0_4] : memref<1x128xf32, #tpu.memory_space<vmem>>, vector<1x128xf32>
    %cst = arith.constant dense<0.000000e+00> : vector<64xf32>
    %3 = vector.multi_reduction <add>, %0, %cst [1] : vector<64x128xf32> to vector<64xf32>
    %4 = vector.shape_cast %3 : vector<64xf32> to vector<64x1xf32>
    %cst_5 = arith.constant 1.280000e+02 : f32
    %5 = vector.broadcast %cst_5 : f32 to vector<64x1xf32>
    %6 = arith.divf %4, %5 : vector<64x1xf32>
    %7 = vector.broadcast %6 : vector<64x1xf32> to vector<64x128xf32>
    %8 = arith.subf %0, %7 : vector<64x128xf32>
    %9 = arith.mulf %8, %8 : vector<64x128xf32>
    %cst_6 = arith.constant dense<0.000000e+00> : vector<64xf32>
    %10 = vector.multi_reduction <add>, %9, %cst_6 [1] : vector<64x128xf32> to vector<64xf32>
    %11 = vector.shape_cast %10 : vector<64xf32> to vector<64x1xf32>
    %cst_7 = arith.constant 1.280000e+02 : f32
    %12 = vector.broadcast %cst_7 : f32 to vector<64x1xf32>
    %13 = arith.divf %11, %12 : vector<64x1xf32>
    %14 = vector.broadcast %6 : vector<64x1xf32> to vector<64x128xf32>
    %15 = arith.subf %0, %14 : vector<64x128xf32>
    %cst_8 = arith.constant 9.99999996E-13 : f32
    %16 = vector.broadcast %cst_8 : f32 to vector<64x1xf32>
    %17 = arith.addf %13, %16 : vector<64x1xf32>
    %18 = math.rsqrt %17 : vector<64x1xf32>
    %19 = vector.broadcast %18 : vector<64x1xf32> to vector<64x128xf32>
    %20 = arith.mulf %15, %19 : vector<64x128xf32>
    %21 = vector.broadcast %1 : vector<1x128xf32> to vector<64x128xf32>
    %22 = arith.mulf %20, %21 : vector<64x128xf32>
    %23 = vector.broadcast %2 : vector<1x128xf32> to vector<64x128xf32>
    %24 = arith.addf %22, %23 : vector<64x128xf32>
    %c0_9 = arith.constant 0 : index
    %c0_10 = arith.constant 0 : index
    %25 = vector.load %arg4[%c0_9, %c0_10] : memref<64x128xf32, #tpu.memory_space<vmem>>, vector<64x128xf32>
    tpu.vector_store %arg4[%c0_9, %c0_10], %24 {strides = array<i32>} : memref<64x128xf32, #tpu.memory_space<vmem>>, vector<64x128xf32>,
    return
  }
  func.func @transform_0(%arg0: i32) -> (i32, i32) {
    %c0_i32 = arith.constant 0 : i32
    %c0_i32_0 = arith.constant 0 : i32
    return %arg0, %c0_i32 : i32, i32
  }
  func.func @transform_1(%arg0: i32) -> (i32, i32) {
    %c0_i32 = arith.constant 0 : i32
    %c0_i32_0 = arith.constant 0 : i32
    %c0_i32_1 = arith.constant 0 : i32
    return %c0_i32, %c0_i32_0 : i32, i32
  }
  func.func @transform_2(%arg0: i32) -> (i32, i32) {
    %c0_i32 = arith.constant 0 : i32
    %c0_i32_0 = arith.constant 0 : i32
    %c0_i32_1 = arith.constant 0 : i32
    return %c0_i32, %c0_i32_0 : i32, i32
  }
  func.func @transform_3(%arg0: i32) -> (i32, i32) {
    %c0_i32 = arith.constant 0 : i32
    %c0_i32_0 = arith.constant 0 : i32
    return %arg0, %c0_i32 : i32, i32
  }
}

module attributes {stable_mosaic.version = 11 : i64} {
  func.func @_classifier_kernel(%arg0: i32, %arg1: memref<4x128xf32, #tpu.memory_space<vmem>>, %arg2: memref<128x128xbf16, #tpu.memory_space<vmem>>, %arg3: memref<1x128xf32, #tpu.memory_space<vmem>>, %arg4: memref<4x128xf32, #tpu.memory_space<vmem>>) attributes {dimension_semantics = [#tpu.dimension_semantics<arbitrary>], iteration_bounds = array<i64: 1>, scalar_prefetch = 0 : i64, scratch_operands = 0 : i64, tpu.core_type = #tpu.core_type<tc>, window_params = [{pipeline_mode = #tpu.pipeline_mode<synchronous>, transform_indices = @transform_0, window_bounds = array<i64: 4, 128>}, {pipeline_mode = #tpu.pipeline_mode<synchronous>, transform_indices = @transform_1, window_bounds = array<i64: 128, 128>}, {pipeline_mode = #tpu.pipeline_mode<synchronous>, transform_indices = @transform_2, window_bounds = array<i64: 1, 128>}, {pipeline_mode = #tpu.pipeline_mode<synchronous>, transform_indices = @transform_3, window_bounds = array<i64: 4, 128>}]} {
    %c0 = arith.constant 0 : index
    %c0_0 = arith.constant 0 : index
    %0 = vector.load %arg1[%c0, %c0_0] : memref<4x128xf32, #tpu.memory_space<vmem>>, vector<4x128xf32>
    %1 = arith.truncf %0 : vector<4x128xf32> to vector<4x128xbf16>
    %c0_1 = arith.constant 0 : index
    %c0_2 = arith.constant 0 : index
    %2 = vector.load %arg2[%c0_1, %c0_2] : memref<128x128xbf16, #tpu.memory_space<vmem>>, vector<128x128xbf16>
    %cst = arith.constant dense<0.000000e+00> : vector<4x128xf32>
    %3 = tpu.matmul %1, %2, %cst {dimension_numbers = #tpu.dot_dimension_numbers<[1], [0], [0], [1], [0, 0, 1, 1], [], []>} : vector<4x128xbf16>, vector<128x128xbf16>, vector<4x128xf32> -> vector<4x128xf32>
    %c0_3 = arith.constant 0 : index
    %c0_4 = arith.constant 0 : index
    %4 = vector.load %arg3[%c0_3, %c0_4] : memref<1x128xf32, #tpu.memory_space<vmem>>, vector<1x128xf32>
    %5 = vector.broadcast %4 : vector<1x128xf32> to vector<4x128xf32>
    %6 = arith.addf %3, %5 : vector<4x128xf32>
    %cst_5 = arith.constant dense<0xFF800000> : vector<4xf32>
    %7 = vector.multi_reduction <maximumf>, %6, %cst_5 [1] : vector<4x128xf32> to vector<4xf32>
    %8 = vector.shape_cast %7 : vector<4xf32> to vector<4x1xf32>
    %9 = vector.broadcast %8 : vector<4x1xf32> to vector<4x128xf32>
    %10 = arith.subf %6, %9 : vector<4x128xf32>
    %11 = math.exp %10 : vector<4x128xf32>
    %cst_6 = arith.constant dense<0.000000e+00> : vector<4xf32>
    %12 = vector.multi_reduction <add>, %11, %cst_6 [1] : vector<4x128xf32> to vector<4xf32>
    %13 = vector.shape_cast %12 : vector<4xf32> to vector<4x1xf32>
    %14 = tpu.reciprocal %13 : vector<4x1xf32> -> vector<4x1xf32>
    %15 = vector.broadcast %14 : vector<4x1xf32> to vector<4x128xf32>
    %16 = arith.mulf %11, %15 : vector<4x128xf32>
    %c0_7 = arith.constant 0 : index
    %c0_8 = arith.constant 0 : index
    %17 = vector.load %arg4[%c0_7, %c0_8] : memref<4x128xf32, #tpu.memory_space<vmem>>, vector<4x128xf32>
    tpu.vector_store %arg4[%c0_7, %c0_8], %16 {strides = array<i32>} : memref<4x128xf32, #tpu.memory_space<vmem>>, vector<4x128xf32>,
    return
  }
  func.func @transform_0(%arg0: i32) -> (i32, i32) {
    %c0_i32 = arith.constant 0 : i32
    %c0_i32_0 = arith.constant 0 : i32
    %c0_i32_1 = arith.constant 0 : i32
    return %c0_i32, %c0_i32_0 : i32, i32
  }
  func.func @transform_1(%arg0: i32) -> (i32, i32) {
    %c0_i32 = arith.constant 0 : i32
    %c0_i32_0 = arith.constant 0 : i32
    %c0_i32_1 = arith.constant 0 : i32
    return %c0_i32, %c0_i32_0 : i32, i32
  }
  func.func @transform_2(%arg0: i32) -> (i32, i32) {
    %c0_i32 = arith.constant 0 : i32
    %c0_i32_0 = arith.constant 0 : i32
    %c0_i32_1 = arith.constant 0 : i32
    return %c0_i32, %c0_i32_0 : i32, i32
  }
  func.func @transform_3(%arg0: i32) -> (i32, i32) {
    %c0_i32 = arith.constant 0 : i32
    %c0_i32_0 = arith.constant 0 : i32
    %c0_i32_1 = arith.constant 0 : i32
    return %c0_i32, %c0_i32_0 : i32, i32
  }
}

module attributes {stable_mosaic.version = 11 : i64} {
  func.func @_bert_layer_kernel(%arg0: i32, %arg1: memref<2x16x128xf32, #tpu.memory_space<vmem>>, %arg2: memref<2x1x16xf32, #tpu.memory_space<vmem>>, %arg3: memref<128x384xbf16, #tpu.memory_space<vmem>>, %arg4: memref<1x384xf32, #tpu.memory_space<vmem>>, %arg5: memref<128x128xbf16, #tpu.memory_space<vmem>>, %arg6: memref<1x128xf32, #tpu.memory_space<vmem>>, %arg7: memref<1x128xf32, #tpu.memory_space<vmem>>, %arg8: memref<1x128xf32, #tpu.memory_space<vmem>>, %arg9: memref<128x512xbf16, #tpu.memory_space<vmem>>, %arg10: memref<1x512xf32, #tpu.memory_space<vmem>>, %arg11: memref<512x128xbf16, #tpu.memory_space<vmem>>, %arg12: memref<1x128xf32, #tpu.memory_space<vmem>>, %arg13: memref<1x128xf32, #tpu.memory_space<vmem>>, %arg14: memref<1x128xf32, #tpu.memory_space<vmem>>, %arg15: memref<2x16x128xf32, #tpu.memory_space<vmem>>) attributes {dimension_semantics = [#tpu.dimension_semantics<parallel>], iteration_bounds = array<i64: 2>, scalar_prefetch = 0 : i64, scratch_operands = 0 : i64, tpu.core_type = #tpu.core_type<tc>, window_params = [{transform_indices = @transform_0, window_bounds = array<i64: 2, 16, 128>}, {transform_indices = @transform_1, window_bounds = array<i64: 2, 1, 16>}, {pipeline_mode = #tpu.pipeline_mode<synchronous>, transform_indices = @transform_2, window_bounds = array<i64: 128, 384>}, {pipeline_mode = #tpu.pipeline_mode<synchronous>, transform_indices = @transform_3, window_bounds = array<i64: 1, 384>}, {pipeline_mode = #tpu.pipeline_mode<synchronous>, transform_indices = @transform_4, window_bounds = array<i64: 128, 128>}, {pipeline_mode = #tpu.pipeline_mode<synchronous>, transform_indices = @transform_5, window_bounds = array<i64: 1, 128>}, {pipeline_mode = #tpu.pipeline_mode<synchronous>, transform_indices = @transform_6, window_bounds = array<i64: 1, 128>}, {pipeline_mode = #tpu.pipeline_mode<synchronous>, transform_indices = @transform_7, window_bounds = array<i64: 1, 128>}, {pipeline_mode = #tpu.pipeline_mode<synchronous>, transform_indices = @transform_8, window_bounds = array<i64: 128, 512>}, {pipeline_mode = #tpu.pipeline_mode<synchronous>, transform_indices = @transform_9, window_bounds = array<i64: 1, 512>}, {pipeline_mode = #tpu.pipeline_mode<synchronous>, transform_indices = @transform_10, window_bounds = array<i64: 512, 128>}, {pipeline_mode = #tpu.pipeline_mode<synchronous>, transform_indices = @transform_11, window_bounds = array<i64: 1, 128>}, {pipeline_mode = #tpu.pipeline_mode<synchronous>, transform_indices = @transform_12, window_bounds = array<i64: 1, 128>}, {pipeline_mode = #tpu.pipeline_mode<synchronous>, transform_indices = @transform_13, window_bounds = array<i64: 1, 128>}, {transform_indices = @transform_14, window_bounds = array<i64: 2, 16, 128>}]} {
    %c0 = arith.constant 0 : index
    %c0_0 = arith.constant 0 : index
    %c0_1 = arith.constant 0 : index
    %0 = vector.load %arg1[%c0, %c0_0, %c0_1] : memref<2x16x128xf32, #tpu.memory_space<vmem>>, vector<2x16x128xf32>
    %1 = vector.shape_cast %0 : vector<2x16x128xf32> to vector<32x128xf32>
    %2 = arith.truncf %1 : vector<32x128xf32> to vector<32x128xbf16>
    %c0_2 = arith.constant 0 : index
    %c0_3 = arith.constant 0 : index
    %3 = vector.load %arg3[%c0_2, %c0_3] : memref<128x384xbf16, #tpu.memory_space<vmem>>, vector<128x384xbf16>
    %cst = arith.constant dense<0.000000e+00> : vector<32x384xf32>
    %4 = tpu.matmul %2, %3, %cst {dimension_numbers = #tpu.dot_dimension_numbers<[1], [0], [0], [1], [0, 0, 1, 1], [], []>} : vector<32x128xbf16>, vector<128x384xbf16>, vector<32x384xf32> -> vector<32x384xf32>
    %c0_4 = arith.constant 0 : index
    %c0_5 = arith.constant 0 : index
    %5 = vector.load %arg4[%c0_4, %c0_5] : memref<1x384xf32, #tpu.memory_space<vmem>>, vector<1x384xf32>
    %6 = vector.broadcast %5 : vector<1x384xf32> to vector<32x384xf32>
    %7 = arith.addf %4, %6 : vector<32x384xf32>
    %8 = vector.extract_strided_slice %7 {offsets = [0, 0], sizes = [32, 128], strides = [1, 1]} : vector<32x384xf32> to vector<32x128xf32>
    %9 = vector.shape_cast %8 : vector<32x128xf32> to vector<2x16x128xf32>
    %10 = vector.extract_strided_slice %7 {offsets = [0, 128], sizes = [32, 128], strides = [1, 1]} : vector<32x384xf32> to vector<32x128xf32>
    %11 = vector.shape_cast %10 : vector<32x128xf32> to vector<2x16x128xf32>
    %12 = vector.extract_strided_slice %7 {offsets = [0, 256], sizes = [32, 128], strides = [1, 1]} : vector<32x384xf32> to vector<32x128xf32>
    %13 = vector.shape_cast %12 : vector<32x128xf32> to vector<2x16x128xf32>
    %c0_6 = arith.constant 0 : index
    %c0_7 = arith.constant 0 : index
    %c0_8 = arith.constant 0 : index
    %14 = vector.load %arg2[%c0_6, %c0_7, %c0_8] : memref<2x1x16xf32, #tpu.memory_space<vmem>>, vector<2x1x16xf32>
    %cst_9 = arith.constant 0.000000e+00 : f32
    %15 = vector.broadcast %cst_9 : f32 to vector<32x128xf32>
    %16 = vector.extract_strided_slice %9 {offsets = [0, 0, 0], sizes = [2, 16, 32], strides = [1, 1, 1]} : vector<2x16x128xf32> to vector<2x16x32xf32>
    %17 = arith.truncf %16 : vector<2x16x32xf32> to vector<2x16x32xbf16>
    %18 = vector.extract_strided_slice %11 {offsets = [0, 0, 0], sizes = [2, 16, 32], strides = [1, 1, 1]} : vector<2x16x128xf32> to vector<2x16x32xf32>
    %19 = arith.truncf %18 : vector<2x16x32xf32> to vector<2x16x32xbf16>
    %20 = vector.extract_strided_slice %13 {offsets = [0, 0, 0], sizes = [2, 16, 32], strides = [1, 1, 1]} : vector<2x16x128xf32> to vector<2x16x32xf32>
    %21 = arith.truncf %20 : vector<2x16x32xf32> to vector<2x16x32xbf16>
    "tpu.trace_start"() <{level = 10 : i32, message = "bqd,bkd->bqk"}> : () -> ()
    %cst_10 = arith.constant dense<0.000000e+00> : vector<2x16x16xf32>
    %22 = tpu.matmul %17, %19, %cst_10 {dimension_numbers = #tpu.dot_dimension_numbers<[2], [2], [1], [1], [0, 0, 0, 1, 1, 1], [0], [0]>} : vector<2x16x32xbf16>, vector<2x16x32xbf16>, vector<2x16x16xf32> -> vector<2x16x16xf32>
    "tpu.trace_stop"() : () -> ()
    %cst_11 = arith.constant 0.176776692 : f32
    %23 = vector.broadcast %cst_11 : f32 to vector<2x16x16xf32>
    %24 = arith.mulf %22, %23 : vector<2x16x16xf32>
    %25 = vector.broadcast %14 : vector<2x1x16xf32> to vector<2x16x16xf32>
    %26 = arith.addf %24, %25 : vector<2x16x16xf32>
    %cst_12 = arith.constant dense<0xFF800000> : vector<2x16xf32>
    %27 = vector.multi_reduction <maximumf>, %26, %cst_12 [2] : vector<2x16x16xf32> to vector<2x16xf32>
    %28 = vector.shape_cast %27 : vector<2x16xf32> to vector<2x16x1xf32>
    %29 = vector.broadcast %28 : vector<2x16x1xf32> to vector<2x16x16xf32>
    %30 = arith.subf %26, %29 : vector<2x16x16xf32>
    %31 = math.exp %30 : vector<2x16x16xf32>
    %cst_13 = arith.constant dense<0.000000e+00> : vector<2x16xf32>
    %32 = vector.multi_reduction <add>, %31, %cst_13 [2] : vector<2x16x16xf32> to vector<2x16xf32>
    %33 = vector.shape_cast %32 : vector<2x16xf32> to vector<2x16x1xf32>
    %34 = tpu.reciprocal %33 {approx = true} : vector<2x16x1xf32> -> vector<2x16x1xf32>
    %35 = vector.broadcast %34 : vector<2x16x1xf32> to vector<2x16x16xf32>
    %36 = arith.mulf %31, %35 : vector<2x16x16xf32>
    %37 = arith.truncf %36 : vector<2x16x16xf32> to vector<2x16x16xbf16>
    "tpu.trace_start"() <{level = 10 : i32, message = "bqk,bkd->bqd"}> : () -> ()
    %cst_14 = arith.constant dense<0.000000e+00> : vector<2x16x32xf32>
    %38 = tpu.matmul %37, %21, %cst_14 {dimension_numbers = #tpu.dot_dimension_numbers<[2], [1], [1], [2], [0, 0, 0, 1, 1, 2], [0], [0]>} : vector<2x16x16xbf16>, vector<2x16x32xbf16>, vector<2x16x32xf32> -> vector<2x16x32xf32>
    "tpu.trace_stop"() : () -> ()
    %39 = vector.shape_cast %38 : vector<2x16x32xf32> to vector<32x32xf32>
    %40 = arith.truncf %39 : vector<32x32xf32> to vector<32x32xbf16>
    %c0_15 = arith.constant 0 : index
    %c0_16 = arith.constant 0 : index
    %41 = vector.load %arg5[%c0_15, %c0_16] : memref<128x128xbf16, #tpu.memory_space<vmem>>, vector<32x128xbf16>
    %cst_17 = arith.constant dense<0.000000e+00> : vector<32x128xf32>
    %42 = tpu.matmul %40, %41, %cst_17 {dimension_numbers = #tpu.dot_dimension_numbers<[1], [0], [0], [1], [0, 0, 1, 1], [], []>} : vector<32x32xbf16>, vector<32x128xbf16>, vector<32x128xf32> -> vector<32x128xf32>
    %43 = arith.addf %15, %42 : vector<32x128xf32>
    %44 = vector.extract_strided_slice %9 {offsets = [0, 0, 32], sizes = [2, 16, 32], strides = [1, 1, 1]} : vector<2x16x128xf32> to vector<2x16x32xf32>
    %45 = arith.truncf %44 : vector<2x16x32xf32> to vector<2x16x32xbf16>
    %46 = vector.extract_strided_slice %11 {offsets = [0, 0, 32], sizes = [2, 16, 32], strides = [1, 1, 1]} : vector<2x16x128xf32> to vector<2x16x32xf32>
    %47 = arith.truncf %46 : vector<2x16x32xf32> to vector<2x16x32xbf16>
    %48 = vector.extract_strided_slice %13 {offsets = [0, 0, 32], sizes = [2, 16, 32], strides = [1, 1, 1]} : vector<2x16x128xf32> to vector<2x16x32xf32>
    %49 = arith.truncf %48 : vector<2x16x32xf32> to vector<2x16x32xbf16>
    "tpu.trace_start"() <{level = 10 : i32, message = "bqd,bkd->bqk"}> : () -> ()
    %cst_18 = arith.constant dense<0.000000e+00> : vector<2x16x16xf32>
    %50 = tpu.matmul %45, %47, %cst_18 {dimension_numbers = #tpu.dot_dimension_numbers<[2], [2], [1], [1], [0, 0, 0, 1, 1, 1], [0], [0]>} : vector<2x16x32xbf16>, vector<2x16x32xbf16>, vector<2x16x16xf32> -> vector<2x16x16xf32>
    "tpu.trace_stop"() : () -> ()
    %cst_19 = arith.constant 0.176776692 : f32
    %51 = vector.broadcast %cst_19 : f32 to vector<2x16x16xf32>
    %52 = arith.mulf %50, %51 : vector<2x16x16xf32>
    %53 = vector.broadcast %14 : vector<2x1x16xf32> to vector<2x16x16xf32>
    %54 = arith.addf %52, %53 : vector<2x16x16xf32>
    %cst_20 = arith.constant dense<0xFF800000> : vector<2x16xf32>
    %55 = vector.multi_reduction <maximumf>, %54, %cst_20 [2] : vector<2x16x16xf32> to vector<2x16xf32>
    %56 = vector.shape_cast %55 : vector<2x16xf32> to vector<2x16x1xf32>
    %57 = vector.broadcast %56 : vector<2x16x1xf32> to vector<2x16x16xf32>
    %58 = arith.subf %54, %57 : vector<2x16x16xf32>
    %59 = math.exp %58 : vector<2x16x16xf32>
    %cst_21 = arith.constant dense<0.000000e+00> : vector<2x16xf32>
    %60 = vector.multi_reduction <add>, %59, %cst_21 [2] : vector<2x16x16xf32> to vector<2x16xf32>
    %61 = vector.shape_cast %60 : vector<2x16xf32> to vector<2x16x1xf32>
    %62 = tpu.reciprocal %61 {approx = true} : vector<2x16x1xf32> -> vector<2x16x1xf32>
    %63 = vector.broadcast %62 : vector<2x16x1xf32> to vector<2x16x16xf32>
    %64 = arith.mulf %59, %63 : vector<2x16x16xf32>
    %65 = arith.truncf %64 : vector<2x16x16xf32> to vector<2x16x16xbf16>
    "tpu.trace_start"() <{level = 10 : i32, message = "bqk,bkd->bqd"}> : () -> ()
    %cst_22 = arith.constant dense<0.000000e+00> : vector<2x16x32xf32>
    %66 = tpu.matmul %65, %49, %cst_22 {dimension_numbers = #tpu.dot_dimension_numbers<[2], [1], [1], [2], [0, 0, 0, 1, 1, 2], [0], [0]>} : vector<2x16x16xbf16>, vector<2x16x32xbf16>, vector<2x16x32xf32> -> vector<2x16x32xf32>
    "tpu.trace_stop"() : () -> ()
    %67 = vector.shape_cast %66 : vector<2x16x32xf32> to vector<32x32xf32>
    %68 = arith.truncf %67 : vector<32x32xf32> to vector<32x32xbf16>
    %c32 = arith.constant 32 : index
    %c0_23 = arith.constant 0 : index
    %69 = vector.load %arg5[%c32, %c0_23] : memref<128x128xbf16, #tpu.memory_space<vmem>>, vector<32x128xbf16>
    %cst_24 = arith.constant dense<0.000000e+00> : vector<32x128xf32>
    %70 = tpu.matmul %68, %69, %cst_24 {dimension_numbers = #tpu.dot_dimension_numbers<[1], [0], [0], [1], [0, 0, 1, 1], [], []>} : vector<32x32xbf16>, vector<32x128xbf16>, vector<32x128xf32> -> vector<32x128xf32>
    %71 = arith.addf %43, %70 : vector<32x128xf32>
    %72 = vector.extract_strided_slice %9 {offsets = [0, 0, 64], sizes = [2, 16, 32], strides = [1, 1, 1]} : vector<2x16x128xf32> to vector<2x16x32xf32>
    %73 = arith.truncf %72 : vector<2x16x32xf32> to vector<2x16x32xbf16>
    %74 = vector.extract_strided_slice %11 {offsets = [0, 0, 64], sizes = [2, 16, 32], strides = [1, 1, 1]} : vector<2x16x128xf32> to vector<2x16x32xf32>
    %75 = arith.truncf %74 : vector<2x16x32xf32> to vector<2x16x32xbf16>
    %76 = vector.extract_strided_slice %13 {offsets = [0, 0, 64], sizes = [2, 16, 32], strides = [1, 1, 1]} : vector<2x16x128xf32> to vector<2x16x32xf32>
    %77 = arith.truncf %76 : vector<2x16x32xf32> to vector<2x16x32xbf16>
    "tpu.trace_start"() <{level = 10 : i32, message = "bqd,bkd->bqk"}> : () -> ()
    %cst_25 = arith.constant dense<0.000000e+00> : vector<2x16x16xf32>
    %78 = tpu.matmul %73, %75, %cst_25 {dimension_numbers = #tpu.dot_dimension_numbers<[2], [2], [1], [1], [0, 0, 0, 1, 1, 1], [0], [0]>} : vector<2x16x32xbf16>, vector<2x16x32xbf16>, vector<2x16x16xf32> -> vector<2x16x16xf32>
    "tpu.trace_stop"() : () -> ()
    %cst_26 = arith.constant 0.176776692 : f32
    %79 = vector.broadcast %cst_26 : f32 to vector<2x16x16xf32>
    %80 = arith.mulf %78, %79 : vector<2x16x16xf32>
    %81 = vector.broadcast %14 : vector<2x1x16xf32> to vector<2x16x16xf32>
    %82 = arith.addf %80, %81 : vector<2x16x16xf32>
    %cst_27 = arith.constant dense<0xFF800000> : vector<2x16xf32>
    %83 = vector.multi_reduction <maximumf>, %82, %cst_27 [2] : vector<2x16x16xf32> to vector<2x16xf32>
    %84 = vector.shape_cast %83 : vector<2x16xf32> to vector<2x16x1xf32>
    %85 = vector.broadcast %84 : vector<2x16x1xf32> to vector<2x16x16xf32>
    %86 = arith.subf %82, %85 : vector<2x16x16xf32>
    %87 = math.exp %86 : vector<2x16x16xf32>
    %cst_28 = arith.constant dense<0.000000e+00> : vector<2x16xf32>
    %88 = vector.multi_reduction <add>, %87, %cst_28 [2] : vector<2x16x16xf32> to vector<2x16xf32>
    %89 = vector.shape_cast %88 : vector<2x16xf32> to vector<2x16x1xf32>
    %90 = tpu.reciprocal %89 {approx = true} : vector<2x16x1xf32> -> vector<2x16x1xf32>
    %91 = vector.broadcast %90 : vector<2x16x1xf32> to vector<2x16x16xf32>
    %92 = arith.mulf %87, %91 : vector<2x16x16xf32>
    %93 = arith.truncf %92 : vector<2x16x16xf32> to vector<2x16x16xbf16>
    "tpu.trace_start"() <{level = 10 : i32, message = "bqk,bkd->bqd"}> : () -> ()
    %cst_29 = arith.constant dense<0.000000e+00> : vector<2x16x32xf32>
    %94 = tpu.matmul %93, %77, %cst_29 {dimension_numbers = #tpu.dot_dimension_numbers<[2], [1], [1], [2], [0, 0, 0, 1, 1, 2], [0], [0]>} : vector<2x16x16xbf16>, vector<2x16x32xbf16>, vector<2x16x32xf32> -> vector<2x16x32xf32>
    "tpu.trace_stop"() : () -> ()
    %95 = vector.shape_cast %94 : vector<2x16x32xf32> to vector<32x32xf32>
    %96 = arith.truncf %95 : vector<32x32xf32> to vector<32x32xbf16>
    %c64 = arith.constant 64 : index
    %c0_30 = arith.constant 0 : index
    %97 = vector.load %arg5[%c64, %c0_30] : memref<128x128xbf16, #tpu.memory_space<vmem>>, vector<32x128xbf16>
    %cst_31 = arith.constant dense<0.000000e+00> : vector<32x128xf32>
    %98 = tpu.matmul %96, %97, %cst_31 {dimension_numbers = #tpu.dot_dimension_numbers<[1], [0], [0], [1], [0, 0, 1, 1], [], []>} : vector<32x32xbf16>, vector<32x128xbf16>, vector<32x128xf32> -> vector<32x128xf32>
    %99 = arith.addf %71, %98 : vector<32x128xf32>
    %100 = vector.extract_strided_slice %9 {offsets = [0, 0, 96], sizes = [2, 16, 32], strides = [1, 1, 1]} : vector<2x16x128xf32> to vector<2x16x32xf32>
    %101 = arith.truncf %100 : vector<2x16x32xf32> to vector<2x16x32xbf16>
    %102 = vector.extract_strided_slice %11 {offsets = [0, 0, 96], sizes = [2, 16, 32], strides = [1, 1, 1]} : vector<2x16x128xf32> to vector<2x16x32xf32>
    %103 = arith.truncf %102 : vector<2x16x32xf32> to vector<2x16x32xbf16>
    %104 = vector.extract_strided_slice %13 {offsets = [0, 0, 96], sizes = [2, 16, 32], strides = [1, 1, 1]} : vector<2x16x128xf32> to vector<2x16x32xf32>
    %105 = arith.truncf %104 : vector<2x16x32xf32> to vector<2x16x32xbf16>
    "tpu.trace_start"() <{level = 10 : i32, message = "bqd,bkd->bqk"}> : () -> ()
    %cst_32 = arith.constant dense<0.000000e+00> : vector<2x16x16xf32>
    %106 = tpu.matmul %101, %103, %cst_32 {dimension_numbers = #tpu.dot_dimension_numbers<[2], [2], [1], [1], [0, 0, 0, 1, 1, 1], [0], [0]>} : vector<2x16x32xbf16>, vector<2x16x32xbf16>, vector<2x16x16xf32> -> vector<2x16x16xf32>
    "tpu.trace_stop"() : () -> ()
    %cst_33 = arith.constant 0.176776692 : f32
    %107 = vector.broadcast %cst_33 : f32 to vector<2x16x16xf32>
    %108 = arith.mulf %106, %107 : vector<2x16x16xf32>
    %109 = vector.broadcast %14 : vector<2x1x16xf32> to vector<2x16x16xf32>
    %110 = arith.addf %108, %109 : vector<2x16x16xf32>
    %cst_34 = arith.constant dense<0xFF800000> : vector<2x16xf32>
    %111 = vector.multi_reduction <maximumf>, %110, %cst_34 [2] : vector<2x16x16xf32> to vector<2x16xf32>
    %112 = vector.shape_cast %111 : vector<2x16xf32> to vector<2x16x1xf32>
    %113 = vector.broadcast %112 : vector<2x16x1xf32> to vector<2x16x16xf32>
    %114 = arith.subf %110, %113 : vector<2x16x16xf32>
    %115 = math.exp %114 : vector<2x16x16xf32>
    %cst_35 = arith.constant dense<0.000000e+00> : vector<2x16xf32>
    %116 = vector.multi_reduction <add>, %115, %cst_35 [2] : vector<2x16x16xf32> to vector<2x16xf32>
    %117 = vector.shape_cast %116 : vector<2x16xf32> to vector<2x16x1xf32>
    %118 = tpu.reciprocal %117 {approx = true} : vector<2x16x1xf32> -> vector<2x16x1xf32>
    %119 = vector.broadcast %118 : vector<2x16x1xf32> to vector<2x16x16xf32>
    %120 = arith.mulf %115, %119 : vector<2x16x16xf32>
    %121 = arith.truncf %120 : vector<2x16x16xf32> to vector<2x16x16xbf16>
    "tpu.trace_start"() <{level = 10 : i32, message = "bqk,bkd->bqd"}> : () -> ()
    %cst_36 = arith.constant dense<0.000000e+00> : vector<2x16x32xf32>
    %122 = tpu.matmul %121, %105, %cst_36 {dimension_numbers = #tpu.dot_dimension_numbers<[2], [1], [1], [2], [0, 0, 0, 1, 1, 2], [0], [0]>} : vector<2x16x16xbf16>, vector<2x16x32xbf16>, vector<2x16x32xf32> -> vector<2x16x32xf32>
    "tpu.trace_stop"() : () -> ()
    %123 = vector.shape_cast %122 : vector<2x16x32xf32> to vector<32x32xf32>
    %124 = arith.truncf %123 : vector<32x32xf32> to vector<32x32xbf16>
    %c96 = arith.constant 96 : index
    %c0_37 = arith.constant 0 : index
    %125 = vector.load %arg5[%c96, %c0_37] : memref<128x128xbf16, #tpu.memory_space<vmem>>, vector<32x128xbf16>
    %cst_38 = arith.constant dense<0.000000e+00> : vector<32x128xf32>
    %126 = tpu.matmul %124, %125, %cst_38 {dimension_numbers = #tpu.dot_dimension_numbers<[1], [0], [0], [1], [0, 0, 1, 1], [], []>} : vector<32x32xbf16>, vector<32x128xbf16>, vector<32x128xf32> -> vector<32x128xf32>
    %127 = arith.addf %99, %126 : vector<32x128xf32>
    %c0_39 = arith.constant 0 : index
    %c0_40 = arith.constant 0 : index
    %128 = vector.load %arg6[%c0_39, %c0_40] : memref<1x128xf32, #tpu.memory_space<vmem>>, vector<1x128xf32>
    %129 = vector.broadcast %128 : vector<1x128xf32> to vector<32x128xf32>
    %130 = arith.addf %127, %129 : vector<32x128xf32>
    %131 = arith.addf %1, %130 : vector<32x128xf32>
    %c0_41 = arith.constant 0 : index
    %c0_42 = arith.constant 0 : index
    %132 = vector.load %arg7[%c0_41, %c0_42] : memref<1x128xf32, #tpu.memory_space<vmem>>, vector<1x128xf32>
    %c0_43 = arith.constant 0 : index
    %c0_44 = arith.constant 0 : index
    %133 = vector.load %arg8[%c0_43, %c0_44] : memref<1x128xf32, #tpu.memory_space<vmem>>, vector<1x128xf32>
    %cst_45 = arith.constant dense<0.000000e+00> : vector<32xf32>
    %134 = vector.multi_reduction <add>, %131, %cst_45 [1] : vector<32x128xf32> to vector<32xf32>
    %135 = vector.shape_cast %134 : vector<32xf32> to vector<32x1xf32>
    %cst_46 = arith.constant 1.280000e+02 : f32
    %136 = vector.broadcast %cst_46 : f32 to vector<32x1xf32>
    %137 = arith.divf %135, %136 : vector<32x1xf32>
    %138 = vector.broadcast %137 : vector<32x1xf32> to vector<32x128xf32>
    %139 = arith.subf %131, %138 : vector<32x128xf32>
    %140 = arith.mulf %139, %139 : vector<32x128xf32>
    %cst_47 = arith.constant dense<0.000000e+00> : vector<32xf32>
    %141 = vector.multi_reduction <add>, %140, %cst_47 [1] : vector<32x128xf32> to vector<32xf32>
    %142 = vector.shape_cast %141 : vector<32xf32> to vector<32x1xf32>
    %cst_48 = arith.constant 1.280000e+02 : f32
    %143 = vector.broadcast %cst_48 : f32 to vector<32x1xf32>
    %144 = arith.divf %142, %143 : vector<32x1xf32>
    %145 = vector.broadcast %137 : vector<32x1xf32> to vector<32x128xf32>
    %146 = arith.subf %131, %145 : vector<32x128xf32>
    %cst_49 = arith.constant 9.99999996E-13 : f32
    %147 = vector.broadcast %cst_49 : f32 to vector<32x1xf32>
    %148 = arith.addf %144, %147 : vector<32x1xf32>
    %149 = math.rsqrt %148 : vector<32x1xf32>
    %150 = vector.broadcast %149 : vector<32x1xf32> to vector<32x128xf32>
    %151 = arith.mulf %146, %150 : vector<32x128xf32>
    %152 = vector.broadcast %132 : vector<1x128xf32> to vector<32x128xf32>
    %153 = arith.mulf %151, %152 : vector<32x128xf32>
    %154 = vector.broadcast %133 : vector<1x128xf32> to vector<32x128xf32>
    %155 = arith.addf %153, %154 : vector<32x128xf32>
    %156 = arith.truncf %155 : vector<32x128xf32> to vector<32x128xbf16>
    %c0_50 = arith.constant 0 : index
    %c0_51 = arith.constant 0 : index
    %157 = vector.load %arg9[%c0_50, %c0_51] : memref<128x512xbf16, #tpu.memory_space<vmem>>, vector<128x512xbf16>
    %cst_52 = arith.constant dense<0.000000e+00> : vector<32x512xf32>
    %158 = tpu.matmul %156, %157, %cst_52 {dimension_numbers = #tpu.dot_dimension_numbers<[1], [0], [0], [1], [0, 0, 1, 1], [], []>} : vector<32x128xbf16>, vector<128x512xbf16>, vector<32x512xf32> -> vector<32x512xf32>
    %c0_53 = arith.constant 0 : index
    %c0_54 = arith.constant 0 : index
    %159 = vector.load %arg10[%c0_53, %c0_54] : memref<1x512xf32, #tpu.memory_space<vmem>>, vector<1x512xf32>
    %160 = vector.broadcast %159 : vector<1x512xf32> to vector<32x512xf32>
    %161 = arith.addf %158, %160 : vector<32x512xf32>
    %162 = arith.mulf %161, %161 : vector<32x512xf32>
    %163 = arith.mulf %161, %162 : vector<32x512xf32>
    %cst_55 = arith.constant 4.471500e-02 : f32
    %164 = vector.broadcast %cst_55 : f32 to vector<32x512xf32>
    %165 = arith.mulf %164, %163 : vector<32x512xf32>
    %166 = arith.addf %161, %165 : vector<32x512xf32>
    %cst_56 = arith.constant 0.797884583 : f32
    %167 = vector.broadcast %cst_56 : f32 to vector<32x512xf32>
    %168 = arith.mulf %167, %166 : vector<32x512xf32>
    %169 = math.tanh %168 : vector<32x512xf32>
    %cst_57 = arith.constant 1.000000e+00 : f32
    %170 = vector.broadcast %cst_57 : f32 to vector<32x512xf32>
    %171 = arith.addf %170, %169 : vector<32x512xf32>
    %cst_58 = arith.constant 5.000000e-01 : f32
    %172 = vector.broadcast %cst_58 : f32 to vector<32x512xf32>
    %173 = arith.mulf %172, %171 : vector<32x512xf32>
    %174 = arith.mulf %161, %173 : vector<32x512xf32>
    %175 = arith.truncf %174 : vector<32x512xf32> to vector<32x512xbf16>
    %c0_59 = arith.constant 0 : index
    %c0_60 = arith.constant 0 : index
    %176 = vector.load %arg11[%c0_59, %c0_60] : memref<512x128xbf16, #tpu.memory_space<vmem>>, vector<512x128xbf16>
    %cst_61 = arith.constant dense<0.000000e+00> : vector<32x128xf32>
    %177 = tpu.matmul %175, %176, %cst_61 {dimension_numbers = #tpu.dot_dimension_numbers<[1], [0], [0], [1], [0, 0, 1, 1], [], []>} : vector<32x512xbf16>, vector<512x128xbf16>, vector<32x128xf32> -> vector<32x128xf32>
    %c0_62 = arith.constant 0 : index
    %c0_63 = arith.constant 0 : index
    %178 = vector.load %arg12[%c0_62, %c0_63] : memref<1x128xf32, #tpu.memory_space<vmem>>, vector<1x128xf32>
    %179 = vector.broadcast %178 : vector<1x128xf32> to vector<32x128xf32>
    %180 = arith.addf %177, %179 : vector<32x128xf32>
    %181 = arith.addf %155, %180 : vector<32x128xf32>
    %c0_64 = arith.constant 0 : index
    %c0_65 = arith.constant 0 : index
    %182 = vector.load %arg13[%c0_64, %c0_65] : memref<1x128xf32, #tpu.memory_space<vmem>>, vector<1x128xf32>
    %c0_66 = arith.constant 0 : index
    %c0_67 = arith.constant 0 : index
    %183 = vector.load %arg14[%c0_66, %c0_67] : memref<1x128xf32, #tpu.memory_space<vmem>>, vector<1x128xf32>
    %cst_68 = arith.constant dense<0.000000e+00> : vector<32xf32>
    %184 = vector.multi_reduction <add>, %181, %cst_68 [1] : vector<32x128xf32> to vector<32xf32>
    %185 = vector.shape_cast %184 : vector<32xf32> to vector<32x1xf32>
    %cst_69 = arith.constant 1.280000e+02 : f32
    %186 = vector.broadcast %cst_69 : f32 to vector<32x1xf32>
    %187 = arith.divf %185, %186 : vector<32x1xf32>
    %188 = vector.broadcast %187 : vector<32x1xf32> to vector<32x128xf32>
    %189 = arith.subf %181, %188 : vector<32x128xf32>
    %190 = arith.mulf %189, %189 : vector<32x128xf32>
    %cst_70 = arith.constant dense<0.000000e+00> : vector<32xf32>
    %191 = vector.multi_reduction <add>, %190, %cst_70 [1] : vector<32x128xf32> to vector<32xf32>
    %192 = vector.shape_cast %191 : vector<32xf32> to vector<32x1xf32>
    %cst_71 = arith.constant 1.280000e+02 : f32
    %193 = vector.broadcast %cst_71 : f32 to vector<32x1xf32>
    %194 = arith.divf %192, %193 : vector<32x1xf32>
    %195 = vector.broadcast %187 : vector<32x1xf32> to vector<32x128xf32>
    %196 = arith.subf %181, %195 : vector<32x128xf32>
    %cst_72 = arith.constant 9.99999996E-13 : f32
    %197 = vector.broadcast %cst_72 : f32 to vector<32x1xf32>
    %198 = arith.addf %194, %197 : vector<32x1xf32>
    %199 = math.rsqrt %198 : vector<32x1xf32>
    %200 = vector.broadcast %199 : vector<32x1xf32> to vector<32x128xf32>
    %201 = arith.mulf %196, %200 : vector<32x128xf32>
    %202 = vector.broadcast %182 : vector<1x128xf32> to vector<32x128xf32>
    %203 = arith.mulf %201, %202 : vector<32x128xf32>
    %204 = vector.broadcast %183 : vector<1x128xf32> to vector<32x128xf32>
    %205 = arith.addf %203, %204 : vector<32x128xf32>
    %206 = vector.shape_cast %205 : vector<32x128xf32> to vector<2x16x128xf32>
    %c0_73 = arith.constant 0 : index
    %c0_74 = arith.constant 0 : index
    %c0_75 = arith.constant 0 : index
    %207 = vector.load %arg15[%c0_73, %c0_74, %c0_75] : memref<2x16x128xf32, #tpu.memory_space<vmem>>, vector<2x16x128xf32>
    tpu.vector_store %arg15[%c0_73, %c0_74, %c0_75], %206 {strides = array<i32>} : memref<2x16x128xf32, #tpu.memory_space<vmem>>, vector<2x16x128xf32>,
    return
  }
  func.func @transform_0(%arg0: i32) -> (i32, i32, i32) {
    %c0_i32 = arith.constant 0 : i32
    %c0_i32_0 = arith.constant 0 : i32
    %c0_i32_1 = arith.constant 0 : i32
    return %arg0, %c0_i32, %c0_i32_0 : i32, i32, i32
  }
  func.func @transform_1(%arg0: i32) -> (i32, i32, i32) {
    %c0_i32 = arith.constant 0 : i32
    %c0_i32_0 = arith.constant 0 : i32
    %c0_i32_1 = arith.constant 0 : i32
    return %arg0, %c0_i32, %c0_i32_0 : i32, i32, i32
  }
  func.func @transform_2(%arg0: i32) -> (i32, i32) {
    %c0_i32 = arith.constant 0 : i32
    %c0_i32_0 = arith.constant 0 : i32
    %c0_i32_1 = arith.constant 0 : i32
    return %c0_i32, %c0_i32_0 : i32, i32
  }
  func.func @transform_3(%arg0: i32) -> (i32, i32) {
    %c0_i32 = arith.constant 0 : i32
    %c0_i32_0 = arith.constant 0 : i32
    %c0_i32_1 = arith.constant 0 : i32
    return %c0_i32, %c0_i32_0 : i32, i32
  }
  func.func @transform_4(%arg0: i32) -> (i32, i32) {
    %c0_i32 = arith.constant 0 : i32
    %c0_i32_0 = arith.constant 0 : i32
    %c0_i32_1 = arith.constant 0 : i32
    return %c0_i32, %c0_i32_0 : i32, i32
  }
  func.func @transform_5(%arg0: i32) -> (i32, i32) {
    %c0_i32 = arith.constant 0 : i32
    %c0_i32_0 = arith.constant 0 : i32
    %c0_i32_1 = arith.constant 0 : i32
    return %c0_i32, %c0_i32_0 : i32, i32
  }
  func.func @transform_6(%arg0: i32) -> (i32, i32) {
    %c0_i32 = arith.constant 0 : i32
    %c0_i32_0 = arith.constant 0 : i32
    %c0_i32_1 = arith.constant 0 : i32
    return %c0_i32, %c0_i32_0 : i32, i32
  }
  func.func @transform_7(%arg0: i32) -> (i32, i32) {
    %c0_i32 = arith.constant 0 : i32
    %c0_i32_0 = arith.constant 0 : i32
    %c0_i32_1 = arith.constant 0 : i32
    return %c0_i32, %c0_i32_0 : i32, i32
  }
  func.func @transform_8(%arg0: i32) -> (i32, i32) {
    %c0_i32 = arith.constant 0 : i32
    %c0_i32_0 = arith.constant 0 : i32
    %c0_i32_1 = arith.constant 0 : i32
    return %c0_i32, %c0_i32_0 : i32, i32
  }
  func.func @transform_9(%arg0: i32) -> (i32, i32) {
    %c0_i32 = arith.constant 0 : i32
    %c0_i32_0 = arith.constant 0 : i32
    %c0_i32_1 = arith.constant 0 : i32
    return %c0_i32, %c0_i32_0 : i32, i32
  }
  func.func @transform_10(%arg0: i32) -> (i32, i32) {
    %c0_i32 = arith.constant 0 : i32
    %c0_i32_0 = arith.constant 0 : i32
    %c0_i32_1 = arith.constant 0 : i32
    return %c0_i32, %c0_i32_0 : i32, i32
  }
  func.func @transform_11(%arg0: i32) -> (i32, i32) {
    %c0_i32 = arith.constant 0 : i32
    %c0_i32_0 = arith.constant 0 : i32
    %c0_i32_1 = arith.constant 0 : i32
    return %c0_i32, %c0_i32_0 : i32, i32
  }
  func.func @transform_12(%arg0: i32) -> (i32, i32) {
    %c0_i32 = arith.constant 0 : i32
    %c0_i32_0 = arith.constant 0 : i32
    %c0_i32_1 = arith.constant 0 : i32
    return %c0_i32, %c0_i32_0 : i32, i32
  }
  func.func @transform_13(%arg0: i32) -> (i32, i32) {
    %c0_i32 = arith.constant 0 : i32
    %c0_i32_0 = arith.constant 0 : i32
    %c0_i32_1 = arith.constant 0 : i32
    return %c0_i32, %c0_i32_0 : i32, i32
  }
  func.func @transform_14(%arg0: i32) -> (i32, i32, i32) {
    %c0_i32 = arith.constant 0 : i32
    %c0_i32_0 = arith.constant 0 : i32
    %c0_i32_1 = arith.constant 0 : i32
    return %arg0, %c0_i32, %c0_i32_0 : i32, i32, i32
  }
}

</mosaic_0001>

<llo_original>
// kernel: fwd.4
$region0: #{fwd.4}
  #allocation0 [shape = 'u32[]', space=smem, size = 0x4, offset = 0x4, fixed_abs, tag = 'smem constant byte address 0x4 - core index']
  #allocation1 [shape = 'u32[72,128]{1,0:T(1,128)}', space=vmem, size = 0x9000, scoped, tag = 'internal scratch']
  %s0 = inlined_call_operand.vmem [shape: f32[64,128], index: 0, kind: input, shape index: {}]
  %s1 = inlined_call_operand.vmem [shape: f32[1,128], index: 1, kind: input, shape index: {}]
  %s2 = inlined_call_operand.vmem [shape: f32[1,128], index: 2, kind: input, shape index: {}]
  %s3 = inlined_call_operand.vmem [shape: f32[64,128], index: 3, kind: output, shape index: {}]
  %s4 = sld [smem:[#allocation0]]
  $region22: #{fwd.4} parent=0
    _
  %s6 = ssub.s32 1, %s4
  %s7 = scalar_select 0, %s6, %s4
  // Predicated region
  $region2: #{fwd.4} parent=0 // pred_check
    _
  $region3: #{fwd.4} parent=0 // pred_check_branch
    %9 = sbr.rel (0) target = $region5
  $region4: #{fwd.4} parent=0 // pred_region
    _
  $region5: #{fwd.4} parent=0 // pred_fallthru
    _
  // Predicated region
  $region6: #{fwd.4} parent=0 // pred_check
    _
  $region7: #{fwd.4} parent=0 // pred_check_branch
    %11 = sbr.rel (0) target = $region9
  $region8: #{fwd.4} parent=0 // pred_region
    _
  $region9: #{fwd.4} parent=0 // pred_fallthru
    _
  // Predicated region
  $region10: #{fwd.4} parent=0 // pred_check
    _
  $region11: #{fwd.4} parent=0 // pred_check_branch
    %13 = sbr.rel (0) target = $region13
  $region12: #{fwd.4} parent=0 // pred_region
    _
  $region13: #{fwd.4} parent=0 // pred_fallthru
    _
  %v14 = vld [vmem:[%s0] sm:$0xff]
  %v15 = vld [vmem:[%s0 + $0x8] sm:$0xff]
  %v16 = vld [vmem:[%s0 + $0x10] sm:$0xff]
  %v17 = vld [vmem:[%s0 + $0x18] sm:$0xff]
  %v18 = vld [vmem:[%s0 + $0x20] sm:$0xff]
  %v19 = vld [vmem:[%s0 + $0x28] sm:$0xff]
  %v20 = vld [vmem:[%s0 + $0x30] sm:$0xff]
  %v21 = vld [vmem:[%s0 + $0x38] sm:$0xff]
  %v22 = vld [vmem:[%s1] sm:$0x1]
  %v23 = vld [vmem:[%s2] sm:$0x1]
  %24 = vadd.xlane.f32.xlu0 %v14
  %v25 = vpop.xlane.xlu0 %24
  %26 = vadd.xlane.f32.xlu0 %v15
  %v27 = vpop.xlane.xlu0 %26
  %28 = vadd.xlane.f32.xlu0 %v16
  %v29 = vpop.xlane.xlu0 %28
  %30 = vadd.xlane.f32.xlu0 %v17
  %v31 = vpop.xlane.xlu0 %30
  %32 = vadd.xlane.f32.xlu0 %v18
  %v33 = vpop.xlane.xlu0 %32
  %34 = vadd.xlane.f32.xlu0 %v19
  %v35 = vpop.xlane.xlu0 %34
  %36 = vadd.xlane.f32.xlu0 %v20
  %v37 = vpop.xlane.xlu0 %36
  %38 = vadd.xlane.f32.xlu0 %v21
  %v39 = vpop.xlane.xlu0 %38
  %v40 = vrcp.pop 128.0
  %v41 = vmul.f32 128.0, %v40
  %v42 = vsub.f32 1.0, %v41
  %v43 = vmul.f32 %v40, %v42
  %v44 = vadd.f32 %v40, %v43
  %vm45 = vweird.f32 %v40
  %v46 = vsel %vm45, %v40, %v44
  %v47 = vmul.f32 %v25, %v46
  %v48 = vmul.f32 %v27, %v46
  %v49 = vmul.f32 %v29, %v46
  %v50 = vmul.f32 %v31, %v46
  %v51 = vmul.f32 %v33, %v46
  %v52 = vmul.f32 %v35, %v46
  %v53 = vmul.f32 %v37, %v46
  %v54 = vmul.f32 %v39, %v46
  %v55 = vsub.f32 %v14, %v47
  %v56 = vsub.f32 %v15, %v48
  %v57 = vsub.f32 %v16, %v49
  %v58 = vsub.f32 %v17, %v50
  %v59 = vsub.f32 %v18, %v51
  %v60 = vsub.f32 %v19, %v52
  %v61 = vsub.f32 %v20, %v53
  %v62 = vsub.f32 %v21, %v54
  %v63 = vmul.f32 %v55, %v55
  %v64 = vmul.f32 %v56, %v56
  %v65 = vmul.f32 %v57, %v57
  %v66 = vmul.f32 %v58, %v58
  %v67 = vmul.f32 %v59, %v59
  %v68 = vmul.f32 %v60, %v60
  %v69 = vmul.f32 %v61, %v61
  %v70 = vmul.f32 %v62, %v62
  %71 = vadd.xlane.f32.xlu0 %v63
  %v72 = vpop.xlane.xlu0 %71
  %73 = vadd.xlane.f32.xlu0 %v64
  %v74 = vpop.xlane.xlu0 %73
  %75 = vadd.xlane.f32.xlu0 %v65
  %v76 = vpop.xlane.xlu0 %75
  %77 = vadd.xlane.f32.xlu0 %v66
  %v78 = vpop.xlane.xlu0 %77
  %79 = vadd.xlane.f32.xlu0 %v67
  %v80 = vpop.xlane.xlu0 %79
  %81 = vadd.xlane.f32.xlu0 %v68
  %v82 = vpop.xlane.xlu0 %81
  %83 = vadd.xlane.f32.xlu0 %v69
  %v84 = vpop.xlane.xlu0 %83
  %85 = vadd.xlane.f32.xlu0 %v70
  %v86 = vpop.xlane.xlu0 %85
  %v87 = vmul.f32 %v72, %v46
  %v88 = vmul.f32 %v74, %v46
  %v89 = vmul.f32 %v76, %v46
  %v90 = vmul.f32 %v78, %v46
  %v91 = vmul.f32 %v80, %v46
  %v92 = vmul.f32 %v82, %v46
  %v93 = vmul.f32 %v84, %v46
  %v94 = vmul.f32 %v86, %v46
  %v95 = vadd.f32 %v87, 1e-12
  %v96 = vadd.f32 %v88, 1e-12
  %v97 = vadd.f32 %v89, 1e-12
  %v98 = vadd.f32 %v90, 1e-12
  %v99 = vadd.f32 %v91, 1e-12
  %v100 = vadd.f32 %v92, 1e-12
  %v101 = vadd.f32 %v93, 1e-12
  %v102 = vadd.f32 %v94, 1e-12
  %v103 = vrsqrt.pop %v95
  %v104 = vmul.f32 %v103, %v95
  %v105 = vmul.f32 %v104, %v103
  %v106 = vmul.f32 0.5, %v105
  %v107 = vsub.f32 1.5, %v106
  %v108 = vmul.f32 %v103, %v107
  %vm109 = vweird.f32 %v95
  %vm110 = vweird.f32 %v103
  %vm111 = vmor %vm109, %vm110
  %v112 = vsel %vm111, %v103, %v108
  %v113 = vrsqrt.pop %v96
  %v114 = vmul.f32 %v113, %v96
  %v115 = vmul.f32 %v114, %v113
  %v116 = vmul.f32 0.5, %v115
  %v117 = vsub.f32 1.5, %v116
  %v118 = vmul.f32 %v113, %v117
  %vm119 = vweird.f32 %v96
  %vm120 = vweird.f32 %v113
  %vm121 = vmor %vm119, %vm120
  %v122 = vsel %vm121, %v113, %v118
  %v123 = vrsqrt.pop %v97
  %v124 = vmul.f32 %v123, %v97
  %v125 = vmul.f32 %v124, %v123
  %v126 = vmul.f32 0.5, %v125
  %v127 = vsub.f32 1.5, %v126
  %v128 = vmul.f32 %v123, %v127
  %vm129 = vweird.f32 %v97
  %vm130 = vweird.f32 %v123
  %vm131 = vmor %vm129, %vm130
  %v132 = vsel %vm131, %v123, %v128
  %v133 = vrsqrt.pop %v98
  %v134 = vmul.f32 %v133, %v98
  %v135 = vmul.f32 %v134, %v133
  %v136 = vmul.f32 0.5, %v135
  %v137 = vsub.f32 1.5, %v136
  %v138 = vmul.f32 %v133, %v137
  %vm139 = vweird.f32 %v98
  %vm140 = vweird.f32 %v133
  %vm141 = vmor %vm139, %vm140
  %v142 = vsel %vm141, %v133, %v138
  %v143 = vrsqrt.pop %v99
  %v144 = vmul.f32 %v143, %v99
  %v145 = vmul.f32 %v144, %v143
  %v146 = vmul.f32 0.5, %v145
  %v147 = vsub.f32 1.5, %v146
  %v148 = vmul.f32 %v143, %v147
  %vm149 = vweird.f32 %v99
  %vm150 = vweird.f32 %v143
  %vm151 = vmor %vm149, %vm150
  %v152 = vsel %vm151, %v143, %v148
  %v153 = vrsqrt.pop %v100
  %v154 = vmul.f32 %v153, %v100
  %v155 = vmul.f32 %v154, %v153
  %v156 = vmul.f32 0.5, %v155
  %v157 = vsub.f32 1.5, %v156
  %v158 = vmul.f32 %v153, %v157
  %vm159 = vweird.f32 %v100
  %vm160 = vweird.f32 %v153
  %vm161 = vmor %vm159, %vm160
  %v162 = vsel %vm161, %v153, %v158
  %v163 = vrsqrt.pop %v101
  %v164 = vmul.f32 %v163, %v101
  %v165 = vmul.f32 %v164, %v163
  %v166 = vmul.f32 0.5, %v165
  %v167 = vsub.f32 1.5, %v166
  %v168 = vmul.f32 %v163, %v167
  %vm169 = vweird.f32 %v101
  %vm170 = vweird.f32 %v163
  %vm171 = vmor %vm169, %vm170
  %v172 = vsel %vm171, %v163, %v168
  %v173 = vrsqrt.pop %v102
  %v174 = vmul.f32 %v173, %v102
  %v175 = vmul.f32 %v174, %v173
  %v176 = vmul.f32 0.5, %v175
  %v177 = vsub.f32 1.5, %v176
  %v178 = vmul.f32 %v173, %v177
  %vm179 = vweird.f32 %v102
  %vm180 = vweird.f32 %v173
  %vm181 = vmor %vm179, %vm180
  %v182 = vsel %vm181, %v173, %v178
  %v183 = vmul.f32 %v55, %v112
  %v184 = vmul.f32 %v56, %v122
  %v185 = vmul.f32 %v57, %v132
  %v186 = vmul.f32 %v58, %v142
  %v187 = vmul.f32 %v59, %v152
  %v188 = vmul.f32 %v60, %v162
  %v189 = vmul.f32 %v61, %v172
  %v190 = vmul.f32 %v62, %v182
  %v192 = vperm.slane %v22, 0
  %v194 = vmul.f32 %v183, %v192
  %v195 = vmul.f32 %v184, %v192
  %v196 = vmul.f32 %v185, %v192
  %v197 = vmul.f32 %v186, %v192
  %v198 = vmul.f32 %v187, %v192
  %v199 = vmul.f32 %v188, %v192
  %v200 = vmul.f32 %v189, %v192
  %v201 = vmul.f32 %v190, %v192
  %v203 = vperm.slane %v23, 0
  %v205 = vadd.f32 %v194, %v203
  %v206 = vadd.f32 %v195, %v203
  %v207 = vadd.f32 %v196, %v203
  %v208 = vadd.f32 %v197, %v203
  %v209 = vadd.f32 %v198, %v203
  %v210 = vadd.f32 %v199, %v203
  %v211 = vadd.f32 %v200, %v203
  %v212 = vadd.f32 %v201, %v203
  %213 = vst [vmem:[%s3] sm:$0xff] %v205
  %214 = vst [vmem:[%s3 + $0x8] sm:$0xff] %v206
  %215 = vst [vmem:[%s3 + $0x10] sm:$0xff] %v207
  %216 = vst [vmem:[%s3 + $0x18] sm:$0xff] %v208
  %217 = vst [vmem:[%s3 + $0x20] sm:$0xff] %v209
  %218 = vst [vmem:[%s3 + $0x28] sm:$0xff] %v210
  %219 = vst [vmem:[%s3 + $0x30] sm:$0xff] %v211
  %220 = vst [vmem:[%s3 + $0x38] sm:$0xff] %v212
  // Predicated region
  $region14: #{fwd.4} parent=0 // pred_check
    _
  $region15: #{fwd.4} parent=0 // pred_check_branch
    %222 = sbr.rel (0) target = $region17
  $region16: #{fwd.4} parent=0 // pred_region
    _
  $region17: #{fwd.4} parent=0 // pred_fallthru
    _
  // Predicated region
  $region18: #{fwd.4} parent=0 // pred_check
    _
  $region19: #{fwd.4} parent=0 // pred_check_branch
    %224 = sbr.rel (0) target = $region21
  $region20: #{fwd.4} parent=0 // pred_region
    _
  $region21: #{fwd.4} parent=0 // pred_fallthru
    _

// kernel: fwd.7
$region0: #{fwd.7}
  #allocation0 [shape = 'u32[]', space=smem, size = 0x4, offset = 0x4, fixed_abs, tag = 'smem constant byte address 0x4 - core index']
  #allocation1 [shape = 'u32[72,128]{1,0:T(1,128)}', space=vmem, size = 0x9000, scoped, tag = 'internal scratch']
  %s0 = inlined_call_operand.vmem [shape: f32[4,128], index: 0, kind: input, shape index: {}]
  %s1 = inlined_call_operand.vmem [shape: bf16[128,128], index: 1, kind: input, shape index: {}]
  %s2 = inlined_call_operand.vmem [shape: f32[1,128], index: 2, kind: input, shape index: {}]
  %s3 = inlined_call_operand.vmem [shape: f32[4,128], index: 3, kind: output, shape index: {}]
  %s4 = sld [smem:[#allocation0]]
  $region22: #{fwd.7} parent=0
    _
  %s6 = ssub.s32 1, %s4
  %s7 = scalar_select 0, %s6, %s4
  // Predicated region
  $region2: #{fwd.7} parent=0 // pred_check
    _
  $region3: #{fwd.7} parent=0 // pred_check_branch
    %9 = sbr.rel (0) target = $region5
  $region4: #{fwd.7} parent=0 // pred_region
    _
  $region5: #{fwd.7} parent=0 // pred_fallthru
    _
  // Predicated region
  $region6: #{fwd.7} parent=0 // pred_check
    _
  $region7: #{fwd.7} parent=0 // pred_check_branch
    %11 = sbr.rel (0) target = $region9
  $region8: #{fwd.7} parent=0 // pred_region
    _
  $region9: #{fwd.7} parent=0 // pred_fallthru
    _
  // Predicated region
  $region10: #{fwd.7} parent=0 // pred_check
    _
  $region11: #{fwd.7} parent=0 // pred_check_branch
    %13 = sbr.rel (0) target = $region13
  $region12: #{fwd.7} parent=0 // pred_region
    _
  $region13: #{fwd.7} parent=0 // pred_fallthru
    _
  %v14 = vld [vmem:[%s0] sm:$0xf]
  %v15 = vpack.c.bf16 %v14, %v14
  %v16 = vld [vmem:[%s1] sm:$0xf]
  %v17 = vld [vmem:[%s1 + $0x4] sm:$0xf]
  %v18 = vld [vmem:[%s1 + $0x8] sm:$0xf]
  %v19 = vld [vmem:[%s1 + $0xc] sm:$0xf]
  %v20 = vld [vmem:[%s1 + $0x10] sm:$0xf]
  %v21 = vld [vmem:[%s1 + $0x14] sm:$0xf]
  %v22 = vld [vmem:[%s1 + $0x18] sm:$0xf]
  %v23 = vld [vmem:[%s1 + $0x1c] sm:$0xf]
  %v24 = vld [vmem:[%s1 + $0x20] sm:$0xf]
  %v25 = vld [vmem:[%s1 + $0x24] sm:$0xf]
  %v26 = vld [vmem:[%s1 + $0x28] sm:$0xf]
  %v27 = vld [vmem:[%s1 + $0x2c] sm:$0xf]
  %v28 = vld [vmem:[%s1 + $0x30] sm:$0xf]
  %v29 = vld [vmem:[%s1 + $0x34] sm:$0xf]
  %v30 = vld [vmem:[%s1 + $0x38] sm:$0xf]
  %v31 = vld [vmem:[%s1 + $0x3c] sm:$0xf]
  %v32 = vld [vmem:[%s2] sm:$0x1]
  %v34 = vperm.slane %v32, 0
  %v52 = vunpack.c.l.b16 %v16
  %v53 = vunpack.c.l.b16 %v17
  %v54 = vunpack.c.l.b16 %v18
  %v55 = vunpack.c.l.b16 %v19
  %v56 = vunpack.c.l.b16 %v20
  %v57 = vunpack.c.l.b16 %v21
  %v58 = vunpack.c.l.b16 %v22
  %v59 = vunpack.c.l.b16 %v23
  %v60 = vunpack.c.l.b16 %v24
  %v61 = vunpack.c.l.b16 %v25
  %v62 = vunpack.c.l.b16 %v26
  %v63 = vunpack.c.l.b16 %v27
  %v64 = vunpack.c.l.b16 %v28
  %v65 = vunpack.c.l.b16 %v29
  %v66 = vunpack.c.l.b16 %v30
  %v67 = vunpack.c.l.b16 %v31
  %v68 = vpack.c.b16 %v53, %v52
  %v69 = vpack.c.b16 %v55, %v54
  %v70 = vpack.c.b16 %v57, %v56
  %v71 = vpack.c.b16 %v59, %v58
  %v72 = vpack.c.b16 %v61, %v60
  %v73 = vpack.c.b16 %v63, %v62
  %v74 = vpack.c.b16 %v65, %v64
  %v75 = vpack.c.b16 %v67, %v66
  %84 = vmatpush.bf16.msra.mxu0 %v75
  %85 = vmatpush.bf16.msra.mxu0 %v74
  %86 = vmatpush.bf16.msra.mxu0 %v73
  %87 = vmatpush.bf16.msra.mxu0 %v72
  %88 = vmatpush.bf16.msra.mxu0 %v71
  %89 = vmatpush.bf16.msra.mxu0 %v70
  %90 = vmatpush.bf16.msra.mxu0 %v69
  %91 = vmatpush.bf16.msra.mxu0 %v68
  %92 = vmatmul.bf16.gmra.mxu0 %v15
  %v93 = vpop.f32.mrf.mxu0
  %v94 = vadd.f32 %v34, %v93
  %v95 = vpop.f32.mrf.mxu0
  %96 = vdwg.mxu0
  %vm97 = vcmask 1043456
  %v98 = vsel %vm97, %v94, -inf
  %99 = vmax.xlane.f32.xlu0 %v98
  %v100 = vpop.xlane.xlu0 %99
  %v101 = vsub.f32 %v94, %v100
  %v102 = vmul.f32 %v101, 1.442695
  %v103 = vpow.pop %v102
  %v104 = vsel %vm97, %v103, 0.0
  %105 = vadd.xlane.f32.xlu0 %v104
  %v106 = vpop.xlane.xlu0 %105
  %v107 = vrcp.pop %v106
  %v108 = vmul.f32 %v106, %v107
  %v109 = vsub.f32 1.0, %v108
  %v110 = vmul.f32 %v107, %v109
  %v111 = vadd.f32 %v107, %v110
  %vm112 = vweird.f32 %v106
  %vm113 = vweird.f32 %v107
  %vm114 = vmor %vm112, %vm113
  %v115 = vsel %vm114, %v107, %v111
  %v116 = vand.u32 2147483647, %v106
  %vm117 = vcmp.eq.f32.partialorder %v116, 8.507059e+37
  %v118 = vand.u32 %v106, 2147483648
  %v119 = vor.u32 1.1754944e-38, %v118
  %v120 = vsel %vm117, %v119, %v115
  %v121 = vmul.f32 %v103, %v120
  %122 = vst [vmem:[%s3] sm:$0xf] %v121
  // Predicated region
  $region14: #{fwd.7} parent=0 // pred_check
    _
  $region15: #{fwd.7} parent=0 // pred_check_branch
    %124 = sbr.rel (0) target = $region17
  $region16: #{fwd.7} parent=0 // pred_region
    _
  $region17: #{fwd.7} parent=0 // pred_fallthru
    _
  // Predicated region
  $region18: #{fwd.7} parent=0 // pred_check
    _
  $region19: #{fwd.7} parent=0 // pred_check_branch
    %126 = sbr.rel (0) target = $region21
  $region20: #{fwd.7} parent=0 // pred_region
    _
  $region21: #{fwd.7} parent=0 // pred_fallthru
    _

// kernel: fwd.5
$region0: #{fwd.5}
  #allocation0 [shape = 'u32[]', space=smem, size = 0x4, offset = 0x4, fixed_abs, tag = 'smem constant byte address 0x4 - core index']
  #allocation1 [shape = 'u32[72,128]{1,0:T(1,128)}', space=vmem, size = 0x9000, scoped, tag = 'internal scratch']
  %s0 = inlined_call_operand.vmem [shape: f32[4,16,128], index: 0, kind: input, shape index: {}]
  %s1 = inlined_call_operand.vmem [shape: f32[4,1,16], index: 1, kind: input, shape index: {}]
  %s2 = inlined_call_operand.vmem [shape: bf16[128,384], index: 2, kind: input, shape index: {}]
  %s3 = inlined_call_operand.vmem [shape: f32[1,384], index: 3, kind: input, shape index: {}]
  %s4 = inlined_call_operand.vmem [shape: bf16[128,128], index: 4, kind: input, shape index: {}]
  %s5 = inlined_call_operand.vmem [shape: f32[1,128], index: 5, kind: input, shape index: {}]
  %s6 = inlined_call_operand.vmem [shape: f32[1,128], index: 6, kind: input, shape index: {}]
  %s7 = inlined_call_operand.vmem [shape: f32[1,128], index: 7, kind: input, shape index: {}]
  %s8 = inlined_call_operand.vmem [shape: bf16[128,512], index: 8, kind: input, shape index: {}]
  %s9 = inlined_call_operand.vmem [shape: f32[1,512], index: 9, kind: input, shape index: {}]
  %s10 = inlined_call_operand.vmem [shape: bf16[512,128], index: 10, kind: input, shape index: {}]
  %s11 = inlined_call_operand.vmem [shape: f32[1,128], index: 11, kind: input, shape index: {}]
  %s12 = inlined_call_operand.vmem [shape: f32[1,128], index: 12, kind: input, shape index: {}]
  %s13 = inlined_call_operand.vmem [shape: f32[1,128], index: 13, kind: input, shape index: {}]
  %s14 = inlined_call_operand.vmem [shape: f32[4,16,128], index: 14, kind: output, shape index: {}]
  %s15 = sld [smem:[#allocation0]]
  $region89: #{fwd.5} parent=0
    _
  %s17 = ssub.s32 1, %s15
  %s18 = scalar_select 0, %s17, %s15
  loop: start=0, step=1, limit=4
  $region2: #{fwd.5} parent=0 // loop_pre_header
    _
  $region3: #{fwd.5} parent=0 // loop_header
    %s20 = sphi 0, %s24
    %p21 = scmp.ge.s32.totalorder %s20, 4
    %s30 = sphi 0, %s32
    %s33 = sphi 0, %s30
    %s34 = sphi 0, %s33
    %s50 = sphi 0, %s34
    %s56 = sphi 0, %s58
    %s59 = sphi 0, %s56
    %s60 = sphi 0, %s59
    %s76 = sphi 0, %s60
    %s80 = sphi 0, %s80
    %s82 = sphi 0, %s80
    %s83 = sphi 0, %s82
    %s97 = sphi 0, %s83
    %s101 = sphi 0, %s101
    %s103 = sphi 0, %s101
    %s104 = sphi 0, %s103
    %s118 = sphi 0, %s104
    %s122 = sphi 0, %s122
    %s124 = sphi 0, %s122
    %s125 = sphi 0, %s124
    %s139 = sphi 0, %s125
    %s143 = sphi 0, %s143
    %s145 = sphi 0, %s143
    %s146 = sphi 0, %s145
    %s160 = sphi 0, %s146
    %s164 = sphi 0, %s164
    %s166 = sphi 0, %s164
    %s167 = sphi 0, %s166
    %s181 = sphi 0, %s167
    %s185 = sphi 0, %s185
    %s187 = sphi 0, %s185
    %s188 = sphi 0, %s187
    %s202 = sphi 0, %s188
    %s206 = sphi 0, %s206
    %s208 = sphi 0, %s206
    %s209 = sphi 0, %s208
    %s223 = sphi 0, %s209
    %s227 = sphi 0, %s227
    %s229 = sphi 0, %s227
    %s230 = sphi 0, %s229
    %s244 = sphi 0, %s230
    %s248 = sphi 0, %s248
    %s250 = sphi 0, %s248
    %s251 = sphi 0, %s250
    %s265 = sphi 0, %s251
    %s269 = sphi 0, %s269
    %s271 = sphi 0, %s269
    %s272 = sphi 0, %s271
    %s286 = sphi 0, %s272
    %s290 = sphi 0, %s290
    %s292 = sphi 0, %s290
    %s293 = sphi 0, %s292
    %s307 = sphi 0, %s293
    %s311 = sphi 0, %s311
    %s313 = sphi 0, %s311
    %s314 = sphi 0, %s313
    %s328 = sphi 0, %s314
    %s334 = sphi 0, %s336
    %s337 = sphi 0, %s334
    %s338 = sphi 0, %s337
    %s354 = sphi 0, %s338
  $region4: #{fwd.5} parent=0 // loop_header_branch
    %23 = sbr.rel (%p21) target = $region8
  $region5: #{fwd.5} parent=0 // loop_body
    %s25 = ssub.s32 %s20, 1
    %s26 = ssub.s32 %s20, 2
    %s27 = sadd.s32 %s20, 1
    %s28 = ssub.s32 %s20, %s27
    %p29 = scmp.eq.s32.totalorder %s28, 0
    %s31 = sadd.s32 %s30, 1
    %s32 = scalar_select %p29, %s30, %s31
    %p35 = pneg %p29
    %p36 = scmp.eq.s32.totalorder %s20, 1
    %p37 = por %p35, %p36
    %p38 = scmp.ne.s32.totalorder %s30, %s33
    %p39 = scmp.eq.s32.totalorder %s20, 0
    %p40 = por %p38, %p39
    %p41 = scmp.ne.s32.totalorder %s30, %s33
    %p42 = scmp.eq.s32.totalorder %s25, 1
    %p43 = por %p41, %p42
    %p44 = scmp.ne.s32.totalorder %s33, %s34
    %p45 = scmp.eq.s32.totalorder %s25, 0
    %p46 = por %p44, %p45
    %p47 = scmp.ne.s32.totalorder %s33, %s34
    %p48 = scmp.eq.s32.totalorder %s26, 1
    %p49 = por %p47, %p48
    %p51 = scmp.ne.s32.totalorder %s34, %s50
    %p52 = scmp.eq.s32.totalorder %s26, 0
    %p53 = por %p51, %p52
    %s54 = ssub.s32 %s20, %s27
    %p55 = scmp.eq.s32.totalorder %s54, 0
    %s57 = sadd.s32 %s56, 1
    %s58 = scalar_select %p55, %s56, %s57
    %p61 = pneg %p55
    %p62 = scmp.eq.s32.totalorder %s20, 1
    %p63 = por %p61, %p62
    %p64 = scmp.ne.s32.totalorder %s56, %s59
    %p65 = scmp.eq.s32.totalorder %s20, 0
    %p66 = por %p64, %p65
    %p67 = scmp.ne.s32.totalorder %s56, %s59
    %p68 = scmp.eq.s32.totalorder %s25, 1
    %p69 = por %p67, %p68
    %p70 = scmp.ne.s32.totalorder %s59, %s60
    %p71 = scmp.eq.s32.totalorder %s25, 0
    %p72 = por %p70, %p71
    %p73 = scmp.ne.s32.totalorder %s59, %s60
    %p74 = scmp.eq.s32.totalorder %s26, 1
    %p75 = por %p73, %p74
    %p77 = scmp.ne.s32.totalorder %s60, %s76
    %p78 = scmp.eq.s32.totalorder %s26, 0
    %p79 = por %p77, %p78
    %s81 = sadd.s32 %s80, 1
    %p84 = scmp.eq.s32.totalorder %s20, 1
    %p85 = scmp.ne.s32.totalorder %s80, %s82
    %p86 = scmp.eq.s32.totalorder %s20, 0
    %p87 = por %p85, %p86
    %p88 = scmp.ne.s32.totalorder %s80, %s82
    %p89 = scmp.eq.s32.totalorder %s25, 1
    %p90 = por %p88, %p89
    %p91 = scmp.ne.s32.totalorder %s82, %s83
    %p92 = scmp.eq.s32.totalorder %s25, 0
    %p93 = por %p91, %p92
    %p94 = scmp.ne.s32.totalorder %s82, %s83
    %p95 = scmp.eq.s32.totalorder %s26, 1
    %p96 = por %p94, %p95
    %p98 = scmp.ne.s32.totalorder %s83, %s97
    %p99 = scmp.eq.s32.totalorder %s26, 0
    %p100 = por %p98, %p99
    %s102 = sadd.s32 %s101, 1
    %p105 = scmp.eq.s32.totalorder %s20, 1
    %p106 = scmp.ne.s32.totalorder %s101, %s103
    %p107 = scmp.eq.s32.totalorder %s20, 0
    %p108 = por %p106, %p107
    %p109 = scmp.ne.s32.totalorder %s101, %s103
    %p110 = scmp.eq.s32.totalorder %s25, 1
    %p111 = por %p109, %p110
    %p112 = scmp.ne.s32.totalorder %s103, %s104
    %p113 = scmp.eq.s32.totalorder %s25, 0
    %p114 = por %p112, %p113
    %p115 = scmp.ne.s32.totalorder %s103, %s104
    %p116 = scmp.eq.s32.totalorder %s26, 1
    %p117 = por %p115, %p116
    %p119 = scmp.ne.s32.totalorder %s104, %s118
    %p120 = scmp.eq.s32.totalorder %s26, 0
    %p121 = por %p119, %p120
    %s123 = sadd.s32 %s122, 1
    %p126 = scmp.eq.s32.totalorder %s20, 1
    %p127 = scmp.ne.s32.totalorder %s122, %s124
    %p128 = scmp.eq.s32.totalorder %s20, 0
    %p129 = por %p127, %p128
    %p130 = scmp.ne.s32.totalorder %s122, %s124
    %p131 = scmp.eq.s32.totalorder %s25, 1
    %p132 = por %p130, %p131
    %p133 = scmp.ne.s32.totalorder %s124, %s125
    %p134 = scmp.eq.s32.totalorder %s25, 0
    %p135 = por %p133, %p134
    %p136 = scmp.ne.s32.totalorder %s124, %s125
    %p137 = scmp.eq.s32.totalorder %s26, 1
    %p138 = por %p136, %p137
    %p140 = scmp.ne.s32.totalorder %s125, %s139
    %p141 = scmp.eq.s32.totalorder %s26, 0
    %p142 = por %p140, %p141
    %s144 = sadd.s32 %s143, 1
    %p147 = scmp.eq.s32.totalorder %s20, 1
    %p148 = scmp.ne.s32.totalorder %s143, %s145
    %p149 = scmp.eq.s32.totalorder %s20, 0
    %p150 = por %p148, %p149
    %p151 = scmp.ne.s32.totalorder %s143, %s145
    %p152 = scmp.eq.s32.totalorder %s25, 1
    %p153 = por %p151, %p152
    %p154 = scmp.ne.s32.totalorder %s145, %s146
    %p155 = scmp.eq.s32.totalorder %s25, 0
    %p156 = por %p154, %p155
    %p157 = scmp.ne.s32.totalorder %s145, %s146
    %p158 = scmp.eq.s32.totalorder %s26, 1
    %p159 = por %p157, %p158
    %p161 = scmp.ne.s32.totalorder %s146, %s160
    %p162 = scmp.eq.s32.totalorder %s26, 0
    %p163 = por %p161, %p162
    %s165 = sadd.s32 %s164, 1
    %p168 = scmp.eq.s32.totalorder %s20, 1
    %p169 = scmp.ne.s32.totalorder %s164, %s166
    %p170 = scmp.eq.s32.totalorder %s20, 0
    %p171 = por %p169, %p170
    %p172 = scmp.ne.s32.totalorder %s164, %s166
    %p173 = scmp.eq.s32.totalorder %s25, 1
    %p174 = por %p172, %p173
    %p175 = scmp.ne.s32.totalorder %s166, %s167
    %p176 = scmp.eq.s32.totalorder %s25, 0
    %p177 = por %p175, %p176
    %p178 = scmp.ne.s32.totalorder %s166, %s167
    %p179 = scmp.eq.s32.totalorder %s26, 1
    %p180 = por %p178, %p179
    %p182 = scmp.ne.s32.totalorder %s167, %s181
    %p183 = scmp.eq.s32.totalorder %s26, 0
    %p184 = por %p182, %p183
    %s186 = sadd.s32 %s185, 1
    %p189 = scmp.eq.s32.totalorder %s20, 1
    %p190 = scmp.ne.s32.totalorder %s185, %s187
    %p191 = scmp.eq.s32.totalorder %s20, 0
    %p192 = por %p190, %p191
    %p193 = scmp.ne.s32.totalorder %s185, %s187
    %p194 = scmp.eq.s32.totalorder %s25, 1
    %p195 = por %p193, %p194
    %p196 = scmp.ne.s32.totalorder %s187, %s188
    %p197 = scmp.eq.s32.totalorder %s25, 0
    %p198 = por %p196, %p197
    %p199 = scmp.ne.s32.totalorder %s187, %s188
    %p200 = scmp.eq.s32.totalorder %s26, 1
    %p201 = por %p199, %p200
    %p203 = scmp.ne.s32.totalorder %s188, %s202
    %p204 = scmp.eq.s32.totalorder %s26, 0
    %p205 = por %p203, %p204
    %s207 = sadd.s32 %s206, 1
    %p210 = scmp.eq.s32.totalorder %s20, 1
    %p211 = scmp.ne.s32.totalorder %s206, %s208
    %p212 = scmp.eq.s32.totalorder %s20, 0
    %p213 = por %p211, %p212
    %p214 = scmp.ne.s32.totalorder %s206, %s208
    %p215 = scmp.eq.s32.totalorder %s25, 1
    %p216 = por %p214, %p215
    %p217 = scmp.ne.s32.totalorder %s208, %s209
    %p218 = scmp.eq.s32.totalorder %s25, 0
    %p219 = por %p217, %p218
    %p220 = scmp.ne.s32.totalorder %s208, %s209
    %p221 = scmp.eq.s32.totalorder %s26, 1
    %p222 = por %p220, %p221
    %p224 = scmp.ne.s32.totalorder %s209, %s223
    %p225 = scmp.eq.s32.totalorder %s26, 0
    %p226 = por %p224, %p225
    %s228 = sadd.s32 %s227, 1
    %p231 = scmp.eq.s32.totalorder %s20, 1
    %p232 = scmp.ne.s32.totalorder %s227, %s229
    %p233 = scmp.eq.s32.totalorder %s20, 0
    %p234 = por %p232, %p233
    %p235 = scmp.ne.s32.totalorder %s227, %s229
    %p236 = scmp.eq.s32.totalorder %s25, 1
    %p237 = por %p235, %p236
    %p238 = scmp.ne.s32.totalorder %s229, %s230
    %p239 = scmp.eq.s32.totalorder %s25, 0
    %p240 = por %p238, %p239
    %p241 = scmp.ne.s32.totalorder %s229, %s230
    %p242 = scmp.eq.s32.totalorder %s26, 1
    %p243 = por %p241, %p242
    %p245 = scmp.ne.s32.totalorder %s230, %s244
    %p246 = scmp.eq.s32.totalorder %s26, 0
    %p247 = por %p245, %p246
    %s249 = sadd.s32 %s248, 1
    %p252 = scmp.eq.s32.totalorder %s20, 1
    %p253 = scmp.ne.s32.totalorder %s248, %s250
    %p254 = scmp.eq.s32.totalorder %s20, 0
    %p255 = por %p253, %p254
    %p256 = scmp.ne.s32.totalorder %s248, %s250
    %p257 = scmp.eq.s32.totalorder %s25, 1
    %p258 = por %p256, %p257
    %p259 = scmp.ne.s32.totalorder %s250, %s251
    %p260 = scmp.eq.s32.totalorder %s25, 0
    %p261 = por %p259, %p260
    %p262 = scmp.ne.s32.totalorder %s250, %s251
    %p263 = scmp.eq.s32.totalorder %s26, 1
    %p264 = por %p262, %p263
    %p266 = scmp.ne.s32.totalorder %s251, %s265
    %p267 = scmp.eq.s32.totalorder %s26, 0
    %p268 = por %p266, %p267
    %s270 = sadd.s32 %s269, 1
    %p273 = scmp.eq.s32.totalorder %s20, 1
    %p274 = scmp.ne.s32.totalorder %s269, %s271
    %p275 = scmp.eq.s32.totalorder %s20, 0
    %p276 = por %p274, %p275
    %p277 = scmp.ne.s32.totalorder %s269, %s271
    %p278 = scmp.eq.s32.totalorder %s25, 1
    %p279 = por %p277, %p278
    %p280 = scmp.ne.s32.totalorder %s271, %s272
    %p281 = scmp.eq.s32.totalorder %s25, 0
    %p282 = por %p280, %p281
    %p283 = scmp.ne.s32.totalorder %s271, %s272
    %p284 = scmp.eq.s32.totalorder %s26, 1
    %p285 = por %p283, %p284
    %p287 = scmp.ne.s32.totalorder %s272, %s286
    %p288 = scmp.eq.s32.totalorder %s26, 0
    %p289 = por %p287, %p288
    %s291 = sadd.s32 %s290, 1
    %p294 = scmp.eq.s32.totalorder %s20, 1
    %p295 = scmp.ne.s32.totalorder %s290, %s292
    %p296 = scmp.eq.s32.totalorder %s20, 0
    %p297 = por %p295, %p296
    %p298 = scmp.ne.s32.totalorder %s290, %s292
    %p299 = scmp.eq.s32.totalorder %s25, 1
    %p300 = por %p298, %p299
    %p301 = scmp.ne.s32.totalorder %s292, %s293
    %p302 = scmp.eq.s32.totalorder %s25, 0
    %p303 = por %p301, %p302
    %p304 = scmp.ne.s32.totalorder %s292, %s293
    %p305 = scmp.eq.s32.totalorder %s26, 1
    %p306 = por %p304, %p305
    %p308 = scmp.ne.s32.totalorder %s293, %s307
    %p309 = scmp.eq.s32.totalorder %s26, 0
    %p310 = por %p308, %p309
    %s312 = sadd.s32 %s311, 1
    %p315 = scmp.eq.s32.totalorder %s20, 1
    %p316 = scmp.ne.s32.totalorder %s311, %s313
    %p317 = scmp.eq.s32.totalorder %s20, 0
    %p318 = por %p316, %p317
    %p319 = scmp.ne.s32.totalorder %s311, %s313
    %p320 = scmp.eq.s32.totalorder %s25, 1
    %p321 = por %p319, %p320
    %p322 = scmp.ne.s32.totalorder %s313, %s314
    %p323 = scmp.eq.s32.totalorder %s25, 0
    %p324 = por %p322, %p323
    %p325 = scmp.ne.s32.totalorder %s313, %s314
    %p326 = scmp.eq.s32.totalorder %s26, 1
    %p327 = por %p325, %p326
    %p329 = scmp.ne.s32.totalorder %s314, %s328
    %p330 = scmp.eq.s32.totalorder %s26, 0
    %p331 = por %p329, %p330
    %s332 = ssub.s32 %s20, %s27
    %p333 = scmp.eq.s32.totalorder %s332, 0
    %s335 = sadd.s32 %s334, 1
    %s336 = scalar_select %p333, %s334, %s335
    %p339 = pneg %p333
    %p340 = scmp.eq.s32.totalorder %s20, 1
    %p341 = por %p339, %p340
    %p342 = scmp.ne.s32.totalorder %s334, %s337
    %p343 = scmp.eq.s32.totalorder %s20, 0
    %p344 = por %p342, %p343
    %p345 = scmp.ne.s32.totalorder %s334, %s337
    %p346 = scmp.eq.s32.totalorder %s25, 1
    %p347 = por %p345, %p346
    %p348 = scmp.ne.s32.totalorder %s337, %s338
    %p349 = scmp.eq.s32.totalorder %s25, 0
    %p350 = por %p348, %p349
    %p351 = scmp.ne.s32.totalorder %s337, %s338
    %p352 = scmp.eq.s32.totalorder %s26, 1
    %p353 = por %p351, %p352
    %p355 = scmp.ne.s32.totalorder %s338, %s354
    %p356 = scmp.eq.s32.totalorder %s26, 0
    %p357 = por %p355, %p356
    %p358 = scmp.le.s32.totalorder 1, %s20
    %p359 = scmp.lt.s32.totalorder %s20, 3
    %p360 = pnand %p358, %p359
    %p361 = pneg %p360
    // Predicated region
    $region9: #{fwd.5} parent=5 // pred_check
      _
    $region10: #{fwd.5} parent=5 // pred_check_branch
      %363 = sbr.rel (%p360) target = $region12
    $region11: #{fwd.5} parent=5 // pred_region
      %s364 = ssub.s32 %s20, 1
      // Predicated region
      $region13: #{fwd.5} parent=11 // pred_check
        %p365 = pneg %p93
      $region14: #{fwd.5} parent=11 // pred_check_branch
        %367 = sbr.rel (%p365) target = $region16
      $region15: #{fwd.5} parent=11 // pred_region
        _
      $region16: #{fwd.5} parent=11 // pred_fallthru
        _
      // Predicated region
      $region17: #{fwd.5} parent=11 // pred_check
        %p368 = pneg %p114
      $region18: #{fwd.5} parent=11 // pred_check_branch
        %370 = sbr.rel (%p368) target = $region20
      $region19: #{fwd.5} parent=11 // pred_region
        _
      $region20: #{fwd.5} parent=11 // pred_fallthru
        _
      // Predicated region
      $region21: #{fwd.5} parent=11 // pred_check
        %p371 = pneg %p135
      $region22: #{fwd.5} parent=11 // pred_check_branch
        %373 = sbr.rel (%p371) target = $region24
      $region23: #{fwd.5} parent=11 // pred_region
        _
      $region24: #{fwd.5} parent=11 // pred_fallthru
        _
      // Predicated region
      $region25: #{fwd.5} parent=11 // pred_check
        %p374 = pneg %p156
      $region26: #{fwd.5} parent=11 // pred_check_branch
        %376 = sbr.rel (%p374) target = $region28
      $region27: #{fwd.5} parent=11 // pred_region
        _
      $region28: #{fwd.5} parent=11 // pred_fallthru
        _
      // Predicated region
      $region29: #{fwd.5} parent=11 // pred_check
        %p377 = pneg %p177
      $region30: #{fwd.5} parent=11 // pred_check_branch
        %379 = sbr.rel (%p377) target = $region32
      $region31: #{fwd.5} parent=11 // pred_region
        _
      $region32: #{fwd.5} parent=11 // pred_fallthru
        _
      // Predicated region
      $region33: #{fwd.5} parent=11 // pred_check
        %p380 = pneg %p198
      $region34: #{fwd.5} parent=11 // pred_check_branch
        %382 = sbr.rel (%p380) target = $region36
      $region35: #{fwd.5} parent=11 // pred_region
        _
      $region36: #{fwd.5} parent=11 // pred_fallthru
        _
      // Predicated region
      $region37: #{fwd.5} parent=11 // pred_check
        %p383 = pneg %p219
      $region38: #{fwd.5} parent=11 // pred_check_branch
        %385 = sbr.rel (%p383) target = $region40
      $region39: #{fwd.5} parent=11 // pred_region
        _
      $region40: #{fwd.5} parent=11 // pred_fallthru
        _
      // Predicated region
      $region41: #{fwd.5} parent=11 // pred_check
        %p386 = pneg %p240
      $region42: #{fwd.5} parent=11 // pred_check_branch
        %388 = sbr.rel (%p386) target = $region44
      $region43: #{fwd.5} parent=11 // pred_region
        _
      $region44: #{fwd.5} parent=11 // pred_fallthru
        _
      // Predicated region
      $region45: #{fwd.5} parent=11 // pred_check
        %p389 = pneg %p261
      $region46: #{fwd.5} parent=11 // pred_check_branch
        %391 = sbr.rel (%p389) target = $region48
      $region47: #{fwd.5} parent=11 // pred_region
        _
      $region48: #{fwd.5} parent=11 // pred_fallthru
        _
      // Predicated region
      $region49: #{fwd.5} parent=11 // pred_check
        %p392 = pneg %p282
      $region50: #{fwd.5} parent=11 // pred_check_branch
        %394 = sbr.rel (%p392) target = $region52
      $region51: #{fwd.5} parent=11 // pred_region
        _
      $region52: #{fwd.5} parent=11 // pred_fallthru
        _
      // Predicated region
      $region53: #{fwd.5} parent=11 // pred_check
        %p395 = pneg %p303
      $region54: #{fwd.5} parent=11 // pred_check_branch
        %397 = sbr.rel (%p395) target = $region56
      $region55: #{fwd.5} parent=11 // pred_region
        _
      $region56: #{fwd.5} parent=11 // pred_fallthru
        _
      // Predicated region
      $region57: #{fwd.5} parent=11 // pred_check
        %p398 = pneg %p324
      $region58: #{fwd.5} parent=11 // pred_check_branch
        %400 = sbr.rel (%p398) target = $region60
      $region59: #{fwd.5} parent=11 // pred_region
        _
      $region60: #{fwd.5} parent=11 // pred_fallthru
        _
    $region12: #{fwd.5} parent=5 // pred_fallthru
      _
    %p401 = scmp.lt.s32.totalorder %s20, 2
    // Predicated region
    $region61: #{fwd.5} parent=5 // pred_check
      %p402 = pneg %p401
    $region62: #{fwd.5} parent=5 // pred_check_branch
      %404 = sbr.rel (%p402) target = $region64
    $region63: #{fwd.5} parent=5 // pred_region
      // Predicated region
      $region65: #{fwd.5} parent=63 // pred_check
        %p405 = pneg %p40
      $region66: #{fwd.5} parent=63 // pred_check_branch
        %407 = sbr.rel (%p405) target = $region68
      $region67: #{fwd.5} parent=63 // pred_region
        %s408 = smul.u32 2, %s20
        %p409 = scmp.lt.s32.totalorder %s408, 3
        %s410 = scalar_select %p409, %s408, 3
        %s411 = smul.addr %s410, 2
        %s412 = smul.addr %s411, 8
        %s413 = scalar_lea.vmem %s0, %s412
        %s414 = smul.u32 2, %s20
      $region68: #{fwd.5} parent=63 // pred_fallthru
        _
      // Predicated region
      $region69: #{fwd.5} parent=63 // pred_check
        %p415 = pneg %p66
      $region70: #{fwd.5} parent=63 // pred_check_branch
        %417 = sbr.rel (%p415) target = $region72
      $region71: #{fwd.5} parent=63 // pred_region
        %s418 = smul.u32 2, %s20
        %p419 = scmp.lt.s32.totalorder %s418, 3
        %s420 = scalar_select %p419, %s418, 3
        %s421 = scalar_lea.vmem %s1, %s420
        %s422 = smul.u32 2, %s20
      $region72: #{fwd.5} parent=63 // pred_fallthru
        _
    $region64: #{fwd.5} parent=5 // pred_fallthru
      _
    %p423 = scmp.le.s32.totalorder 1, %s20
    %p424 = scmp.lt.s32.totalorder %s20, 3
    %p425 = pnand %p423, %p424
    %p426 = pneg %p425
    // Predicated region
    $region73: #{fwd.5} parent=5 // pred_check
      _
    $region74: #{fwd.5} parent=5 // pred_check_branch
      %428 = sbr.rel (%p425) target = $region76
    $region75: #{fwd.5} parent=5 // pred_region
      %s429 = ssub.s32 %s20, 1
      %s430 = smul.u32 2, %s25
      %p431 = scmp.lt.s32.totalorder %s430, 3
      %s432 = scalar_select %p431, %s430, 3
      %s433 = smul.addr %s432, 2
      %s434 = smul.addr %s433, 8
      %s435 = scalar_lea.vmem %s0, %s434
      %p436 = pneg %p46
      %p437 = pneg %p43
      %s438 = smul.u32 2, %s25
      %p439 = scmp.lt.s32.totalorder %s438, 3
      %s440 = scalar_select %p439, %s438, 3
      %s441 = scalar_lea.vmem %s1, %s440
      %p442 = pneg %p72
      %p443 = pneg %p69
      %p444 = pneg %p93
      %p445 = pneg %p90
      %p446 = pneg %p114
      %p447 = pneg %p111
      %p448 = pneg %p135
      %p449 = pneg %p132
      %p450 = pneg %p156
      %p451 = pneg %p153
      %p452 = pneg %p177
      %p453 = pneg %p174
      %p454 = pneg %p198
      %p455 = pneg %p195
      %p456 = pneg %p219
      %p457 = pneg %p216
      %p458 = pneg %p240
      %p459 = pneg %p237
      %p460 = pneg %p261
      %p461 = pneg %p258
      %p462 = pneg %p282
      %p463 = pneg %p279
      %p464 = pneg %p303
      %p465 = pneg %p300
      %p466 = pneg %p324
      %p467 = pneg %p321
      %p468 = pneg %p350
      %p469 = pneg %p347
      %s470 = smul.u32 2, %s25
      %p471 = scmp.lt.s32.totalorder %s470, 3
      %s472 = scalar_select %p471, %s470, 3
      %s473 = smul.addr %s472, 2
      %s474 = smul.addr %s473, 8
      %s475 = scalar_lea.vmem %s14, %s474
      %s476 = smul.u32 2, %s25
      %p477 = scmp.lt.s32.totalorder %s476, 3
      %s478 = scalar_select %p477, %s476, 3
      %s479 = smul.addr %s478, 2
      %s480 = smul.addr %s479, 8
      %s481 = scalar_lea.vmem %s0, %s480
      %s482 = smul.u32 2, %s25
      %s483 = smul.u32 2, %s25
      %p484 = scmp.lt.s32.totalorder %s483, 3
      %s485 = scalar_select %p484, %s483, 3
      %s486 = scalar_lea.vmem %s1, %s485
      %s487 = smul.u32 2, %s25
      %s488 = smul.u32 2, %s25
      %p489 = scmp.lt.s32.totalorder %s488, 3
      %s490 = scalar_select %p489, %s488, 3
      %s491 = smul.addr %s490, 2
      %s492 = smul.addr %s491, 8
      %s493 = scalar_lea.vmem %s14, %s492
      %s494 = smul.u32 2, %s25
      %v496 = vld [vmem:[%s481] sm:$0xff]
      %v497 = vld [vmem:[%s481 + $0x8] sm:$0xff]
      %v498 = vld [vmem:[%s481 + $0x10] sm:$0xff]
      %v499 = vld [vmem:[%s481 + $0x18] sm:$0xff]
      %v500 = vpack.c.bf16 %v497, %v496
      %v501 = vpack.c.bf16 %v499, %v498
      %v502 = vld [vmem:[%s2] sm:$0xff]
      %v503 = vld [vmem:[%s2 + $0x8] sm:$0xf]
      %v504 = vld [vmem:[%s2 + $0xc] sm:$0xff]
      %v505 = vld [vmem:[%s2 + $0x14] sm:$0xf]
      %v506 = vld [vmem:[%s2 + $0x18] sm:$0xff]
      %v507 = vld [vmem:[%s2 + $0x20] sm:$0xf]
      %v508 = vld [vmem:[%s2 + $0x24] sm:$0xff]
      %v509 = vld [vmem:[%s2 + $0x2c] sm:$0xf]
      %v510 = vld [vmem:[%s2 + $0x30] sm:$0xff]
      %v511 = vld [vmem:[%s2 + $0x38] sm:$0xf]
      %v512 = vld [vmem:[%s2 + $0x3c] sm:$0xff]
      %v513 = vld [vmem:[%s2 + $0x44] sm:$0xf]
      %v514 = vld [vmem:[%s2 + $0x48] sm:$0xff]
      %v515 = vld [vmem:[%s2 + $0x50] sm:$0xf]
      %v516 = vld [vmem:[%s2 + $0x54] sm:$0xff]
      %v517 = vld [vmem:[%s2 + $0x5c] sm:$0xf]
      %v518 = vld [vmem:[%s2 + $0x60] sm:$0xff]
      %v519 = vld [vmem:[%s2 + $0x68] sm:$0xf]
      %v520 = vld [vmem:[%s2 + $0x6c] sm:$0xff]
      %v521 = vld [vmem:[%s2 + $0x74] sm:$0xf]
      %v522 = vld [vmem:[%s2 + $0x78] sm:$0xff]
      %v523 = vld [vmem:[%s2 + $0x80] sm:$0xf]
      %v524 = vld [vmem:[%s2 + $0x84] sm:$0xff]
      %v525 = vld [vmem:[%s2 + $0x8c] sm:$0xf]
      %v526 = vld [vmem:[%s2 + $0x90] sm:$0xff]
      %v527 = vld [vmem:[%s2 + $0x98] sm:$0xf]
      %v528 = vld [vmem:[%s2 + $0x9c] sm:$0xff]
      %v529 = vld [vmem:[%s2 + $0xa4] sm:$0xf]
      %v530 = vld [vmem:[%s2 + $0xa8] sm:$0xff]
      %v531 = vld [vmem:[%s2 + $0xb0] sm:$0xf]
      %v532 = vld [vmem:[%s2 + $0xb4] sm:$0xff]
      %v533 = vld [vmem:[%s2 + $0xbc] sm:$0xf]
      %v534 = vld [vmem:[%s3] sm:$0x7]
      %v536 = vperm.slane %v534, 0
      %v537 = vperm.slane %v534, 1
      %v538 = vperm.slane %v534, 2
      %v574 = vunpack.c.l.b16 %v502
      %v575 = vunpack.c.h.b16 %v502
      %v576 = vunpack.c.l.b16 %v503
      %v577 = vunpack.c.l.b16 %v504
      %v578 = vunpack.c.h.b16 %v504
      %v579 = vunpack.c.l.b16 %v505
      %v580 = vunpack.c.l.b16 %v506
      %v581 = vunpack.c.h.b16 %v506
      %v582 = vunpack.c.l.b16 %v507
      %v583 = vunpack.c.l.b16 %v508
      %v584 = vunpack.c.h.b16 %v508
      %v585 = vunpack.c.l.b16 %v509
      %v586 = vunpack.c.l.b16 %v510
      %v587 = vunpack.c.h.b16 %v510
      %v588 = vunpack.c.l.b16 %v511
      %v589 = vunpack.c.l.b16 %v512
      %v590 = vunpack.c.h.b16 %v512
      %v591 = vunpack.c.l.b16 %v513
      %v592 = vunpack.c.l.b16 %v514
      %v593 = vunpack.c.h.b16 %v514
      %v594 = vunpack.c.l.b16 %v515
      %v595 = vunpack.c.l.b16 %v516
      %v596 = vunpack.c.h.b16 %v516
      %v597 = vunpack.c.l.b16 %v517
      %v598 = vunpack.c.l.b16 %v518
      %v599 = vunpack.c.h.b16 %v518
      %v600 = vunpack.c.l.b16 %v519
      %v601 = vunpack.c.l.b16 %v520
      %v602 = vunpack.c.h.b16 %v520
      %v603 = vunpack.c.l.b16 %v521
      %v604 = vunpack.c.l.b16 %v522
      %v605 = vunpack.c.h.b16 %v522
      %v606 = vunpack.c.l.b16 %v523
      %v607 = vunpack.c.l.b16 %v524
      %v608 = vunpack.c.h.b16 %v524
      %v609 = vunpack.c.l.b16 %v525
      %v610 = vunpack.c.l.b16 %v526
      %v611 = vunpack.c.h.b16 %v526
      %v612 = vunpack.c.l.b16 %v527
      %v613 = vunpack.c.l.b16 %v528
      %v614 = vunpack.c.h.b16 %v528
      %v615 = vunpack.c.l.b16 %v529
      %v616 = vunpack.c.l.b16 %v530
      %v617 = vunpack.c.h.b16 %v530
      %v618 = vunpack.c.l.b16 %v531
      %v619 = vunpack.c.l.b16 %v532
      %v620 = vunpack.c.h.b16 %v532
      %v621 = vunpack.c.l.b16 %v533
      %v622 = vpack.c.b16 %v577, %v574
      %v623 = vpack.c.b16 %v578, %v575
      %v624 = vpack.c.b16 %v579, %v576
      %v625 = vpack.c.b16 %v583, %v580
      %v626 = vpack.c.b16 %v584, %v581
      %v627 = vpack.c.b16 %v585, %v582
      %v628 = vpack.c.b16 %v589, %v586
      %v629 = vpack.c.b16 %v590, %v587
      %v630 = vpack.c.b16 %v591, %v588
      %v631 = vpack.c.b16 %v595, %v592
      %v632 = vpack.c.b16 %v596, %v593
      %v633 = vpack.c.b16 %v597, %v594
      %v634 = vpack.c.b16 %v601, %v598
      %v635 = vpack.c.b16 %v602, %v599
      %v636 = vpack.c.b16 %v603, %v600
      %v637 = vpack.c.b16 %v607, %v604
      %v638 = vpack.c.b16 %v608, %v605
      %v639 = vpack.c.b16 %v609, %v606
      %v640 = vpack.c.b16 %v613, %v610
      %v641 = vpack.c.b16 %v614, %v611
      %v642 = vpack.c.b16 %v615, %v612
      %v643 = vpack.c.b16 %v619, %v616
      %v644 = vpack.c.b16 %v620, %v617
      %v645 = vpack.c.b16 %v621, %v618
      %670 = vmatpush.bf16.msra.mxu0 %v643
      %671 = vmatpush.bf16.msra.mxu0 %v640
      %672 = vmatpush.bf16.msra.mxu0 %v637
      %673 = vmatpush.bf16.msra.mxu0 %v634
      %674 = vmatpush.bf16.msra.mxu0 %v631
      %675 = vmatpush.bf16.msra.mxu0 %v628
      %676 = vmatpush.bf16.msra.mxu0 %v625
      %677 = vmatpush.bf16.msra.mxu0 %v622
      %678 = vmatmul.bf16.gmra.mxu0 %v500
      %v679 = vpop.f32.mrf.mxu0
      %v680 = vadd.f32 %v536, %v679
      %v681 = vpop.f32.mrf.mxu0
      %v682 = vadd.f32 %v536, %v681
      %683 = vmatmul.bf16.gmra.mxu0 %v501
      %v684 = vpop.f32.mrf.mxu0
      %v685 = vadd.f32 %v536, %v684
      %v686 = vpop.f32.mrf.mxu0
      %v687 = vadd.f32 %v536, %v686
      %688 = vdwg.mxu0
      %689 = vmatpush.bf16.msra.mxu0 %v644
      %690 = vmatpush.bf16.msra.mxu0 %v641
      %691 = vmatpush.bf16.msra.mxu0 %v638
      %692 = vmatpush.bf16.msra.mxu0 %v635
      %693 = vmatpush.bf16.msra.mxu0 %v632
      %694 = vmatpush.bf16.msra.mxu0 %v629
      %695 = vmatpush.bf16.msra.mxu0 %v626
      %696 = vmatpush.bf16.msra.mxu0 %v623
      %697 = vmatmul.bf16.gmra.mxu0 %v500
      %v698 = vpop.f32.mrf.mxu0
      %v699 = vadd.f32 %v537, %v698
      %v700 = vpop.f32.mrf.mxu0
      %v701 = vadd.f32 %v537, %v700
      %702 = vmatmul.bf16.gmra.mxu0 %v501
      %v703 = vpop.f32.mrf.mxu0
      %v704 = vadd.f32 %v537, %v703
      %v705 = vpop.f32.mrf.mxu0
      %v706 = vadd.f32 %v537, %v705
      %707 = vdwg.mxu0
      %708 = vmatpush.bf16.msra.mxu0 %v645
      %709 = vmatpush.bf16.msra.mxu0 %v642
      %710 = vmatpush.bf16.msra.mxu0 %v639
      %711 = vmatpush.bf16.msra.mxu0 %v636
      %712 = vmatpush.bf16.msra.mxu0 %v633
      %713 = vmatpush.bf16.msra.mxu0 %v630
      %714 = vmatpush.bf16.msra.mxu0 %v627
      %715 = vmatpush.bf16.msra.mxu0 %v624
      %716 = vmatmul.bf16.gmra.mxu0 %v500
      %v717 = vpop.f32.mrf.mxu0
      %v718 = vadd.f32 %v538, %v717
      %v719 = vpop.f32.mrf.mxu0
      %v720 = vadd.f32 %v538, %v719
      %721 = vmatmul.bf16.gmra.mxu0 %v501
      %v722 = vpop.f32.mrf.mxu0
      %v723 = vadd.f32 %v538, %v722
      %v724 = vpop.f32.mrf.mxu0
      %v725 = vadd.f32 %v538, %v724
      %726 = vdwg.mxu0
      %v727 = vld [vmem:[%s486] sm:$0x1]
      %v728 = vld [vmem:[%s486 + $0x1] sm:$0x1]
      %v729 = vpack.c.bf16 %v680, %v680
      %v730 = vpack.c.bf16 %v682, %v682
      %v731 = vpack.c.bf16 %v685, %v685
      %v732 = vpack.c.bf16 %v687, %v687
      %v733 = vpack.c.bf16 %v699, %v699
      %v734 = vpack.c.bf16 %v701, %v701
      %v735 = vpack.c.bf16 %v704, %v704
      %v736 = vpack.c.bf16 %v706, %v706
      %v737 = vpack.c.bf16 %v718, %v718
      %v738 = vpack.c.bf16 %v720, %v720
      %v739 = vpack.c.bf16 %v723, %v723
      %v740 = vpack.c.bf16 %v725, %v725
      %v743 = vunpack.c.l.b16 %v729
      %v744 = vunpack.c.l.b16 %v730
      %v745 = vpack.c.b16 %v744, %v743
      %v748 = vunpack.c.l.b16 %v733
      %v749 = vunpack.c.l.b16 %v734
      %v750 = vpack.c.b16 %v749, %v748
      %vm751 = vcmask 261120
      %v753 = vsel %vm751, %v745, 0
      %v756 = vsel %vm751, %v750, 0
      %758 = vmatpush.bf16.xpose.msra.mxu0 0
      %759 = vmatpush.bf16.xpose.msra.mxu0 0
      %760 = vmatpush.bf16.xpose.msra.mxu0 0
      %761 = vmatpush.bf16.xpose.msra.mxu0 0
      %762 = vmatpush.bf16.xpose.msra.mxu0 0
      %763 = vmatpush.bf16.xpose.msra.mxu0 0
      %764 = vmatpush.bf16.xpose.msra.mxu0 0
      %765 = vmatpush.bf16.xpose.msra.mxu0 %v756
      %766 = vmatmul.bf16.gmra.mxu0 %v753
      %v767 = vpop.f32.mrf.mxu0
      %v768 = vadd.f32 0.0, %v767
      %v769 = vpop.f32.mrf.mxu0
      %v770 = vadd.f32 0.0, %v769
      %771 = vdwg.mxu0
      %v774 = vunpack.c.l.b16 %v731
      %v775 = vunpack.c.l.b16 %v732
      %v776 = vpack.c.b16 %v775, %v774
      %v779 = vunpack.c.l.b16 %v735
      %v780 = vunpack.c.l.b16 %v736
      %v781 = vpack.c.b16 %v780, %v779
      %v783 = vsel %vm751, %v776, 0
      %v786 = vsel %vm751, %v781, 0
      %788 = vmatpush.bf16.xpose.msra.mxu0 0
      %789 = vmatpush.bf16.xpose.msra.mxu0 0
      %790 = vmatpush.bf16.xpose.msra.mxu0 0
      %791 = vmatpush.bf16.xpose.msra.mxu0 0
      %792 = vmatpush.bf16.xpose.msra.mxu0 0
      %793 = vmatpush.bf16.xpose.msra.mxu0 0
      %794 = vmatpush.bf16.xpose.msra.mxu0 0
      %795 = vmatpush.bf16.xpose.msra.mxu0 %v786
      %796 = vmatmul.bf16.gmra.mxu0 %v783
      %v797 = vpop.f32.mrf.mxu0
      %v798 = vadd.f32 0.0, %v797
      %v799 = vpop.f32.mrf.mxu0
      %v800 = vadd.f32 0.0, %v799
      %801 = vdwg.mxu0
      %v802 = vmul.f32 %v768, 0.17677669
      %v803 = vmul.f32 %v770, 0.17677669
      %v804 = vmul.f32 %v798, 0.17677669
      %v805 = vmul.f32 %v800, 0.17677669
      %v808 = vperm.slane %v727, 0
      %v809 = vperm.slane %v728, 0
      %v812 = vadd.f32 %v802, %v808
      %v813 = vadd.f32 %v803, %v808
      %v814 = vadd.f32 %v804, %v809
      %v815 = vadd.f32 %v805, %v809
      %vm816 = vcmask 130048
      %v817 = vsel %vm816, %v812, -inf
      %818 = vmax.xlane.f32.xlu0 %v817
      %v819 = vpop.xlane.xlu0 %818
      %v820 = vsel %vm816, %v813, -inf
      %821 = vmax.xlane.f32.xlu0 %v820
      %v822 = vpop.xlane.xlu0 %821
      %v823 = vsel %vm816, %v814, -inf
      %824 = vmax.xlane.f32.xlu0 %v823
      %v825 = vpop.xlane.xlu0 %824
      %v826 = vsel %vm816, %v815, -inf
      %827 = vmax.xlane.f32.xlu0 %v826
      %v828 = vpop.xlane.xlu0 %827
      %v829 = vsub.f32 %v812, %v819
      %v830 = vsub.f32 %v813, %v822
      %v831 = vsub.f32 %v814, %v825
      %v832 = vsub.f32 %v815, %v828
      %v833 = vmul.f32 %v829, 1.442695
      %v834 = vpow.pop %v833
      %v835 = vmul.f32 %v830, 1.442695
      %v836 = vpow.pop %v835
      %v837 = vmul.f32 %v831, 1.442695
      %v838 = vpow.pop %v837
      %v839 = vmul.f32 %v832, 1.442695
      %v840 = vpow.pop %v839
      %v841 = vsel %vm816, %v834, 0.0
      %842 = vadd.xlane.f32.xlu0 %v841
      %v843 = vpop.xlane.xlu0 %842
      %v844 = vsel %vm816, %v836, 0.0
      %845 = vadd.xlane.f32.xlu0 %v844
      %v846 = vpop.xlane.xlu0 %845
      %v847 = vsel %vm816, %v838, 0.0
      %848 = vadd.xlane.f32.xlu0 %v847
      %v849 = vpop.xlane.xlu0 %848
      %v850 = vsel %vm816, %v840, 0.0
      %851 = vadd.xlane.f32.xlu0 %v850
      %v852 = vpop.xlane.xlu0 %851
      %v853 = vrcp.pop %v843
      %v854 = vrcp.pop %v846
      %v855 = vrcp.pop %v849
      %v856 = vrcp.pop %v852
      %v857 = vmul.f32 %v834, %v853
      %v858 = vmul.f32 %v836, %v854
      %v859 = vmul.f32 %v838, %v855
      %v860 = vmul.f32 %v840, %v856
      %v861 = vpack.c.bf16 %v857, %v857
      %v862 = vpack.c.bf16 %v858, %v858
      %v863 = vpack.c.bf16 %v859, %v859
      %v864 = vpack.c.bf16 %v860, %v860
      %v867 = vunpack.c.l.b16 %v861
      %v868 = vunpack.c.l.b16 %v862
      %v869 = vpack.c.b16 %v868, %v867
      %v872 = vunpack.c.l.b16 %v737
      %v873 = vunpack.c.l.b16 %v738
      %v874 = vpack.c.b16 %v873, %v872
      %v877 = vsel %vm816, %v869, 0
      %879 = vmatpush.bf16.msra.mxu0 0
      %880 = vmatpush.bf16.msra.mxu0 0
      %881 = vmatpush.bf16.msra.mxu0 0
      %882 = vmatpush.bf16.msra.mxu0 0
      %883 = vmatpush.bf16.msra.mxu0 0
      %884 = vmatpush.bf16.msra.mxu0 0
      %885 = vmatpush.bf16.msra.mxu0 0
      %886 = vmatpush.bf16.msra.mxu0 %v874
      %887 = vmatmul.bf16.gmra.mxu0 %v877
      %v888 = vpop.f32.mrf.mxu0
      %v889 = vadd.f32 0.0, %v888
      %v890 = vpop.f32.mrf.mxu0
      %v891 = vadd.f32 0.0, %v890
      %892 = vdwg.mxu0
      %v895 = vunpack.c.l.b16 %v863
      %v896 = vunpack.c.l.b16 %v864
      %v897 = vpack.c.b16 %v896, %v895
      %v900 = vunpack.c.l.b16 %v739
      %v901 = vunpack.c.l.b16 %v740
      %v902 = vpack.c.b16 %v901, %v900
      %v905 = vsel %vm816, %v897, 0
      %907 = vmatpush.bf16.msra.mxu0 0
      %908 = vmatpush.bf16.msra.mxu0 0
      %909 = vmatpush.bf16.msra.mxu0 0
      %910 = vmatpush.bf16.msra.mxu0 0
      %911 = vmatpush.bf16.msra.mxu0 0
      %912 = vmatpush.bf16.msra.mxu0 0
      %913 = vmatpush.bf16.msra.mxu0 0
      %914 = vmatpush.bf16.msra.mxu0 %v902
      %915 = vmatmul.bf16.gmra.mxu0 %v905
      %v916 = vpop.f32.mrf.mxu0
      %v917 = vadd.f32 0.0, %v916
      %v918 = vpop.f32.mrf.mxu0
      %v919 = vadd.f32 0.0, %v918
      %920 = vdwg.mxu0
      %v921 = vpack.c.bf16 %v891, %v889
      %v922 = vpack.c.bf16 %v919, %v917
      %v923 = vld [vmem:[%s4] sm:$0xf]
      %v924 = vld [vmem:[%s4 + $0x4] sm:$0xf]
      %v925 = vld [vmem:[%s4 + $0x8] sm:$0xf]
      %v926 = vld [vmem:[%s4 + $0xc] sm:$0xf]
      %927 = vrot.lane.b32.xlu0 %v745, 96
      %v928 = vpop.permute.xlu0 %927
      %929 = vrot.lane.b32.xlu0 %v750, 96
      %v930 = vpop.permute.xlu0 %929
      %v932 = vsel %vm751, %v928, 0
      %v935 = vsel %vm751, %v930, 0
      %937 = vmatpush.bf16.xpose.msra.mxu0 0
      %938 = vmatpush.bf16.xpose.msra.mxu0 0
      %939 = vmatpush.bf16.xpose.msra.mxu0 0
      %940 = vmatpush.bf16.xpose.msra.mxu0 0
      %941 = vmatpush.bf16.xpose.msra.mxu0 0
      %942 = vmatpush.bf16.xpose.msra.mxu0 0
      %943 = vmatpush.bf16.xpose.msra.mxu0 0
      %944 = vmatpush.bf16.xpose.msra.mxu0 %v935
      %945 = vmatmul.bf16.gmra.mxu0 %v932
      %v946 = vpop.f32.mrf.mxu0
      %v947 = vadd.f32 0.0, %v946
      %v948 = vpop.f32.mrf.mxu0
      %v949 = vadd.f32 0.0, %v948
      %950 = vdwg.mxu0
      %951 = vrot.lane.b32.xlu0 %v776, 96
      %v952 = vpop.permute.xlu0 %951
      %953 = vrot.lane.b32.xlu0 %v781, 96
      %v954 = vpop.permute.xlu0 %953
      %v956 = vsel %vm751, %v952, 0
      %v959 = vsel %vm751, %v954, 0
      %961 = vmatpush.bf16.xpose.msra.mxu0 0
      %962 = vmatpush.bf16.xpose.msra.mxu0 0
      %963 = vmatpush.bf16.xpose.msra.mxu0 0
      %964 = vmatpush.bf16.xpose.msra.mxu0 0
      %965 = vmatpush.bf16.xpose.msra.mxu0 0
      %966 = vmatpush.bf16.xpose.msra.mxu0 0
      %967 = vmatpush.bf16.xpose.msra.mxu0 0
      %968 = vmatpush.bf16.xpose.msra.mxu0 %v959
      %969 = vmatmul.bf16.gmra.mxu0 %v956
      %v970 = vpop.f32.mrf.mxu0
      %v971 = vadd.f32 0.0, %v970
      %v972 = vpop.f32.mrf.mxu0
      %v973 = vadd.f32 0.0, %v972
      %974 = vdwg.mxu0
      %v975 = vmul.f32 %v947, 0.17677669
      %v976 = vmul.f32 %v949, 0.17677669
      %v977 = vmul.f32 %v971, 0.17677669
      %v978 = vmul.f32 %v973, 0.17677669
      %v979 = vadd.f32 %v975, %v808
      %v980 = vadd.f32 %v976, %v808
      %v981 = vadd.f32 %v977, %v809
      %v982 = vadd.f32 %v978, %v809
      %v983 = vsel %vm816, %v979, -inf
      %984 = vmax.xlane.f32.xlu0 %v983
      %v985 = vpop.xlane.xlu0 %984
      %v986 = vsel %vm816, %v980, -inf
      %987 = vmax.xlane.f32.xlu0 %v986
      %v988 = vpop.xlane.xlu0 %987
      %v989 = vsel %vm816, %v981, -inf
      %990 = vmax.xlane.f32.xlu0 %v989
      %v991 = vpop.xlane.xlu0 %990
      %v992 = vsel %vm816, %v982, -inf
      %993 = vmax.xlane.f32.xlu0 %v992
      %v994 = vpop.xlane.xlu0 %993
      %v995 = vsub.f32 %v979, %v985
      %v996 = vsub.f32 %v980, %v988
      %v997 = vsub.f32 %v981, %v991
      %v998 = vsub.f32 %v982, %v994
      %v999 = vmul.f32 %v995, 1.442695
      %v1000 = vpow.pop %v999
      %v1001 = vmul.f32 %v996, 1.442695
      %v1002 = vpow.pop %v1001
      %v1003 = vmul.f32 %v997, 1.442695
      %v1004 = vpow.pop %v1003
      %v1005 = vmul.f32 %v998, 1.442695
      %v1006 = vpow.pop %v1005
      %v1007 = vsel %vm816, %v1000, 0.0
      %1008 = vadd.xlane.f32.xlu0 %v1007
      %v1009 = vpop.xlane.xlu0 %1008
      %v1010 = vsel %vm816, %v1002, 0.0
      %1011 = vadd.xlane.f32.xlu0 %v1010
      %v1012 = vpop.xlane.xlu0 %1011
      %v1013 = vsel %vm816, %v1004, 0.0
      %1014 = vadd.xlane.f32.xlu0 %v1013
      %v1015 = vpop.xlane.xlu0 %1014
      %v1016 = vsel %vm816, %v1006, 0.0
      %1017 = vadd.xlane.f32.xlu0 %v1016
      %v1018 = vpop.xlane.xlu0 %1017
      %v1019 = vrcp.pop %v1009
      %v1020 = vrcp.pop %v1012
      %v1021 = vrcp.pop %v1015
      %v1022 = vrcp.pop %v1018
      %v1023 = vmul.f32 %v1000, %v1019
      %v1024 = vmul.f32 %v1002, %v1020
      %v1025 = vmul.f32 %v1004, %v1021
      %v1026 = vmul.f32 %v1006, %v1022
      %v1027 = vpack.c.bf16 %v1023, %v1023
      %v1028 = vpack.c.bf16 %v1024, %v1024
      %v1029 = vpack.c.bf16 %v1025, %v1025
      %v1030 = vpack.c.bf16 %v1026, %v1026
      %v1033 = vunpack.c.l.b16 %v1027
      %v1034 = vunpack.c.l.b16 %v1028
      %v1035 = vpack.c.b16 %v1034, %v1033
      %1036 = vrot.lane.b32.xlu0 %v874, 96
      %v1037 = vpop.permute.xlu0 %1036
      %v1040 = vsel %vm816, %v1035, 0
      %1042 = vmatpush.bf16.msra.mxu0 0
      %1043 = vmatpush.bf16.msra.mxu0 0
      %1044 = vmatpush.bf16.msra.mxu0 0
      %1045 = vmatpush.bf16.msra.mxu0 0
      %1046 = vmatpush.bf16.msra.mxu0 0
      %1047 = vmatpush.bf16.msra.mxu0 0
      %1048 = vmatpush.bf16.msra.mxu0 0
      %1049 = vmatpush.bf16.msra.mxu0 %v1037
      %1050 = vmatmul.bf16.gmra.mxu0 %v1040
      %v1051 = vpop.f32.mrf.mxu0
      %v1052 = vadd.f32 0.0, %v1051
      %v1053 = vpop.f32.mrf.mxu0
      %v1054 = vadd.f32 0.0, %v1053
      %1055 = vdwg.mxu0
      %v1058 = vunpack.c.l.b16 %v1029
      %v1059 = vunpack.c.l.b16 %v1030
      %v1060 = vpack.c.b16 %v1059, %v1058
      %1061 = vrot.lane.b32.xlu0 %v902, 96
      %v1062 = vpop.permute.xlu0 %1061
      %v1065 = vsel %vm816, %v1060, 0
      %1067 = vmatpush.bf16.msra.mxu0 0
      %1068 = vmatpush.bf16.msra.mxu0 0
      %1069 = vmatpush.bf16.msra.mxu0 0
      %1070 = vmatpush.bf16.msra.mxu0 0
      %1071 = vmatpush.bf16.msra.mxu0 0
      %1072 = vmatpush.bf16.msra.mxu0 0
      %1073 = vmatpush.bf16.msra.mxu0 0
      %1074 = vmatpush.bf16.msra.mxu0 %v1062
      %1075 = vmatmul.bf16.gmra.mxu0 %v1065
      %v1076 = vpop.f32.mrf.mxu0
      %v1077 = vadd.f32 0.0, %v1076
      %v1078 = vpop.f32.mrf.mxu0
      %v1079 = vadd.f32 0.0, %v1078
      %1080 = vdwg.mxu0
      %v1081 = vpack.c.bf16 %v1054, %v1052
      %v1082 = vpack.c.bf16 %v1079, %v1077
      %v1083 = vld [vmem:[%s4 + $0x10] sm:$0xf]
      %v1084 = vld [vmem:[%s4 + $0x14] sm:$0xf]
      %v1085 = vld [vmem:[%s4 + $0x18] sm:$0xf]
      %v1086 = vld [vmem:[%s4 + $0x1c] sm:$0xf]
      %v1091 = vunpack.c.l.b16 %v1083
      %v1092 = vunpack.c.l.b16 %v1084
      %v1093 = vunpack.c.l.b16 %v1085
      %v1094 = vunpack.c.l.b16 %v1086
      %v1095 = vpack.c.b16 %v1092, %v1091
      %v1096 = vpack.c.b16 %v1094, %v1093
      %v1100 = vsel %vm751, %v1081, 0
      %v1103 = vsel %vm751, %v1082, 0
      %1105 = vmatpush.bf16.msra.mxu0 0
      %1106 = vmatpush.bf16.msra.mxu0 0
      %1107 = vmatpush.bf16.msra.mxu0 0
      %1108 = vmatpush.bf16.msra.mxu0 0
      %1109 = vmatpush.bf16.msra.mxu0 0
      %1110 = vmatpush.bf16.msra.mxu0 0
      %1111 = vmatpush.bf16.msra.mxu0 %v1096
      %1112 = vmatpush.bf16.msra.mxu0 %v1095
      %1113 = vmatmul.bf16.gmra.mxu0 %v1100
      %v1114 = vpop.f32.mrf.mxu0
      %v1115 = vadd.f32 0.0, %v1114
      %v1116 = vpop.f32.mrf.mxu0
      %v1117 = vadd.f32 0.0, %v1116
      %1118 = vmatmul.bf16.gmra.mxu0 %v1103
      %v1119 = vpop.f32.mrf.mxu0
      %v1120 = vadd.f32 0.0, %v1119
      %v1121 = vpop.f32.mrf.mxu0
      %v1122 = vadd.f32 0.0, %v1121
      %1123 = vdwg.mxu0
      %v1128 = vunpack.c.l.b16 %v923
      %v1129 = vunpack.c.l.b16 %v924
      %v1130 = vunpack.c.l.b16 %v925
      %v1131 = vunpack.c.l.b16 %v926
      %v1132 = vpack.c.b16 %v1129, %v1128
      %v1133 = vpack.c.b16 %v1131, %v1130
      %v1137 = vsel %vm751, %v921, 0
      %v1140 = vsel %vm751, %v922, 0
      %1142 = vmatpush.bf16.msra.mxu0 0
      %1143 = vmatpush.bf16.msra.mxu0 0
      %1144 = vmatpush.bf16.msra.mxu0 0
      %1145 = vmatpush.bf16.msra.mxu0 0
      %1146 = vmatpush.bf16.msra.mxu0 0
      %1147 = vmatpush.bf16.msra.mxu0 0
      %1148 = vmatpush.bf16.msra.mxu0 %v1133
      %1149 = vmatpush.bf16.msra.mxu0 %v1132
      %1150 = vmatmul.bf16.gmra.mxu0 %v1137
      %v1151 = vpop.f32.mrf.mxu0
      %v1152 = vadd.f32 %v1115, %v1151
      %v1153 = vpop.f32.mrf.mxu0
      %v1154 = vadd.f32 %v1117, %v1153
      %1155 = vmatmul.bf16.gmra.mxu0 %v1140
      %v1156 = vpop.f32.mrf.mxu0
      %v1157 = vadd.f32 %v1120, %v1156
      %v1158 = vpop.f32.mrf.mxu0
      %v1159 = vadd.f32 %v1122, %v1158
      %1160 = vdwg.mxu0
      %1161 = vrot.lane.b32.xlu0 %v745, 64
      %v1162 = vpop.permute.xlu0 %1161
      %1163 = vrot.lane.b32.xlu0 %v750, 64
      %v1164 = vpop.permute.xlu0 %1163
      %v1166 = vsel %vm751, %v1162, 0
      %v1169 = vsel %vm751, %v1164, 0
      %1171 = vmatpush.bf16.xpose.msra.mxu0 0
      %1172 = vmatpush.bf16.xpose.msra.mxu0 0
      %1173 = vmatpush.bf16.xpose.msra.mxu0 0
      %1174 = vmatpush.bf16.xpose.msra.mxu0 0
      %1175 = vmatpush.bf16.xpose.msra.mxu0 0
      %1176 = vmatpush.bf16.xpose.msra.mxu0 0
      %1177 = vmatpush.bf16.xpose.msra.mxu0 0
      %1178 = vmatpush.bf16.xpose.msra.mxu0 %v1169
      %1179 = vmatmul.bf16.gmra.mxu0 %v1166
      %v1180 = vpop.f32.mrf.mxu0
      %v1181 = vadd.f32 0.0, %v1180
      %v1182 = vpop.f32.mrf.mxu0
      %v1183 = vadd.f32 0.0, %v1182
      %1184 = vdwg.mxu0
      %1185 = vrot.lane.b32.xlu0 %v776, 64
      %v1186 = vpop.permute.xlu0 %1185
      %1187 = vrot.lane.b32.xlu0 %v781, 64
      %v1188 = vpop.permute.xlu0 %1187
      %v1190 = vsel %vm751, %v1186, 0
      %v1193 = vsel %vm751, %v1188, 0
      %1195 = vmatpush.bf16.xpose.msra.mxu0 0
      %1196 = vmatpush.bf16.xpose.msra.mxu0 0
      %1197 = vmatpush.bf16.xpose.msra.mxu0 0
      %1198 = vmatpush.bf16.xpose.msra.mxu0 0
      %1199 = vmatpush.bf16.xpose.msra.mxu0 0
      %1200 = vmatpush.bf16.xpose.msra.mxu0 0
      %1201 = vmatpush.bf16.xpose.msra.mxu0 0
      %1202 = vmatpush.bf16.xpose.msra.mxu0 %v1193
      %1203 = vmatmul.bf16.gmra.mxu0 %v1190
      %v1204 = vpop.f32.mrf.mxu0
      %v1205 = vadd.f32 0.0, %v1204
      %v1206 = vpop.f32.mrf.mxu0
      %v1207 = vadd.f32 0.0, %v1206
      %1208 = vdwg.mxu0
      %v1209 = vmul.f32 %v1181, 0.17677669
      %v1210 = vmul.f32 %v1183, 0.17677669
      %v1211 = vmul.f32 %v1205, 0.17677669
      %v1212 = vmul.f32 %v1207, 0.17677669
      %v1213 = vadd.f32 %v1209, %v808
      %v1214 = vadd.f32 %v1210, %v808
      %v1215 = vadd.f32 %v1211, %v809
      %v1216 = vadd.f32 %v1212, %v809
      %v1217 = vsel %vm816, %v1213, -inf
      %1218 = vmax.xlane.f32.xlu0 %v1217
      %v1219 = vpop.xlane.xlu0 %1218
      %v1220 = vsel %vm816, %v1214, -inf
      %1221 = vmax.xlane.f32.xlu0 %v1220
      %v1222 = vpop.xlane.xlu0 %1221
      %v1223 = vsel %vm816, %v1215, -inf
      %1224 = vmax.xlane.f32.xlu0 %v1223
      %v1225 = vpop.xlane.xlu0 %1224
      %v1226 = vsel %vm816, %v1216, -inf
      %1227 = vmax.xlane.f32.xlu0 %v1226
      %v1228 = vpop.xlane.xlu0 %1227
      %v1229 = vsub.f32 %v1213, %v1219
      %v1230 = vsub.f32 %v1214, %v1222
      %v1231 = vsub.f32 %v1215, %v1225
      %v1232 = vsub.f32 %v1216, %v1228
      %v1233 = vmul.f32 %v1229, 1.442695
      %v1234 = vpow.pop %v1233
      %v1235 = vmul.f32 %v1230, 1.442695
      %v1236 = vpow.pop %v1235
      %v1237 = vmul.f32 %v1231, 1.442695
      %v1238 = vpow.pop %v1237
      %v1239 = vmul.f32 %v1232, 1.442695
      %v1240 = vpow.pop %v1239
      %v1241 = vsel %vm816, %v1234, 0.0
      %1242 = vadd.xlane.f32.xlu0 %v1241
      %v1243 = vpop.xlane.xlu0 %1242
      %v1244 = vsel %vm816, %v1236, 0.0
      %1245 = vadd.xlane.f32.xlu0 %v1244
      %v1246 = vpop.xlane.xlu0 %1245
      %v1247 = vsel %vm816, %v1238, 0.0
      %1248 = vadd.xlane.f32.xlu0 %v1247
      %v1249 = vpop.xlane.xlu0 %1248
      %v1250 = vsel %vm816, %v1240, 0.0
      %1251 = vadd.xlane.f32.xlu0 %v1250
      %v1252 = vpop.xlane.xlu0 %1251
      %v1253 = vrcp.pop %v1243
      %v1254 = vrcp.pop %v1246
      %v1255 = vrcp.pop %v1249
      %v1256 = vrcp.pop %v1252
      %v1257 = vmul.f32 %v1234, %v1253
      %v1258 = vmul.f32 %v1236, %v1254
      %v1259 = vmul.f32 %v1238, %v1255
      %v1260 = vmul.f32 %v1240, %v1256
      %v1261 = vpack.c.bf16 %v1257, %v1257
      %v1262 = vpack.c.bf16 %v1258, %v1258
      %v1263 = vpack.c.bf16 %v1259, %v1259
      %v1264 = vpack.c.bf16 %v1260, %v1260
      %v1267 = vunpack.c.l.b16 %v1261
      %v1268 = vunpack.c.l.b16 %v1262
      %v1269 = vpack.c.b16 %v1268, %v1267
      %1270 = vrot.lane.b32.xlu0 %v874, 64
      %v1271 = vpop.permute.xlu0 %1270
      %v1274 = vsel %vm816, %v1269, 0
      %1276 = vmatpush.bf16.msra.mxu0 0
      %1277 = vmatpush.bf16.msra.mxu0 0
      %1278 = vmatpush.bf16.msra.mxu0 0
      %1279 = vmatpush.bf16.msra.mxu0 0
      %1280 = vmatpush.bf16.msra.mxu0 0
      %1281 = vmatpush.bf16.msra.mxu0 0
      %1282 = vmatpush.bf16.msra.mxu0 0
      %1283 = vmatpush.bf16.msra.mxu0 %v1271
      %1284 = vmatmul.bf16.gmra.mxu0 %v1274
      %v1285 = vpop.f32.mrf.mxu0
      %v1286 = vadd.f32 0.0, %v1285
      %v1287 = vpop.f32.mrf.mxu0
      %v1288 = vadd.f32 0.0, %v1287
      %1289 = vdwg.mxu0
      %v1292 = vunpack.c.l.b16 %v1263
      %v1293 = vunpack.c.l.b16 %v1264
      %v1294 = vpack.c.b16 %v1293, %v1292
      %1295 = vrot.lane.b32.xlu0 %v902, 64
      %v1296 = vpop.permute.xlu0 %1295
      %v1299 = vsel %vm816, %v1294, 0
      %1301 = vmatpush.bf16.msra.mxu0 0
      %1302 = vmatpush.bf16.msra.mxu0 0
      %1303 = vmatpush.bf16.msra.mxu0 0
      %1304 = vmatpush.bf16.msra.mxu0 0
      %1305 = vmatpush.bf16.msra.mxu0 0
      %1306 = vmatpush.bf16.msra.mxu0 0
      %1307 = vmatpush.bf16.msra.mxu0 0
      %1308 = vmatpush.bf16.msra.mxu0 %v1296
      %1309 = vmatmul.bf16.gmra.mxu0 %v1299
      %v1310 = vpop.f32.mrf.mxu0
      %v1311 = vadd.f32 0.0, %v1310
      %v1312 = vpop.f32.mrf.mxu0
      %v1313 = vadd.f32 0.0, %v1312
      %1314 = vdwg.mxu0
      %v1315 = vpack.c.bf16 %v1288, %v1286
      %v1316 = vpack.c.bf16 %v1313, %v1311
      %v1317 = vld [vmem:[%s4 + $0x20] sm:$0xf]
      %v1318 = vld [vmem:[%s4 + $0x24] sm:$0xf]
      %v1319 = vld [vmem:[%s4 + $0x28] sm:$0xf]
      %v1320 = vld [vmem:[%s4 + $0x2c] sm:$0xf]
      %v1325 = vunpack.c.l.b16 %v1317
      %v1326 = vunpack.c.l.b16 %v1318
      %v1327 = vunpack.c.l.b16 %v1319
      %v1328 = vunpack.c.l.b16 %v1320
      %v1329 = vpack.c.b16 %v1326, %v1325
      %v1330 = vpack.c.b16 %v1328, %v1327
      %v1334 = vsel %vm751, %v1315, 0
      %v1337 = vsel %vm751, %v1316, 0
      %1339 = vmatpush.bf16.msra.mxu0 0
      %1340 = vmatpush.bf16.msra.mxu0 0
      %1341 = vmatpush.bf16.msra.mxu0 0
      %1342 = vmatpush.bf16.msra.mxu0 0
      %1343 = vmatpush.bf16.msra.mxu0 0
      %1344 = vmatpush.bf16.msra.mxu0 0
      %1345 = vmatpush.bf16.msra.mxu0 %v1330
      %1346 = vmatpush.bf16.msra.mxu0 %v1329
      %1347 = vmatmul.bf16.gmra.mxu0 %v1334
      %v1348 = vpop.f32.mrf.mxu0
      %v1349 = vadd.f32 0.0, %v1348
      %v1350 = vpop.f32.mrf.mxu0
      %v1351 = vadd.f32 0.0, %v1350
      %1352 = vmatmul.bf16.gmra.mxu0 %v1337
      %v1353 = vpop.f32.mrf.mxu0
      %v1354 = vadd.f32 0.0, %v1353
      %v1355 = vpop.f32.mrf.mxu0
      %v1356 = vadd.f32 0.0, %v1355
      %1357 = vdwg.mxu0
      %v1358 = vadd.f32 %v1152, %v1349
      %v1359 = vadd.f32 %v1154, %v1351
      %v1360 = vadd.f32 %v1157, %v1354
      %v1361 = vadd.f32 %v1159, %v1356
      %1362 = vrot.lane.b32.xlu0 %v745, 32
      %v1363 = vpop.permute.xlu0 %1362
      %1364 = vrot.lane.b32.xlu0 %v750, 32
      %v1365 = vpop.permute.xlu0 %1364
      %v1367 = vsel %vm751, %v1363, 0
      %v1370 = vsel %vm751, %v1365, 0
      %1372 = vmatpush.bf16.xpose.msra.mxu0 0
      %1373 = vmatpush.bf16.xpose.msra.mxu0 0
      %1374 = vmatpush.bf16.xpose.msra.mxu0 0
      %1375 = vmatpush.bf16.xpose.msra.mxu0 0
      %1376 = vmatpush.bf16.xpose.msra.mxu0 0
      %1377 = vmatpush.bf16.xpose.msra.mxu0 0
      %1378 = vmatpush.bf16.xpose.msra.mxu0 0
      %1379 = vmatpush.bf16.xpose.msra.mxu0 %v1370
      %1380 = vmatmul.bf16.gmra.mxu0 %v1367
      %v1381 = vpop.f32.mrf.mxu0
      %v1382 = vadd.f32 0.0, %v1381
      %v1383 = vpop.f32.mrf.mxu0
      %v1384 = vadd.f32 0.0, %v1383
      %1385 = vdwg.mxu0
      %1386 = vrot.lane.b32.xlu0 %v776, 32
      %v1387 = vpop.permute.xlu0 %1386
      %1388 = vrot.lane.b32.xlu0 %v781, 32
      %v1389 = vpop.permute.xlu0 %1388
      %v1391 = vsel %vm751, %v1387, 0
      %v1394 = vsel %vm751, %v1389, 0
      %1396 = vmatpush.bf16.xpose.msra.mxu0 0
      %1397 = vmatpush.bf16.xpose.msra.mxu0 0
      %1398 = vmatpush.bf16.xpose.msra.mxu0 0
      %1399 = vmatpush.bf16.xpose.msra.mxu0 0
      %1400 = vmatpush.bf16.xpose.msra.mxu0 0
      %1401 = vmatpush.bf16.xpose.msra.mxu0 0
      %1402 = vmatpush.bf16.xpose.msra.mxu0 0
      %1403 = vmatpush.bf16.xpose.msra.mxu0 %v1394
      %1404 = vmatmul.bf16.gmra.mxu0 %v1391
      %v1405 = vpop.f32.mrf.mxu0
      %v1406 = vadd.f32 0.0, %v1405
      %v1407 = vpop.f32.mrf.mxu0
      %v1408 = vadd.f32 0.0, %v1407
      %1409 = vdwg.mxu0
      %v1410 = vmul.f32 %v1382, 0.17677669
      %v1411 = vmul.f32 %v1384, 0.17677669
      %v1412 = vmul.f32 %v1406, 0.17677669
      %v1413 = vmul.f32 %v1408, 0.17677669
      %v1414 = vadd.f32 %v1410, %v808
      %v1415 = vadd.f32 %v1411, %v808
      %v1416 = vadd.f32 %v1412, %v809
      %v1417 = vadd.f32 %v1413, %v809
      %v1418 = vsel %vm816, %v1414, -inf
      %1419 = vmax.xlane.f32.xlu0 %v1418
      %v1420 = vpop.xlane.xlu0 %1419
      %v1421 = vsel %vm816, %v1415, -inf
      %1422 = vmax.xlane.f32.xlu0 %v1421
      %v1423 = vpop.xlane.xlu0 %1422
      %v1424 = vsel %vm816, %v1416, -inf
      %1425 = vmax.xlane.f32.xlu0 %v1424
      %v1426 = vpop.xlane.xlu0 %1425
      %v1427 = vsel %vm816, %v1417, -inf
      %1428 = vmax.xlane.f32.xlu0 %v1427
      %v1429 = vpop.xlane.xlu0 %1428
      %v1430 = vsub.f32 %v1414, %v1420
      %v1431 = vsub.f32 %v1415, %v1423
      %v1432 = vsub.f32 %v1416, %v1426
      %v1433 = vsub.f32 %v1417, %v1429
      %v1434 = vmul.f32 %v1430, 1.442695
      %v1435 = vpow.pop %v1434
      %v1436 = vmul.f32 %v1431, 1.442695
      %v1437 = vpow.pop %v1436
      %v1438 = vmul.f32 %v1432, 1.442695
      %v1439 = vpow.pop %v1438
      %v1440 = vmul.f32 %v1433, 1.442695
      %v1441 = vpow.pop %v1440
      %v1442 = vsel %vm816, %v1435, 0.0
      %1443 = vadd.xlane.f32.xlu0 %v1442
      %v1444 = vpop.xlane.xlu0 %1443
      %v1445 = vsel %vm816, %v1437, 0.0
      %1446 = vadd.xlane.f32.xlu0 %v1445
      %v1447 = vpop.xlane.xlu0 %1446
      %v1448 = vsel %vm816, %v1439, 0.0
      %1449 = vadd.xlane.f32.xlu0 %v1448
      %v1450 = vpop.xlane.xlu0 %1449
      %v1451 = vsel %vm816, %v1441, 0.0
      %1452 = vadd.xlane.f32.xlu0 %v1451
      %v1453 = vpop.xlane.xlu0 %1452
      %v1454 = vrcp.pop %v1444
      %v1455 = vrcp.pop %v1447
      %v1456 = vrcp.pop %v1450
      %v1457 = vrcp.pop %v1453
      %v1458 = vmul.f32 %v1435, %v1454
      %v1459 = vmul.f32 %v1437, %v1455
      %v1460 = vmul.f32 %v1439, %v1456
      %v1461 = vmul.f32 %v1441, %v1457
      %v1462 = vpack.c.bf16 %v1458, %v1458
      %v1463 = vpack.c.bf16 %v1459, %v1459
      %v1464 = vpack.c.bf16 %v1460, %v1460
      %v1465 = vpack.c.bf16 %v1461, %v1461
      %v1468 = vunpack.c.l.b16 %v1462
      %v1469 = vunpack.c.l.b16 %v1463
      %v1470 = vpack.c.b16 %v1469, %v1468
      %1471 = vrot.lane.b32.xlu0 %v874, 32
      %v1472 = vpop.permute.xlu0 %1471
      %v1475 = vsel %vm816, %v1470, 0
      %1477 = vmatpush.bf16.msra.mxu0 0
      %1478 = vmatpush.bf16.msra.mxu0 0
      %1479 = vmatpush.bf16.msra.mxu0 0
      %1480 = vmatpush.bf16.msra.mxu0 0
      %1481 = vmatpush.bf16.msra.mxu0 0
      %1482 = vmatpush.bf16.msra.mxu0 0
      %1483 = vmatpush.bf16.msra.mxu0 0
      %1484 = vmatpush.bf16.msra.mxu0 %v1472
      %1485 = vmatmul.bf16.gmra.mxu0 %v1475
      %v1486 = vpop.f32.mrf.mxu0
      %v1487 = vadd.f32 0.0, %v1486
      %v1488 = vpop.f32.mrf.mxu0
      %v1489 = vadd.f32 0.0, %v1488
      %1490 = vdwg.mxu0
      %v1493 = vunpack.c.l.b16 %v1464
      %v1494 = vunpack.c.l.b16 %v1465
      %v1495 = vpack.c.b16 %v1494, %v1493
      %1496 = vrot.lane.b32.xlu0 %v902, 32
      %v1497 = vpop.permute.xlu0 %1496
      %v1500 = vsel %vm816, %v1495, 0
      %1502 = vmatpush.bf16.msra.mxu0 0
      %1503 = vmatpush.bf16.msra.mxu0 0
      %1504 = vmatpush.bf16.msra.mxu0 0
      %1505 = vmatpush.bf16.msra.mxu0 0
      %1506 = vmatpush.bf16.msra.mxu0 0
      %1507 = vmatpush.bf16.msra.mxu0 0
      %1508 = vmatpush.bf16.msra.mxu0 0
      %1509 = vmatpush.bf16.msra.mxu0 %v1497
      %1510 = vmatmul.bf16.gmra.mxu0 %v1500
      %v1511 = vpop.f32.mrf.mxu0
      %v1512 = vadd.f32 0.0, %v1511
      %v1513 = vpop.f32.mrf.mxu0
      %v1514 = vadd.f32 0.0, %v1513
      %1515 = vdwg.mxu0
      %v1516 = vpack.c.bf16 %v1489, %v1487
      %v1517 = vpack.c.bf16 %v1514, %v1512
      %v1518 = vld [vmem:[%s4 + $0x30] sm:$0xf]
      %v1519 = vld [vmem:[%s4 + $0x34] sm:$0xf]
      %v1520 = vld [vmem:[%s4 + $0x38] sm:$0xf]
      %v1521 = vld [vmem:[%s4 + $0x3c] sm:$0xf]
      %v1526 = vunpack.c.l.b16 %v1518
      %v1527 = vunpack.c.l.b16 %v1519
      %v1528 = vunpack.c.l.b16 %v1520
      %v1529 = vunpack.c.l.b16 %v1521
      %v1530 = vpack.c.b16 %v1527, %v1526
      %v1531 = vpack.c.b16 %v1529, %v1528
      %v1535 = vsel %vm751, %v1516, 0
      %v1538 = vsel %vm751, %v1517, 0
      %1540 = vmatpush.bf16.msra.mxu0 0
      %1541 = vmatpush.bf16.msra.mxu0 0
      %1542 = vmatpush.bf16.msra.mxu0 0
      %1543 = vmatpush.bf16.msra.mxu0 0
      %1544 = vmatpush.bf16.msra.mxu0 0
      %1545 = vmatpush.bf16.msra.mxu0 0
      %1546 = vmatpush.bf16.msra.mxu0 %v1531
      %1547 = vmatpush.bf16.msra.mxu0 %v1530
      %1548 = vmatmul.bf16.gmra.mxu0 %v1535
      %v1549 = vpop.f32.mrf.mxu0
      %v1550 = vadd.f32 0.0, %v1549
      %v1551 = vpop.f32.mrf.mxu0
      %v1552 = vadd.f32 0.0, %v1551
      %1553 = vmatmul.bf16.gmra.mxu0 %v1538
      %v1554 = vpop.f32.mrf.mxu0
      %v1555 = vadd.f32 0.0, %v1554
      %v1556 = vpop.f32.mrf.mxu0
      %v1557 = vadd.f32 0.0, %v1556
      %1558 = vdwg.mxu0
      %v1559 = vadd.f32 %v1358, %v1550
      %v1560 = vadd.f32 %v1359, %v1552
      %v1561 = vadd.f32 %v1360, %v1555
      %v1562 = vadd.f32 %v1361, %v1557
      %v1563 = vld [vmem:[%s5] sm:$0x1]
      %v1565 = vperm.slane %v1563, 0
      %v1567 = vadd.f32 %v1559, %v1565
      %v1568 = vadd.f32 %v1560, %v1565
      %v1569 = vadd.f32 %v1561, %v1565
      %v1570 = vadd.f32 %v1562, %v1565
      %v1571 = vadd.f32 %v496, %v1567
      %v1572 = vadd.f32 %v497, %v1568
      %v1573 = vadd.f32 %v498, %v1569
      %v1574 = vadd.f32 %v499, %v1570
      %v1575 = vld [vmem:[%s6] sm:$0x1]
      %v1576 = vld [vmem:[%s7] sm:$0x1]
      %1577 = vadd.xlane.f32.xlu0 %v1571
      %v1578 = vpop.xlane.xlu0 %1577
      %1579 = vadd.xlane.f32.xlu0 %v1572
      %v1580 = vpop.xlane.xlu0 %1579
      %1581 = vadd.xlane.f32.xlu0 %v1573
      %v1582 = vpop.xlane.xlu0 %1581
      %1583 = vadd.xlane.f32.xlu0 %v1574
      %v1584 = vpop.xlane.xlu0 %1583
      %v1585 = vrcp.pop 128.0
      %v1586 = vmul.f32 128.0, %v1585
      %v1587 = vsub.f32 1.0, %v1586
      %v1588 = vmul.f32 %v1585, %v1587
      %v1589 = vadd.f32 %v1585, %v1588
      %vm1590 = vweird.f32 %v1585
      %v1591 = vsel %vm1590, %v1585, %v1589
      %v1592 = vmul.f32 %v1578, %v1591
      %v1593 = vmul.f32 %v1580, %v1591
      %v1594 = vmul.f32 %v1582, %v1591
      %v1595 = vmul.f32 %v1584, %v1591
      %v1596 = vsub.f32 %v1571, %v1592
      %v1597 = vsub.f32 %v1572, %v1593
      %v1598 = vsub.f32 %v1573, %v1594
      %v1599 = vsub.f32 %v1574, %v1595
      %v1600 = vmul.f32 %v1596, %v1596
      %v1601 = vmul.f32 %v1597, %v1597
      %v1602 = vmul.f32 %v1598, %v1598
      %v1603 = vmul.f32 %v1599, %v1599
      %1604 = vadd.xlane.f32.xlu0 %v1600
      %v1605 = vpop.xlane.xlu0 %1604
      %1606 = vadd.xlane.f32.xlu0 %v1601
      %v1607 = vpop.xlane.xlu0 %1606
      %1608 = vadd.xlane.f32.xlu0 %v1602
      %v1609 = vpop.xlane.xlu0 %1608
      %1610 = vadd.xlane.f32.xlu0 %v1603
      %v1611 = vpop.xlane.xlu0 %1610
      %v1612 = vmul.f32 %v1605, %v1591
      %v1613 = vmul.f32 %v1607, %v1591
      %v1614 = vmul.f32 %v1609, %v1591
      %v1615 = vmul.f32 %v1611, %v1591
      %v1616 = vadd.f32 %v1612, 1e-12
      %v1617 = vadd.f32 %v1613, 1e-12
      %v1618 = vadd.f32 %v1614, 1e-12
      %v1619 = vadd.f32 %v1615, 1e-12
      %v1620 = vrsqrt.pop %v1616
      %v1621 = vmul.f32 %v1620, %v1616
      %v1622 = vmul.f32 %v1621, %v1620
      %v1623 = vmul.f32 0.5, %v1622
      %v1624 = vsub.f32 1.5, %v1623
      %v1625 = vmul.f32 %v1620, %v1624
      %vm1626 = vweird.f32 %v1616
      %vm1627 = vweird.f32 %v1620
      %vm1628 = vmor %vm1626, %vm1627
      %v1629 = vsel %vm1628, %v1620, %v1625
      %v1630 = vrsqrt.pop %v1617
      %v1631 = vmul.f32 %v1630, %v1617
      %v1632 = vmul.f32 %v1631, %v1630
      %v1633 = vmul.f32 0.5, %v1632
      %v1634 = vsub.f32 1.5, %v1633
      %v1635 = vmul.f32 %v1630, %v1634
      %vm1636 = vweird.f32 %v1617
      %vm1637 = vweird.f32 %v1630
      %vm1638 = vmor %vm1636, %vm1637
      %v1639 = vsel %vm1638, %v1630, %v1635
      %v1640 = vrsqrt.pop %v1618
      %v1641 = vmul.f32 %v1640, %v1618
      %v1642 = vmul.f32 %v1641, %v1640
      %v1643 = vmul.f32 0.5, %v1642
      %v1644 = vsub.f32 1.5, %v1643
      %v1645 = vmul.f32 %v1640, %v1644
      %vm1646 = vweird.f32 %v1618
      %vm1647 = vweird.f32 %v1640
      %vm1648 = vmor %vm1646, %vm1647
      %v1649 = vsel %vm1648, %v1640, %v1645
      %v1650 = vrsqrt.pop %v1619
      %v1651 = vmul.f32 %v1650, %v1619
      %v1652 = vmul.f32 %v1651, %v1650
      %v1653 = vmul.f32 0.5, %v1652
      %v1654 = vsub.f32 1.5, %v1653
      %v1655 = vmul.f32 %v1650, %v1654
      %vm1656 = vweird.f32 %v1619
      %vm1657 = vweird.f32 %v1650
      %vm1658 = vmor %vm1656, %vm1657
      %v1659 = vsel %vm1658, %v1650, %v1655
      %v1660 = vmul.f32 %v1596, %v1629
      %v1661 = vmul.f32 %v1597, %v1639
      %v1662 = vmul.f32 %v1598, %v1649
      %v1663 = vmul.f32 %v1599, %v1659
      %v1665 = vperm.slane %v1575, 0
      %v1667 = vmul.f32 %v1660, %v1665
      %v1668 = vmul.f32 %v1661, %v1665
      %v1669 = vmul.f32 %v1662, %v1665
      %v1670 = vmul.f32 %v1663, %v1665
      %v1672 = vperm.slane %v1576, 0
      %v1674 = vadd.f32 %v1667, %v1672
      %v1675 = vadd.f32 %v1668, %v1672
      %v1676 = vadd.f32 %v1669, %v1672
      %v1677 = vadd.f32 %v1670, %v1672
      %v1678 = vpack.c.bf16 %v1675, %v1674
      %v1679 = vpack.c.bf16 %v1677, %v1676
      %v1680 = vld [vmem:[%s8] sm:$0xff]
      %v1681 = vld [vmem:[%s8 + $0x8] sm:$0xff]
      %v1682 = vld [vmem:[%s8 + $0x10] sm:$0xff]
      %v1683 = vld [vmem:[%s8 + $0x18] sm:$0xff]
      %v1684 = vld [vmem:[%s8 + $0x20] sm:$0xff]
      %v1685 = vld [vmem:[%s8 + $0x28] sm:$0xff]
      %v1686 = vld [vmem:[%s8 + $0x30] sm:$0xff]
      %v1687 = vld [vmem:[%s8 + $0x38] sm:$0xff]
      %v1688 = vld [vmem:[%s8 + $0x40] sm:$0xff]
      %v1689 = vld [vmem:[%s8 + $0x48] sm:$0xff]
      %v1690 = vld [vmem:[%s8 + $0x50] sm:$0xff]
      %v1691 = vld [vmem:[%s8 + $0x58] sm:$0xff]
      %v1692 = vld [vmem:[%s8 + $0x60] sm:$0xff]
      %v1693 = vld [vmem:[%s8 + $0x68] sm:$0xff]
      %v1694 = vld [vmem:[%s8 + $0x70] sm:$0xff]
      %v1695 = vld [vmem:[%s8 + $0x78] sm:$0xff]
      %v1696 = vld [vmem:[%s8 + $0x80] sm:$0xff]
      %v1697 = vld [vmem:[%s8 + $0x88] sm:$0xff]
      %v1698 = vld [vmem:[%s8 + $0x90] sm:$0xff]
      %v1699 = vld [vmem:[%s8 + $0x98] sm:$0xff]
      %v1700 = vld [vmem:[%s8 + $0xa0] sm:$0xff]
      %v1701 = vld [vmem:[%s8 + $0xa8] sm:$0xff]
      %v1702 = vld [vmem:[%s8 + $0xb0] sm:$0xff]
      %v1703 = vld [vmem:[%s8 + $0xb8] sm:$0xff]
      %v1704 = vld [vmem:[%s8 + $0xc0] sm:$0xff]
      %v1705 = vld [vmem:[%s8 + $0xc8] sm:$0xff]
      %v1706 = vld [vmem:[%s8 + $0xd0] sm:$0xff]
      %v1707 = vld [vmem:[%s8 + $0xd8] sm:$0xff]
      %v1708 = vld [vmem:[%s8 + $0xe0] sm:$0xff]
      %v1709 = vld [vmem:[%s8 + $0xe8] sm:$0xff]
      %v1710 = vld [vmem:[%s8 + $0xf0] sm:$0xff]
      %v1711 = vld [vmem:[%s8 + $0xf8] sm:$0xff]
      %v1712 = vld [vmem:[%s9] sm:$0xf]
      %v1714 = vperm.slane %v1712, 0
      %v1715 = vperm.slane %v1712, 1
      %v1716 = vperm.slane %v1712, 2
      %v1717 = vperm.slane %v1712, 3
      %v1754 = vunpack.c.l.b16 %v1680
      %v1755 = vunpack.c.h.b16 %v1680
      %v1756 = vunpack.c.l.b16 %v1681
      %v1757 = vunpack.c.h.b16 %v1681
      %v1758 = vunpack.c.l.b16 %v1682
      %v1759 = vunpack.c.h.b16 %v1682
      %v1760 = vunpack.c.l.b16 %v1683
      %v1761 = vunpack.c.h.b16 %v1683
      %v1762 = vunpack.c.l.b16 %v1684
      %v1763 = vunpack.c.h.b16 %v1684
      %v1764 = vunpack.c.l.b16 %v1685
      %v1765 = vunpack.c.h.b16 %v1685
      %v1766 = vunpack.c.l.b16 %v1686
      %v1767 = vunpack.c.h.b16 %v1686
      %v1768 = vunpack.c.l.b16 %v1687
      %v1769 = vunpack.c.h.b16 %v1687
      %v1770 = vunpack.c.l.b16 %v1688
      %v1771 = vunpack.c.h.b16 %v1688
      %v1772 = vunpack.c.l.b16 %v1689
      %v1773 = vunpack.c.h.b16 %v1689
      %v1774 = vunpack.c.l.b16 %v1690
      %v1775 = vunpack.c.h.b16 %v1690
      %v1776 = vunpack.c.l.b16 %v1691
      %v1777 = vunpack.c.h.b16 %v1691
      %v1778 = vunpack.c.l.b16 %v1692
      %v1779 = vunpack.c.h.b16 %v1692
      %v1780 = vunpack.c.l.b16 %v1693
      %v1781 = vunpack.c.h.b16 %v1693
      %v1782 = vunpack.c.l.b16 %v1694
      %v1783 = vunpack.c.h.b16 %v1694
      %v1784 = vunpack.c.l.b16 %v1695
      %v1785 = vunpack.c.h.b16 %v1695
      %v1786 = vunpack.c.l.b16 %v1696
      %v1787 = vunpack.c.h.b16 %v1696
      %v1788 = vunpack.c.l.b16 %v1697
      %v1789 = vunpack.c.h.b16 %v1697
      %v1790 = vunpack.c.l.b16 %v1698
      %v1791 = vunpack.c.h.b16 %v1698
      %v1792 = vunpack.c.l.b16 %v1699
      %v1793 = vunpack.c.h.b16 %v1699
      %v1794 = vunpack.c.l.b16 %v1700
      %v1795 = vunpack.c.h.b16 %v1700
      %v1796 = vunpack.c.l.b16 %v1701
      %v1797 = vunpack.c.h.b16 %v1701
      %v1798 = vunpack.c.l.b16 %v1702
      %v1799 = vunpack.c.h.b16 %v1702
      %v1800 = vunpack.c.l.b16 %v1703
      %v1801 = vunpack.c.h.b16 %v1703
      %v1802 = vunpack.c.l.b16 %v1704
      %v1803 = vunpack.c.h.b16 %v1704
      %v1804 = vunpack.c.l.b16 %v1705
      %v1805 = vunpack.c.h.b16 %v1705
      %v1806 = vunpack.c.l.b16 %v1706
      %v1807 = vunpack.c.h.b16 %v1706
      %v1808 = vunpack.c.l.b16 %v1707
      %v1809 = vunpack.c.h.b16 %v1707
      %v1810 = vunpack.c.l.b16 %v1708
      %v1811 = vunpack.c.h.b16 %v1708
      %v1812 = vunpack.c.l.b16 %v1709
      %v1813 = vunpack.c.h.b16 %v1709
      %v1814 = vunpack.c.l.b16 %v1710
      %v1815 = vunpack.c.h.b16 %v1710
      %v1816 = vunpack.c.l.b16 %v1711
      %v1817 = vunpack.c.h.b16 %v1711
      %v1818 = vpack.c.b16 %v1758, %v1754
      %v1819 = vpack.c.b16 %v1759, %v1755
      %v1820 = vpack.c.b16 %v1760, %v1756
      %v1821 = vpack.c.b16 %v1761, %v1757
      %v1822 = vpack.c.b16 %v1766, %v1762
      %v1823 = vpack.c.b16 %v1767, %v1763
      %v1824 = vpack.c.b16 %v1768, %v1764
      %v1825 = vpack.c.b16 %v1769, %v1765
      %v1826 = vpack.c.b16 %v1774, %v1770
      %v1827 = vpack.c.b16 %v1775, %v1771
      %v1828 = vpack.c.b16 %v1776, %v1772
      %v1829 = vpack.c.b16 %v1777, %v1773
      %v1830 = vpack.c.b16 %v1782, %v1778
      %v1831 = vpack.c.b16 %v1783, %v1779
      %v1832 = vpack.c.b16 %v1784, %v1780
      %v1833 = vpack.c.b16 %v1785, %v1781
      %v1834 = vpack.c.b16 %v1790, %v1786
      %v1835 = vpack.c.b16 %v1791, %v1787
      %v1836 = vpack.c.b16 %v1792, %v1788
      %v1837 = vpack.c.b16 %v1793, %v1789
      %v1838 = vpack.c.b16 %v1798, %v1794
      %v1839 = vpack.c.b16 %v1799, %v1795
      %v1840 = vpack.c.b16 %v1800, %v1796
      %v1841 = vpack.c.b16 %v1801, %v1797
      %v1842 = vpack.c.b16 %v1806, %v1802
      %v1843 = vpack.c.b16 %v1807, %v1803
      %v1844 = vpack.c.b16 %v1808, %v1804
      %v1845 = vpack.c.b16 %v1809, %v1805
      %v1846 = vpack.c.b16 %v1814, %v1810
      %v1847 = vpack.c.b16 %v1815, %v1811
      %v1848 = vpack.c.b16 %v1816, %v1812
      %v1849 = vpack.c.b16 %v1817, %v1813
      %1882 = vmatpush.bf16.msra.mxu0 %v1846
      %1883 = vmatpush.bf16.msra.mxu0 %v1842
      %1884 = vmatpush.bf16.msra.mxu0 %v1838
      %1885 = vmatpush.bf16.msra.mxu0 %v1834
      %1886 = vmatpush.bf16.msra.mxu0 %v1830
      %1887 = vmatpush.bf16.msra.mxu0 %v1826
      %1888 = vmatpush.bf16.msra.mxu0 %v1822
      %1889 = vmatpush.bf16.msra.mxu0 %v1818
      %1890 = vmatmul.bf16.gmra.mxu0 %v1678
      %v1891 = vpop.f32.mrf.mxu0
      %v1892 = vadd.f32 %v1714, %v1891
      %v1893 = vpop.f32.mrf.mxu0
      %v1894 = vadd.f32 %v1714, %v1893
      %1895 = vmatmul.bf16.gmra.mxu0 %v1679
      %v1896 = vpop.f32.mrf.mxu0
      %v1897 = vadd.f32 %v1714, %v1896
      %v1898 = vpop.f32.mrf.mxu0
      %v1899 = vadd.f32 %v1714, %v1898
      %1900 = vdwg.mxu0
      %1901 = vmatpush.bf16.msra.mxu0 %v1847
      %1902 = vmatpush.bf16.msra.mxu0 %v1843
      %1903 = vmatpush.bf16.msra.mxu0 %v1839
      %1904 = vmatpush.bf16.msra.mxu0 %v1835
      %1905 = vmatpush.bf16.msra.mxu0 %v1831
      %1906 = vmatpush.bf16.msra.mxu0 %v1827
      %1907 = vmatpush.bf16.msra.mxu0 %v1823
      %1908 = vmatpush.bf16.msra.mxu0 %v1819
      %1909 = vmatmul.bf16.gmra.mxu0 %v1678
      %v1910 = vpop.f32.mrf.mxu0
      %v1911 = vadd.f32 %v1715, %v1910
      %v1912 = vpop.f32.mrf.mxu0
      %v1913 = vadd.f32 %v1715, %v1912
      %1914 = vmatmul.bf16.gmra.mxu0 %v1679
      %v1915 = vpop.f32.mrf.mxu0
      %v1916 = vadd.f32 %v1715, %v1915
      %v1917 = vpop.f32.mrf.mxu0
      %v1918 = vadd.f32 %v1715, %v1917
      %1919 = vdwg.mxu0
      %1920 = vmatpush.bf16.msra.mxu0 %v1848
      %1921 = vmatpush.bf16.msra.mxu0 %v1844
      %1922 = vmatpush.bf16.msra.mxu0 %v1840
      %1923 = vmatpush.bf16.msra.mxu0 %v1836
      %1924 = vmatpush.bf16.msra.mxu0 %v1832
      %1925 = vmatpush.bf16.msra.mxu0 %v1828
      %1926 = vmatpush.bf16.msra.mxu0 %v1824
      %1927 = vmatpush.bf16.msra.mxu0 %v1820
      %1928 = vmatmul.bf16.gmra.mxu0 %v1678
      %v1929 = vpop.f32.mrf.mxu0
      %v1930 = vadd.f32 %v1716, %v1929
      %v1931 = vpop.f32.mrf.mxu0
      %v1932 = vadd.f32 %v1716, %v1931
      %1933 = vmatmul.bf16.gmra.mxu0 %v1679
      %v1934 = vpop.f32.mrf.mxu0
      %v1935 = vadd.f32 %v1716, %v1934
      %v1936 = vpop.f32.mrf.mxu0
      %v1937 = vadd.f32 %v1716, %v1936
      %1938 = vdwg.mxu0
      %1939 = vmatpush.bf16.msra.mxu0 %v1849
      %1940 = vmatpush.bf16.msra.mxu0 %v1845
      %1941 = vmatpush.bf16.msra.mxu0 %v1841
      %1942 = vmatpush.bf16.msra.mxu0 %v1837
      %1943 = vmatpush.bf16.msra.mxu0 %v1833
      %1944 = vmatpush.bf16.msra.mxu0 %v1829
      %1945 = vmatpush.bf16.msra.mxu0 %v1825
      %1946 = vmatpush.bf16.msra.mxu0 %v1821
      %1947 = vmatmul.bf16.gmra.mxu0 %v1678
      %v1948 = vpop.f32.mrf.mxu0
      %v1949 = vadd.f32 %v1717, %v1948
      %v1950 = vpop.f32.mrf.mxu0
      %v1951 = vadd.f32 %v1717, %v1950
      %1952 = vmatmul.bf16.gmra.mxu0 %v1679
      %v1953 = vpop.f32.mrf.mxu0
      %v1954 = vadd.f32 %v1717, %v1953
      %v1955 = vpop.f32.mrf.mxu0
      %v1956 = vadd.f32 %v1717, %v1955
      %1957 = vdwg.mxu0
      %v1958 = vmul.f32 %v1892, %v1892
      %v1959 = vmul.f32 %v1911, %v1911
      %v1960 = vmul.f32 %v1930, %v1930
      %v1961 = vmul.f32 %v1949, %v1949
      %v1962 = vmul.f32 %v1894, %v1894
      %v1963 = vmul.f32 %v1913, %v1913
      %v1964 = vmul.f32 %v1932, %v1932
      %v1965 = vmul.f32 %v1951, %v1951
      %v1966 = vmul.f32 %v1897, %v1897
      %v1967 = vmul.f32 %v1916, %v1916
      %v1968 = vmul.f32 %v1935, %v1935
      %v1969 = vmul.f32 %v1954, %v1954
      %v1970 = vmul.f32 %v1899, %v1899
      %v1971 = vmul.f32 %v1918, %v1918
      %v1972 = vmul.f32 %v1937, %v1937
      %v1973 = vmul.f32 %v1956, %v1956
      %v1974 = vmul.f32 %v1892, %v1958
      %v1975 = vmul.f32 %v1911, %v1959
      %v1976 = vmul.f32 %v1930, %v1960
      %v1977 = vmul.f32 %v1949, %v1961
      %v1978 = vmul.f32 %v1894, %v1962
      %v1979 = vmul.f32 %v1913, %v1963
      %v1980 = vmul.f32 %v1932, %v1964
      %v1981 = vmul.f32 %v1951, %v1965
      %v1982 = vmul.f32 %v1897, %v1966
      %v1983 = vmul.f32 %v1916, %v1967
      %v1984 = vmul.f32 %v1935, %v1968
      %v1985 = vmul.f32 %v1954, %v1969
      %v1986 = vmul.f32 %v1899, %v1970
      %v1987 = vmul.f32 %v1918, %v1971
      %v1988 = vmul.f32 %v1937, %v1972
      %v1989 = vmul.f32 %v1956, %v1973
      %v1990 = vmul.f32 %v1974, 0.044715
      %v1991 = vmul.f32 %v1975, 0.044715
      %v1992 = vmul.f32 %v1976, 0.044715
      %v1993 = vmul.f32 %v1977, 0.044715
      %v1994 = vmul.f32 %v1978, 0.044715
      %v1995 = vmul.f32 %v1979, 0.044715
      %v1996 = vmul.f32 %v1980, 0.044715
      %v1997 = vmul.f32 %v1981, 0.044715
      %v1998 = vmul.f32 %v1982, 0.044715
      %v1999 = vmul.f32 %v1983, 0.044715
      %v2000 = vmul.f32 %v1984, 0.044715
      %v2001 = vmul.f32 %v1985, 0.044715
      %v2002 = vmul.f32 %v1986, 0.044715
      %v2003 = vmul.f32 %v1987, 0.044715
      %v2004 = vmul.f32 %v1988, 0.044715
      %v2005 = vmul.f32 %v1989, 0.044715
      %v2006 = vadd.f32 %v1892, %v1990
      %v2007 = vadd.f32 %v1911, %v1991
      %v2008 = vadd.f32 %v1930, %v1992
      %v2009 = vadd.f32 %v1949, %v1993
      %v2010 = vadd.f32 %v1894, %v1994
      %v2011 = vadd.f32 %v1913, %v1995
      %v2012 = vadd.f32 %v1932, %v1996
      %v2013 = vadd.f32 %v1951, %v1997
      %v2014 = vadd.f32 %v1897, %v1998
      %v2015 = vadd.f32 %v1916, %v1999
      %v2016 = vadd.f32 %v1935, %v2000
      %v2017 = vadd.f32 %v1954, %v2001
      %v2018 = vadd.f32 %v1899, %v2002
      %v2019 = vadd.f32 %v1918, %v2003
      %v2020 = vadd.f32 %v1937, %v2004
      %v2021 = vadd.f32 %v1956, %v2005
      %v2022 = vmul.f32 %v2006, 0.7978846
      %v2023 = vmul.f32 %v2007, 0.7978846
      %v2024 = vmul.f32 %v2008, 0.7978846
      %v2025 = vmul.f32 %v2009, 0.7978846
      %v2026 = vmul.f32 %v2010, 0.7978846
      %v2027 = vmul.f32 %v2011, 0.7978846
      %v2028 = vmul.f32 %v2012, 0.7978846
      %v2029 = vmul.f32 %v2013, 0.7978846
      %v2030 = vmul.f32 %v2014, 0.7978846
      %v2031 = vmul.f32 %v2015, 0.7978846
      %v2032 = vmul.f32 %v2016, 0.7978846
      %v2033 = vmul.f32 %v2017, 0.7978846
      %v2034 = vmul.f32 %v2018, 0.7978846
      %v2035 = vmul.f32 %v2019, 0.7978846
      %v2036 = vmul.f32 %v2020, 0.7978846
      %v2037 = vmul.f32 %v2021, 0.7978846
      %v2038 = vtanh.pop %v2022
      %v2039 = vtanh.pop %v2023
      %v2040 = vtanh.pop %v2024
      %v2041 = vtanh.pop %v2025
      %v2042 = vtanh.pop %v2026
      %v2043 = vtanh.pop %v2027
      %v2044 = vtanh.pop %v2028
      %v2045 = vtanh.pop %v2029
      %v2046 = vtanh.pop %v2030
      %v2047 = vtanh.pop %v2031
      %v2048 = vtanh.pop %v2032
      %v2049 = vtanh.pop %v2033
      %v2050 = vtanh.pop %v2034
      %v2051 = vtanh.pop %v2035
      %v2052 = vtanh.pop %v2036
      %v2053 = vtanh.pop %v2037
      %v2054 = vadd.f32 %v2038, 1.0
      %v2055 = vadd.f32 %v2039, 1.0
      %v2056 = vadd.f32 %v2040, 1.0
      %v2057 = vadd.f32 %v2041, 1.0
      %v2058 = vadd.f32 %v2042, 1.0
      %v2059 = vadd.f32 %v2043, 1.0
      %v2060 = vadd.f32 %v2044, 1.0
      %v2061 = vadd.f32 %v2045, 1.0
      %v2062 = vadd.f32 %v2046, 1.0
      %v2063 = vadd.f32 %v2047, 1.0
      %v2064 = vadd.f32 %v2048, 1.0
      %v2065 = vadd.f32 %v2049, 1.0
      %v2066 = vadd.f32 %v2050, 1.0
      %v2067 = vadd.f32 %v2051, 1.0
      %v2068 = vadd.f32 %v2052, 1.0
      %v2069 = vadd.f32 %v2053, 1.0
      %v2070 = vmul.f32 %v2054, 0.5
      %v2071 = vmul.f32 %v2055, 0.5
      %v2072 = vmul.f32 %v2056, 0.5
      %v2073 = vmul.f32 %v2057, 0.5
      %v2074 = vmul.f32 %v2058, 0.5
      %v2075 = vmul.f32 %v2059, 0.5
      %v2076 = vmul.f32 %v2060, 0.5
      %v2077 = vmul.f32 %v2061, 0.5
      %v2078 = vmul.f32 %v2062, 0.5
      %v2079 = vmul.f32 %v2063, 0.5
      %v2080 = vmul.f32 %v2064, 0.5
      %v2081 = vmul.f32 %v2065, 0.5
      %v2082 = vmul.f32 %v2066, 0.5
      %v2083 = vmul.f32 %v2067, 0.5
      %v2084 = vmul.f32 %v2068, 0.5
      %v2085 = vmul.f32 %v2069, 0.5
      %v2086 = vmul.f32 %v1892, %v2070
      %v2087 = vmul.f32 %v1911, %v2071
      %v2088 = vmul.f32 %v1930, %v2072
      %v2089 = vmul.f32 %v1949, %v2073
      %v2090 = vmul.f32 %v1894, %v2074
      %v2091 = vmul.f32 %v1913, %v2075
      %v2092 = vmul.f32 %v1932, %v2076
      %v2093 = vmul.f32 %v1951, %v2077
      %v2094 = vmul.f32 %v1897, %v2078
      %v2095 = vmul.f32 %v1916, %v2079
      %v2096 = vmul.f32 %v1935, %v2080
      %v2097 = vmul.f32 %v1954, %v2081
      %v2098 = vmul.f32 %v1899, %v2082
      %v2099 = vmul.f32 %v1918, %v2083
      %v2100 = vmul.f32 %v1937, %v2084
      %v2101 = vmul.f32 %v1956, %v2085
      %v2102 = vpack.c.bf16 %v2090, %v2086
      %v2103 = vpack.c.bf16 %v2091, %v2087
      %v2104 = vpack.c.bf16 %v2092, %v2088
      %v2105 = vpack.c.bf16 %v2093, %v2089
      %v2106 = vpack.c.bf16 %v2098, %v2094
      %v2107 = vpack.c.bf16 %v2099, %v2095
      %v2108 = vpack.c.bf16 %v2100, %v2096
      %v2109 = vpack.c.bf16 %v2101, %v2097
      %v2110 = vld [vmem:[%s10] sm:$0xf]
      %v2111 = vld [vmem:[%s10 + $0x4] sm:$0xf]
      %v2112 = vld [vmem:[%s10 + $0x8] sm:$0xf]
      %v2113 = vld [vmem:[%s10 + $0xc] sm:$0xf]
      %v2114 = vld [vmem:[%s10 + $0x10] sm:$0xf]
      %v2115 = vld [vmem:[%s10 + $0x14] sm:$0xf]
      %v2116 = vld [vmem:[%s10 + $0x18] sm:$0xf]
      %v2117 = vld [vmem:[%s10 + $0x1c] sm:$0xf]
      %v2118 = vld [vmem:[%s10 + $0x20] sm:$0xf]
      %v2119 = vld [vmem:[%s10 + $0x24] sm:$0xf]
      %v2120 = vld [vmem:[%s10 + $0x28] sm:$0xf]
      %v2121 = vld [vmem:[%s10 + $0x2c] sm:$0xf]
      %v2122 = vld [vmem:[%s10 + $0x30] sm:$0xf]
      %v2123 = vld [vmem:[%s10 + $0x34] sm:$0xf]
      %v2124 = vld [vmem:[%s10 + $0x38] sm:$0xf]
      %v2125 = vld [vmem:[%s10 + $0x3c] sm:$0xf]
      %v2126 = vld [vmem:[%s10 + $0x40] sm:$0xf]
      %v2127 = vld [vmem:[%s10 + $0x44] sm:$0xf]
      %v2128 = vld [vmem:[%s10 + $0x48] sm:$0xf]
      %v2129 = vld [vmem:[%s10 + $0x4c] sm:$0xf]
      %v2130 = vld [vmem:[%s10 + $0x50] sm:$0xf]
      %v2131 = vld [vmem:[%s10 + $0x54] sm:$0xf]
      %v2132 = vld [vmem:[%s10 + $0x58] sm:$0xf]
      %v2133 = vld [vmem:[%s10 + $0x5c] sm:$0xf]
      %v2134 = vld [vmem:[%s10 + $0x60] sm:$0xf]
      %v2135 = vld [vmem:[%s10 + $0x64] sm:$0xf]
      %v2136 = vld [vmem:[%s10 + $0x68] sm:$0xf]
      %v2137 = vld [vmem:[%s10 + $0x6c] sm:$0xf]
      %v2138 = vld [vmem:[%s10 + $0x70] sm:$0xf]
      %v2139 = vld [vmem:[%s10 + $0x74] sm:$0xf]
      %v2140 = vld [vmem:[%s10 + $0x78] sm:$0xf]
      %v2141 = vld [vmem:[%s10 + $0x7c] sm:$0xf]
      %v2142 = vld [vmem:[%s10 + $0x80] sm:$0xf]
      %v2143 = vld [vmem:[%s10 + $0x84] sm:$0xf]
      %v2144 = vld [vmem:[%s10 + $0x88] sm:$0xf]
      %v2145 = vld [vmem:[%s10 + $0x8c] sm:$0xf]
      %v2146 = vld [vmem:[%s10 + $0x90] sm:$0xf]
      %v2147 = vld [vmem:[%s10 + $0x94] sm:$0xf]
      %v2148 = vld [vmem:[%s10 + $0x98] sm:$0xf]
      %v2149 = vld [vmem:[%s10 + $0x9c] sm:$0xf]
      %v2150 = vld [vmem:[%s10 + $0xa0] sm:$0xf]
      %v2151 = vld [vmem:[%s10 + $0xa4] sm:$0xf]
      %v2152 = vld [vmem:[%s10 + $0xa8] sm:$0xf]
      %v2153 = vld [vmem:[%s10 + $0xac] sm:$0xf]
      %v2154 = vld [vmem:[%s10 + $0xb0] sm:$0xf]
      %v2155 = vld [vmem:[%s10 + $0xb4] sm:$0xf]
      %v2156 = vld [vmem:[%s10 + $0xb8] sm:$0xf]
      %v2157 = vld [vmem:[%s10 + $0xbc] sm:$0xf]
      %v2158 = vld [vmem:[%s10 + $0xc0] sm:$0xf]
      %v2159 = vld [vmem:[%s10 + $0xc4] sm:$0xf]
      %v2160 = vld [vmem:[%s10 + $0xc8] sm:$0xf]
      %v2161 = vld [vmem:[%s10 + $0xcc] sm:$0xf]
      %v2162 = vld [vmem:[%s10 + $0xd0] sm:$0xf]
      %v2163 = vld [vmem:[%s10 + $0xd4] sm:$0xf]
      %v2164 = vld [vmem:[%s10 + $0xd8] sm:$0xf]
      %v2165 = vld [vmem:[%s10 + $0xdc] sm:$0xf]
      %v2166 = vld [vmem:[%s10 + $0xe0] sm:$0xf]
      %v2167 = vld [vmem:[%s10 + $0xe4] sm:$0xf]
      %v2168 = vld [vmem:[%s10 + $0xe8] sm:$0xf]
      %v2169 = vld [vmem:[%s10 + $0xec] sm:$0xf]
      %v2170 = vld [vmem:[%s10 + $0xf0] sm:$0xf]
      %v2171 = vld [vmem:[%s10 + $0xf4] sm:$0xf]
      %v2172 = vld [vmem:[%s10 + $0xf8] sm:$0xf]
      %v2173 = vld [vmem:[%s10 + $0xfc] sm:$0xf]
      %v2174 = vld [vmem:[%s11] sm:$0x1]
      %v2176 = vperm.slane %v2174, 0
      %v2242 = vunpack.c.l.b16 %v2110
      %v2243 = vunpack.c.l.b16 %v2111
      %v2244 = vunpack.c.l.b16 %v2112
      %v2245 = vunpack.c.l.b16 %v2113
      %v2246 = vunpack.c.l.b16 %v2114
      %v2247 = vunpack.c.l.b16 %v2115
      %v2248 = vunpack.c.l.b16 %v2116
      %v2249 = vunpack.c.l.b16 %v2117
      %v2250 = vunpack.c.l.b16 %v2118
      %v2251 = vunpack.c.l.b16 %v2119
      %v2252 = vunpack.c.l.b16 %v2120
      %v2253 = vunpack.c.l.b16 %v2121
      %v2254 = vunpack.c.l.b16 %v2122
      %v2255 = vunpack.c.l.b16 %v2123
      %v2256 = vunpack.c.l.b16 %v2124
      %v2257 = vunpack.c.l.b16 %v2125
      %v2258 = vunpack.c.l.b16 %v2126
      %v2259 = vunpack.c.l.b16 %v2127
      %v2260 = vunpack.c.l.b16 %v2128
      %v2261 = vunpack.c.l.b16 %v2129
      %v2262 = vunpack.c.l.b16 %v2130
      %v2263 = vunpack.c.l.b16 %v2131
      %v2264 = vunpack.c.l.b16 %v2132
      %v2265 = vunpack.c.l.b16 %v2133
      %v2266 = vunpack.c.l.b16 %v2134
      %v2267 = vunpack.c.l.b16 %v2135
      %v2268 = vunpack.c.l.b16 %v2136
      %v2269 = vunpack.c.l.b16 %v2137
      %v2270 = vunpack.c.l.b16 %v2138
      %v2271 = vunpack.c.l.b16 %v2139
      %v2272 = vunpack.c.l.b16 %v2140
      %v2273 = vunpack.c.l.b16 %v2141
      %v2274 = vunpack.c.l.b16 %v2142
      %v2275 = vunpack.c.l.b16 %v2143
      %v2276 = vunpack.c.l.b16 %v2144
      %v2277 = vunpack.c.l.b16 %v2145
      %v2278 = vunpack.c.l.b16 %v2146
      %v2279 = vunpack.c.l.b16 %v2147
      %v2280 = vunpack.c.l.b16 %v2148
      %v2281 = vunpack.c.l.b16 %v2149
      %v2282 = vunpack.c.l.b16 %v2150
      %v2283 = vunpack.c.l.b16 %v2151
      %v2284 = vunpack.c.l.b16 %v2152
      %v2285 = vunpack.c.l.b16 %v2153
      %v2286 = vunpack.c.l.b16 %v2154
      %v2287 = vunpack.c.l.b16 %v2155
      %v2288 = vunpack.c.l.b16 %v2156
      %v2289 = vunpack.c.l.b16 %v2157
      %v2290 = vunpack.c.l.b16 %v2158
      %v2291 = vunpack.c.l.b16 %v2159
      %v2292 = vunpack.c.l.b16 %v2160
      %v2293 = vunpack.c.l.b16 %v2161
      %v2294 = vunpack.c.l.b16 %v2162
      %v2295 = vunpack.c.l.b16 %v2163
      %v2296 = vunpack.c.l.b16 %v2164
      %v2297 = vunpack.c.l.b16 %v2165
      %v2298 = vunpack.c.l.b16 %v2166
      %v2299 = vunpack.c.l.b16 %v2167
      %v2300 = vunpack.c.l.b16 %v2168
      %v2301 = vunpack.c.l.b16 %v2169
      %v2302 = vunpack.c.l.b16 %v2170
      %v2303 = vunpack.c.l.b16 %v2171
      %v2304 = vunpack.c.l.b16 %v2172
      %v2305 = vunpack.c.l.b16 %v2173
      %v2306 = vpack.c.b16 %v2243, %v2242
      %v2307 = vpack.c.b16 %v2245, %v2244
      %v2308 = vpack.c.b16 %v2247, %v2246
      %v2309 = vpack.c.b16 %v2249, %v2248
      %v2310 = vpack.c.b16 %v2251, %v2250
      %v2311 = vpack.c.b16 %v2253, %v2252
      %v2312 = vpack.c.b16 %v2255, %v2254
      %v2313 = vpack.c.b16 %v2257, %v2256
      %v2314 = vpack.c.b16 %v2259, %v2258
      %v2315 = vpack.c.b16 %v2261, %v2260
      %v2316 = vpack.c.b16 %v2263, %v2262
      %v2317 = vpack.c.b16 %v2265, %v2264
      %v2318 = vpack.c.b16 %v2267, %v2266
      %v2319 = vpack.c.b16 %v2269, %v2268
      %v2320 = vpack.c.b16 %v2271, %v2270
      %v2321 = vpack.c.b16 %v2273, %v2272
      %v2322 = vpack.c.b16 %v2275, %v2274
      %v2323 = vpack.c.b16 %v2277, %v2276
      %v2324 = vpack.c.b16 %v2279, %v2278
      %v2325 = vpack.c.b16 %v2281, %v2280
      %v2326 = vpack.c.b16 %v2283, %v2282
      %v2327 = vpack.c.b16 %v2285, %v2284
      %v2328 = vpack.c.b16 %v2287, %v2286
      %v2329 = vpack.c.b16 %v2289, %v2288
      %v2330 = vpack.c.b16 %v2291, %v2290
      %v2331 = vpack.c.b16 %v2293, %v2292
      %v2332 = vpack.c.b16 %v2295, %v2294
      %v2333 = vpack.c.b16 %v2297, %v2296
      %v2334 = vpack.c.b16 %v2299, %v2298
      %v2335 = vpack.c.b16 %v2301, %v2300
      %v2336 = vpack.c.b16 %v2303, %v2302
      %v2337 = vpack.c.b16 %v2305, %v2304
      %2370 = vmatpush.bf16.msra.mxu0 %v2313
      %2371 = vmatpush.bf16.msra.mxu0 %v2312
      %2372 = vmatpush.bf16.msra.mxu0 %v2311
      %2373 = vmatpush.bf16.msra.mxu0 %v2310
      %2374 = vmatpush.bf16.msra.mxu0 %v2309
      %2375 = vmatpush.bf16.msra.mxu0 %v2308
      %2376 = vmatpush.bf16.msra.mxu0 %v2307
      %2377 = vmatpush.bf16.msra.mxu0 %v2306
      %2378 = vmatmul.bf16.gmra.mxu0 %v2102
      %v2379 = vpop.f32.mrf.mxu0
      %v2380 = vadd.f32 %v2176, %v2379
      %v2381 = vpop.f32.mrf.mxu0
      %v2382 = vadd.f32 %v2176, %v2381
      %2383 = vmatmul.bf16.gmra.mxu0 %v2106
      %v2384 = vpop.f32.mrf.mxu0
      %v2385 = vadd.f32 %v2176, %v2384
      %v2386 = vpop.f32.mrf.mxu0
      %v2387 = vadd.f32 %v2176, %v2386
      %2388 = vdwg.mxu0
      %2389 = vmatpush.bf16.msra.mxu0 %v2321
      %2390 = vmatpush.bf16.msra.mxu0 %v2320
      %2391 = vmatpush.bf16.msra.mxu0 %v2319
      %2392 = vmatpush.bf16.msra.mxu0 %v2318
      %2393 = vmatpush.bf16.msra.mxu0 %v2317
      %2394 = vmatpush.bf16.msra.mxu0 %v2316
      %2395 = vmatpush.bf16.msra.mxu0 %v2315
      %2396 = vmatpush.bf16.msra.mxu0 %v2314
      %2397 = vmatmul.bf16.gmra.mxu0 %v2103
      %v2398 = vpop.f32.mrf.mxu0
      %v2399 = vadd.f32 %v2380, %v2398
      %v2400 = vpop.f32.mrf.mxu0
      %v2401 = vadd.f32 %v2382, %v2400
      %2402 = vmatmul.bf16.gmra.mxu0 %v2107
      %v2403 = vpop.f32.mrf.mxu0
      %v2404 = vadd.f32 %v2385, %v2403
      %v2405 = vpop.f32.mrf.mxu0
      %v2406 = vadd.f32 %v2387, %v2405
      %2407 = vdwg.mxu0
      %2408 = vmatpush.bf16.msra.mxu0 %v2329
      %2409 = vmatpush.bf16.msra.mxu0 %v2328
      %2410 = vmatpush.bf16.msra.mxu0 %v2327
      %2411 = vmatpush.bf16.msra.mxu0 %v2326
      %2412 = vmatpush.bf16.msra.mxu0 %v2325
      %2413 = vmatpush.bf16.msra.mxu0 %v2324
      %2414 = vmatpush.bf16.msra.mxu0 %v2323
      %2415 = vmatpush.bf16.msra.mxu0 %v2322
      %2416 = vmatmul.bf16.gmra.mxu0 %v2104
      %v2417 = vpop.f32.mrf.mxu0
      %v2418 = vadd.f32 %v2399, %v2417
      %v2419 = vpop.f32.mrf.mxu0
      %v2420 = vadd.f32 %v2401, %v2419
      %2421 = vmatmul.bf16.gmra.mxu0 %v2108
      %v2422 = vpop.f32.mrf.mxu0
      %v2423 = vadd.f32 %v2404, %v2422
      %v2424 = vpop.f32.mrf.mxu0
      %v2425 = vadd.f32 %v2406, %v2424
      %2426 = vdwg.mxu0
      %2427 = vmatpush.bf16.msra.mxu0 %v2337
      %2428 = vmatpush.bf16.msra.mxu0 %v2336
      %2429 = vmatpush.bf16.msra.mxu0 %v2335
      %2430 = vmatpush.bf16.msra.mxu0 %v2334
      %2431 = vmatpush.bf16.msra.mxu0 %v2333
      %2432 = vmatpush.bf16.msra.mxu0 %v2332
      %2433 = vmatpush.bf16.msra.mxu0 %v2331
      %2434 = vmatpush.bf16.msra.mxu0 %v2330
      %2435 = vmatmul.bf16.gmra.mxu0 %v2105
      %v2436 = vpop.f32.mrf.mxu0
      %v2437 = vadd.f32 %v2418, %v2436
      %v2438 = vpop.f32.mrf.mxu0
      %v2439 = vadd.f32 %v2420, %v2438
      %2440 = vmatmul.bf16.gmra.mxu0 %v2109
      %v2441 = vpop.f32.mrf.mxu0
      %v2442 = vadd.f32 %v2423, %v2441
      %v2443 = vpop.f32.mrf.mxu0
      %v2444 = vadd.f32 %v2425, %v2443
      %2445 = vdwg.mxu0
      %v2446 = vadd.f32 %v1674, %v2437
      %v2447 = vadd.f32 %v1675, %v2439
      %v2448 = vadd.f32 %v1676, %v2442
      %v2449 = vadd.f32 %v1677, %v2444
      %v2450 = vld [vmem:[%s12] sm:$0x1]
      %v2451 = vld [vmem:[%s13] sm:$0x1]
      %2452 = vadd.xlane.f32.xlu0 %v2446
      %v2453 = vpop.xlane.xlu0 %2452
      %2454 = vadd.xlane.f32.xlu0 %v2447
      %v2455 = vpop.xlane.xlu0 %2454
      %2456 = vadd.xlane.f32.xlu0 %v2448
      %v2457 = vpop.xlane.xlu0 %2456
      %2458 = vadd.xlane.f32.xlu0 %v2449
      %v2459 = vpop.xlane.xlu0 %2458
      %v2460 = vmul.f32 %v2453, %v1591
      %v2461 = vmul.f32 %v2455, %v1591
      %v2462 = vmul.f32 %v2457, %v1591
      %v2463 = vmul.f32 %v2459, %v1591
      %v2464 = vsub.f32 %v2446, %v2460
      %v2465 = vsub.f32 %v2447, %v2461
      %v2466 = vsub.f32 %v2448, %v2462
      %v2467 = vsub.f32 %v2449, %v2463
      %v2468 = vmul.f32 %v2464, %v2464
      %v2469 = vmul.f32 %v2465, %v2465
      %v2470 = vmul.f32 %v2466, %v2466
      %v2471 = vmul.f32 %v2467, %v2467
      %2472 = vadd.xlane.f32.xlu0 %v2468
      %v2473 = vpop.xlane.xlu0 %2472
      %2474 = vadd.xlane.f32.xlu0 %v2469
      %v2475 = vpop.xlane.xlu0 %2474
      %2476 = vadd.xlane.f32.xlu0 %v2470
      %v2477 = vpop.xlane.xlu0 %2476
      %2478 = vadd.xlane.f32.xlu0 %v2471
      %v2479 = vpop.xlane.xlu0 %2478
      %v2480 = vmul.f32 %v2473, %v1591
      %v2481 = vmul.f32 %v2475, %v1591
      %v2482 = vmul.f32 %v2477, %v1591
      %v2483 = vmul.f32 %v2479, %v1591
      %v2484 = vadd.f32 %v2480, 1e-12
      %v2485 = vadd.f32 %v2481, 1e-12
      %v2486 = vadd.f32 %v2482, 1e-12
      %v2487 = vadd.f32 %v2483, 1e-12
      %v2488 = vrsqrt.pop %v2484
      %v2489 = vmul.f32 %v2488, %v2484
      %v2490 = vmul.f32 %v2489, %v2488
      %v2491 = vmul.f32 0.5, %v2490
      %v2492 = vsub.f32 1.5, %v2491
      %v2493 = vmul.f32 %v2488, %v2492
      %vm2494 = vweird.f32 %v2484
      %vm2495 = vweird.f32 %v2488
      %vm2496 = vmor %vm2494, %vm2495
      %v2497 = vsel %vm2496, %v2488, %v2493
      %v2498 = vrsqrt.pop %v2485
      %v2499 = vmul.f32 %v2498, %v2485
      %v2500 = vmul.f32 %v2499, %v2498
      %v2501 = vmul.f32 0.5, %v2500
      %v2502 = vsub.f32 1.5, %v2501
      %v2503 = vmul.f32 %v2498, %v2502
      %vm2504 = vweird.f32 %v2485
      %vm2505 = vweird.f32 %v2498
      %vm2506 = vmor %vm2504, %vm2505
      %v2507 = vsel %vm2506, %v2498, %v2503
      %v2508 = vrsqrt.pop %v2486
      %v2509 = vmul.f32 %v2508, %v2486
      %v2510 = vmul.f32 %v2509, %v2508
      %v2511 = vmul.f32 0.5, %v2510
      %v2512 = vsub.f32 1.5, %v2511
      %v2513 = vmul.f32 %v2508, %v2512
      %vm2514 = vweird.f32 %v2486
      %vm2515 = vweird.f32 %v2508
      %vm2516 = vmor %vm2514, %vm2515
      %v2517 = vsel %vm2516, %v2508, %v2513
      %v2518 = vrsqrt.pop %v2487
      %v2519 = vmul.f32 %v2518, %v2487
      %v2520 = vmul.f32 %v2519, %v2518
      %v2521 = vmul.f32 0.5, %v2520
      %v2522 = vsub.f32 1.5, %v2521
      %v2523 = vmul.f32 %v2518, %v2522
      %vm2524 = vweird.f32 %v2487
      %vm2525 = vweird.f32 %v2518
      %vm2526 = vmor %vm2524, %vm2525
      %v2527 = vsel %vm2526, %v2518, %v2523
      %v2528 = vmul.f32 %v2464, %v2497
      %v2529 = vmul.f32 %v2465, %v2507
      %v2530 = vmul.f32 %v2466, %v2517
      %v2531 = vmul.f32 %v2467, %v2527
      %v2533 = vperm.slane %v2450, 0
      %v2535 = vmul.f32 %v2528, %v2533
      %v2536 = vmul.f32 %v2529, %v2533
      %v2537 = vmul.f32 %v2530, %v2533
      %v2538 = vmul.f32 %v2531, %v2533
      %v2540 = vperm.slane %v2451, 0
      %v2542 = vadd.f32 %v2535, %v2540
      %v2543 = vadd.f32 %v2536, %v2540
      %v2544 = vadd.f32 %v2537, %v2540
      %v2545 = vadd.f32 %v2538, %v2540
      %2546 = vst [vmem:[%s493] sm:$0xff] %v2542
      %2547 = vst [vmem:[%s493 + $0x8] sm:$0xff] %v2543
      %2548 = vst [vmem:[%s493 + $0x10] sm:$0xff] %v2544
      %2549 = vst [vmem:[%s493 + $0x18] sm:$0xff] %v2545
      %s2550 = smul.u32 2, %s25
      %p2551 = scmp.lt.s32.totalorder %s2550, 3
      %s2552 = scalar_select %p2551, %s2550, 3
      %s2553 = smul.addr %s2552, 2
      %s2554 = smul.addr %s2553, 8
      %s2555 = scalar_lea.vmem %s14, %s2554
      // Predicated region
      $region77: #{fwd.5} parent=75 // pred_check
        %p2556 = pneg %p347
      $region78: #{fwd.5} parent=75 // pred_check_branch
        %2558 = sbr.rel (%p2556) target = $region80
      $region79: #{fwd.5} parent=75 // pred_region
        %s2559 = smul.u32 2, %s25
      $region80: #{fwd.5} parent=75 // pred_fallthru
        _
    $region76: #{fwd.5} parent=5 // pred_fallthru
      _
    %p2560 = scmp.le.s32.totalorder 2, %s20
    // Predicated region
    $region81: #{fwd.5} parent=5 // pred_check
      %p2561 = pneg %p2560
    $region82: #{fwd.5} parent=5 // pred_check_branch
      %2563 = sbr.rel (%p2561) target = $region84
    $region83: #{fwd.5} parent=5 // pred_region
      %s2564 = ssub.s32 %s20, 2
      // Predicated region
      $region85: #{fwd.5} parent=83 // pred_check
        %p2565 = pneg %p353
      $region86: #{fwd.5} parent=83 // pred_check_branch
        %2567 = sbr.rel (%p2565) target = $region88
      $region87: #{fwd.5} parent=83 // pred_region
        %s2568 = smul.u32 2, %s26
        %p2569 = scmp.lt.s32.totalorder %s2568, 3
        %s2570 = scalar_select %p2569, %s2568, 3
        %s2571 = smul.addr %s2570, 2
        %s2572 = smul.addr %s2571, 8
        %s2573 = scalar_lea.vmem %s14, %s2572
      $region88: #{fwd.5} parent=83 // pred_fallthru
        _
    $region84: #{fwd.5} parent=5 // pred_fallthru
      _
  $region6: #{fwd.5} parent=0 // loop_footer
    %s24 = sadd.s32 1, %s20
  $region7: #{fwd.5} parent=0 // loop_footer_branch
    %19 = sbr.rel target = $region3
  $region8: #{fwd.5} parent=0 // loop_exit
    _

</llo_original>
